<compile_context>
chip_gen: v7x
topology: tpu7x:2x2x1
jax: 0.10.0
libtpu: 0.0.40
codegen_flags: <defaults>
</compile_context>

<pallas_src>
import numpy as np
import jax
import jax.numpy as jnp
from jax.experimental import pallas as pl
from jax.experimental.pallas import tpu as pltpu

# --- small config consistent with the module's __init__ ---
EMBED_DIM = 32          # config.embed_dim
HIDDEN_DIM = 32         # config.hidden_dim
H2 = HIDDEN_DIM // 2    # BiLSTM per-direction hidden
SEQ_LEN = 8             # max_len
ACTION_NUM = 2          # config.actions = [0, 1]
LABEL_NUM = 3           # config.label_num
N_POSITION = 100        # position embedding table size
OUT_LANES = 128         # lane-dense output slab width


# ----------------------------------------------------------------------------
# Fused kernel: BiLSTM contexts + policy net + conditional uni-LSTM + classifier
# ----------------------------------------------------------------------------
def fused_agent_kernel(x_ref, mask_ref,
                       wih_f_ref, whh_f_ref, b_f_ref,
                       wih_r_ref, whh_r_ref, b_r_ref,
                       wih_u_ref, whh_u_ref, b_u_ref,
                       w_enc_ref, b_enc_ref, w_tgt_ref, b_tgt_ref,
                       w_s2a_ref, b_s2a_ref,
                       w_v2l_ref, b_v2l_ref,
                       out_ref):
    L, _ = x_ref.shape
    x = x_ref[...]                       # (L, E)
    mask = mask_ref[...]                 # (L, 1)

    def lstm_cell(pre, h, c, whh, hdim):
        # pre = x_t @ W_ih + b (precomputed); gate order (i, f, g, o) as in torch.
        g = pre + jnp.dot(h, whh, preferred_element_type=jnp.float32)   # (1, 4*hdim)
        ig = jax.nn.sigmoid(g[:, 0:hdim])
        fg = jax.nn.sigmoid(g[:, hdim:2 * hdim])
        gg = jnp.tanh(g[:, 2 * hdim:3 * hdim])
        og = jax.nn.sigmoid(g[:, 3 * hdim:4 * hdim])
        c_new = fg * c + ig * gg
        h_new = og * jnp.tanh(c_new)
        return h_new, c_new

    # ---- Env.birnn (BiLSTM): input projections hoisted to one matmul each ----
    xproj_f = jnp.dot(x, wih_f_ref[...], preferred_element_type=jnp.float32) + b_f_ref[...]
    xproj_r = jnp.dot(x, wih_r_ref[...], preferred_element_type=jnp.float32) + b_r_ref[...]
    whh_f = whh_f_ref[...]
    whh_r = whh_r_ref[...]

    h = jnp.zeros((1, H2), jnp.float32)
    c = jnp.zeros((1, H2), jnp.float32)
    rows_f = []
    for t in range(L):                                   # fully unrolled (L static)
        h, c = lstm_cell(xproj_f[t:t + 1, :], h, c, whh_f, H2)
        rows_f.append(h)

    h = jnp.zeros((1, H2), jnp.float32)
    c = jnp.zeros((1, H2), jnp.float32)
    rows_b = [None] * L
    for s in range(L):                                   # fully unrolled
        t = L - 1 - s
        h, c = lstm_cell(xproj_r[t:t + 1, :], h, c, whh_r, H2)
        rows_b[t] = h

    ctx = jnp.concatenate(
        [jnp.concatenate(rows_f, axis=0), jnp.concatenate(rows_b, axis=0)],
        axis=-1)                                         # (L, HIDDEN_DIM)

    # ---- get_target_emb: masked mean over the sequence (zero-mask guarded) ----
    msum = jnp.maximum(jnp.sum(mask, axis=0, keepdims=True), 1.0)        # (1, 1)
    tgt = jnp.sum(x * mask, axis=0, keepdims=True) / msum                # (1, E)

    # ---- Policy_network: vectorized over all L steps (no recurrence dep) ----
    tgt_term = (jnp.dot(tgt, w_tgt_ref[...], preferred_element_type=jnp.float32)
                + b_tgt_ref[...])                                        # (1, 128)
    temp = jnp.tanh(jnp.dot(ctx, w_enc_ref[...], preferred_element_type=jnp.float32)
                    + b_enc_ref[...] + tgt_term)                         # (L, 128)
    logits = (jnp.dot(temp, w_s2a_ref[...], preferred_element_type=jnp.float32)
              + b_s2a_ref[...])                                          # (L, A)
    mx = jnp.max(logits, axis=-1, keepdims=True)
    z = logits - mx
    logp = z - jnp.log(jnp.sum(jnp.exp(z), axis=-1, keepdims=True))
    neglogp = -logp                                                      # (L, A)

    # TODO(synk): torch samples the action from Categorical(p); here we take the
    # greedy (argmax) action for determinism (A == 2; ties pick action 0).
    take = (logits[:, 1:2] > logits[:, 0:1]).astype(jnp.float32)         # (L, 1)

    # ---- Env.update_state: conditional uni-LSTM; only this stays sequential ----
    xproj_u = jnp.dot(x, wih_u_ref[...], preferred_element_type=jnp.float32) + b_u_ref[...]
    whh_u = whh_u_ref[...]
    h = jnp.zeros((1, HIDDEN_DIM), jnp.float32)
    c = jnp.zeros((1, HIDDEN_DIM), jnp.float32)
    for t in range(L):                                   # fully unrolled
        h_new, c_new = lstm_cell(xproj_u[t:t + 1, :], h, c, whh_u, HIDDEN_DIM)
        take_t = take[t:t + 1, :] > 0.5                  # (1, 1) bool
        h = jnp.where(take_t, h_new, h)
        c = jnp.where(take_t, c_new, c)

    # ---- classifier: dropout is identity in eval; pred = log_softmax(vec2label(h)) ----
    cl = (jnp.dot(h, w_v2l_ref[...], preferred_element_type=jnp.float32)
          + b_v2l_ref[...])                                              # (1, LABEL_NUM)
    mxl = jnp.max(cl, axis=-1, keepdims=True)
    zl = cl - mxl
    pred_logp = zl - jnp.log(jnp.sum(jnp.exp(zl), axis=-1, keepdims=True))

    # ---- pack one lane-dense (L, 128) output slab (single unmasked store) ----
    pred_b = jnp.broadcast_to(pred_logp, (L, LABEL_NUM))
    pad = jnp.zeros((L, OUT_LANES - ACTION_NUM - 1 - LABEL_NUM), jnp.float32)
    out_ref[...] = jnp.concatenate([neglogp, take, pred_b, pad], axis=-1)


# ----------------------------------------------------------------------------
# pallas_call wrapper (batched over sentences; weights stay VMEM-resident)
# ----------------------------------------------------------------------------
_WEIGHT_NAMES = ("wih_f", "whh_f", "b_f", "wih_r", "whh_r", "b_r",
                 "wih_u", "whh_u", "b_u",
                 "w_enc", "b_enc", "w_tgt", "b_tgt", "w_s2a", "b_s2a",
                 "w_v2l", "b_v2l")


def _weight_spec(shape):
    nd = len(shape)
    return pl.BlockSpec(tuple(shape), lambda b, nd=nd: (0,) * nd)


def agent_rollout(sents, masks, p):
    B, L, E = sents.shape
    mask3 = masks.astype(jnp.float32)[..., None]          # (B, L, 1)
    weights = [p[n] for n in _WEIGHT_NAMES]

    in_specs = ([pl.BlockSpec((None, L, E), lambda b: (b, 0, 0)),
                 pl.BlockSpec((None, L, 1), lambda b: (b, 0, 0))]
                + [_weight_spec(w.shape) for w in weights])
    out_spec = pl.BlockSpec((None, L, OUT_LANES), lambda b: (b, 0, 0))

    return pl.pallas_call(
        fused_agent_kernel,
        grid=(B,),
        in_specs=in_specs,
        out_specs=out_spec,
        out_shape=jax.ShapeDtypeStruct((B, L, OUT_LANES), jnp.float32),
        compiler_params=pltpu.CompilerParams(dimension_semantics=("parallel",)),
    )(sents, mask3, *weights)


def agent_forward(params, sents, masks, labels):
    """Mirrors Agent.forward per sentence; processes B sentences in one call."""
    B, L, _ = sents.shape
    m = masks.astype(jnp.float32)[..., None]              # (B, L, 1)

    # get_pos_emb / target position embedding: built (as in Agent.forward) but
    # not consumed by the policy network -> plain JAX glue.
    pos_table = params["pos_table"]
    sent_pos_emb = jnp.broadcast_to(pos_table[jnp.arange(L)], (B, L, EMBED_DIM))
    _target_pos_emb = (jnp.sum(sent_pos_emb * m, axis=1)
                       / jnp.maximum(jnp.sum(m, axis=1), 1.0))

    slab = agent_rollout(sents, masks, params)            # (B, L, 128)
    neglogp = slab[:, :, :ACTION_NUM]                     # (B, L, A)
    actions = slab[:, :, ACTION_NUM].astype(jnp.int32)    # (B, L)
    pred = slab[:, 0, ACTION_NUM + 1:ACTION_NUM + 1 + LABEL_NUM]   # (B, LABEL_NUM)

    # per-step -log p(a_i) gathered at the taken action
    step_losses = jnp.take_along_axis(neglogp, actions[..., None], axis=2)[..., 0]

    # log_loss / NLLLoss on log-softmax predictions
    classification_loss = -jnp.take_along_axis(pred, labels[:, None], axis=1)[:, 0]
    ground_truth_prob = -classification_loss
    # TODO(synk): Env rewards require an external dependency parser
    # (get_context_weight / convert_mask_index); the `rewards.mean()` term of
    # total_reward is omitted here.
    action_loss = step_losses.mean(axis=1) * ground_truth_prob
    return pred, actions, action_loss, classification_loss


# ----------------------------------------------------------------------------
# deterministic parameter construction (gate-fused layouts)
# ----------------------------------------------------------------------------
def position_encoding_init(n_position, emb_dim):
    pe = np.array([[pos / np.power(10000, 2 * (j // 2) / emb_dim) for j in range(emb_dim)]
                   if pos != 0 else np.zeros(emb_dim) for pos in range(n_position)])
    pe[1:, 0::2] = np.sin(pe[1:, 0::2])
    pe[1:, 1::2] = np.cos(pe[1:, 1::2])
    return pe.astype(np.float32)


def init_params(key):
    ks = jax.random.split(key, 15)

    def nrm(k, shape, scale=0.1):
        return scale * jax.random.normal(k, shape, dtype=jnp.float32)

    p = {}
    # Env.birnn (BiLSTM): gate-fused layout [in, 4*H2], gate order (i, f, g, o);
    # b = b_ih + b_hh pre-summed.
    p["wih_f"] = nrm(ks[0], (EMBED_DIM, 4 * H2))
    p["whh_f"] = nrm(ks[1], (H2, 4 * H2))
    p["b_f"] = nrm(ks[2], (1, 4 * H2))
    p["wih_r"] = nrm(ks[3], (EMBED_DIM, 4 * H2))
    p["whh_r"] = nrm(ks[4], (H2, 4 * H2))
    p["b_r"] = nrm(ks[5], (1, 4 * H2))
    # Env.rnn (uni-LSTM), same gate-fused layout
    p["wih_u"] = nrm(ks[6], (EMBED_DIM, 4 * HIDDEN_DIM))
    p["whh_u"] = nrm(ks[7], (HIDDEN_DIM, 4 * HIDDEN_DIM))
    p["b_u"] = nrm(ks[8], (1, 4 * HIDDEN_DIM))
    # Policy_network (linear weights stored as [in, out])
    p["w_enc"] = nrm(ks[9], (HIDDEN_DIM, 128))
    p["b_enc"] = nrm(ks[10], (1, 128))
    p["w_tgt"] = nrm(ks[11], (EMBED_DIM, 128))
    p["b_tgt"] = nrm(ks[12], (1, 128))
    p["w_s2a"] = nrm(ks[13], (128, ACTION_NUM))
    p["b_s2a"] = jnp.zeros((1, ACTION_NUM), jnp.float32)
    # Agent.vec2label
    p["w_v2l"] = nrm(ks[14], (HIDDEN_DIM, LABEL_NUM))
    p["b_v2l"] = jnp.zeros((1, LABEL_NUM), jnp.float32)
    # Agent.position_enc (sinusoidal table)
    p["pos_table"] = jnp.asarray(position_encoding_init(N_POSITION, EMBED_DIM))
    return p


if __name__ == "__main__":
    key = jax.random.PRNGKey(0)
    pkey, xkey = jax.random.split(key)
    params = init_params(pkey)

    B = 2
    sents = jax.random.normal(xkey, (B, SEQ_LEN, EMBED_DIM), dtype=jnp.float32)
    masks = jnp.zeros((B, SEQ_LEN), jnp.float32).at[:, 3:5].set(1.0)  # target span
    labels = jnp.array([1, 2], dtype=jnp.int32)

    pred, actions, action_loss, classification_loss = agent_forward(
        params, sents, masks, labels)
    jax.block_until_ready((pred, actions, action_loss, classification_loss))

    assert pred.shape == (B, LABEL_NUM)
    assert actions.shape == (B, SEQ_LEN)
    assert action_loss.shape == (B,)
    assert classification_loss.shape == (B,)
    print("KERNEL_OK")
</pallas_src>

<mosaic_0001>
module attributes {stable_mosaic.version = 11 : i64} {
  func.func @fused_agent_kernel(%arg0: i32, %arg1: memref<1x8x32xf32, #tpu.memory_space<vmem>>, %arg2: memref<1x8x1xf32, #tpu.memory_space<vmem>>, %arg3: memref<32x64xf32, #tpu.memory_space<vmem>>, %arg4: memref<16x64xf32, #tpu.memory_space<vmem>>, %arg5: memref<1x64xf32, #tpu.memory_space<vmem>>, %arg6: memref<32x64xf32, #tpu.memory_space<vmem>>, %arg7: memref<16x64xf32, #tpu.memory_space<vmem>>, %arg8: memref<1x64xf32, #tpu.memory_space<vmem>>, %arg9: memref<32x128xf32, #tpu.memory_space<vmem>>, %arg10: memref<32x128xf32, #tpu.memory_space<vmem>>, %arg11: memref<1x128xf32, #tpu.memory_space<vmem>>, %arg12: memref<32x128xf32, #tpu.memory_space<vmem>>, %arg13: memref<1x128xf32, #tpu.memory_space<vmem>>, %arg14: memref<32x128xf32, #tpu.memory_space<vmem>>, %arg15: memref<1x128xf32, #tpu.memory_space<vmem>>, %arg16: memref<128x2xf32, #tpu.memory_space<vmem>>, %arg17: memref<1x2xf32, #tpu.memory_space<vmem>>, %arg18: memref<32x3xf32, #tpu.memory_space<vmem>>, %arg19: memref<1x3xf32, #tpu.memory_space<vmem>>, %arg20: memref<1x8x128xf32, #tpu.memory_space<vmem>>) attributes {dimension_semantics = [#tpu.dimension_semantics<parallel>], iteration_bounds = array<i64: 2>, scalar_prefetch = 0 : i64, scratch_operands = 0 : i64, tpu.core_type = #tpu.core_type<tc>, window_params = [{transform_indices = @transform_0, window_bounds = array<i64: 1, 8, 32>}, {transform_indices = @transform_1, window_bounds = array<i64: 1, 8, 1>}, {pipeline_mode = #tpu.pipeline_mode<synchronous>, transform_indices = @transform_2, window_bounds = array<i64: 32, 64>}, {pipeline_mode = #tpu.pipeline_mode<synchronous>, transform_indices = @transform_3, window_bounds = array<i64: 16, 64>}, {pipeline_mode = #tpu.pipeline_mode<synchronous>, transform_indices = @transform_4, window_bounds = array<i64: 1, 64>}, {pipeline_mode = #tpu.pipeline_mode<synchronous>, transform_indices = @transform_5, window_bounds = array<i64: 32, 64>}, {pipeline_mode = #tpu.pipeline_mode<synchronous>, transform_indices = @transform_6, window_bounds = array<i64: 16, 64>}, {pipeline_mode = #tpu.pipeline_mode<synchronous>, transform_indices = @transform_7, window_bounds = array<i64: 1, 64>}, {pipeline_mode = #tpu.pipeline_mode<synchronous>, transform_indices = @transform_8, window_bounds = array<i64: 32, 128>}, {pipeline_mode = #tpu.pipeline_mode<synchronous>, transform_indices = @transform_9, window_bounds = array<i64: 32, 128>}, {pipeline_mode = #tpu.pipeline_mode<synchronous>, transform_indices = @transform_10, window_bounds = array<i64: 1, 128>}, {pipeline_mode = #tpu.pipeline_mode<synchronous>, transform_indices = @transform_11, window_bounds = array<i64: 32, 128>}, {pipeline_mode = #tpu.pipeline_mode<synchronous>, transform_indices = @transform_12, window_bounds = array<i64: 1, 128>}, {pipeline_mode = #tpu.pipeline_mode<synchronous>, transform_indices = @transform_13, window_bounds = array<i64: 32, 128>}, {pipeline_mode = #tpu.pipeline_mode<synchronous>, transform_indices = @transform_14, window_bounds = array<i64: 1, 128>}, {pipeline_mode = #tpu.pipeline_mode<synchronous>, transform_indices = @transform_15, window_bounds = array<i64: 128, 2>}, {pipeline_mode = #tpu.pipeline_mode<synchronous>, transform_indices = @transform_16, window_bounds = array<i64: 1, 2>}, {pipeline_mode = #tpu.pipeline_mode<synchronous>, transform_indices = @transform_17, window_bounds = array<i64: 32, 3>}, {pipeline_mode = #tpu.pipeline_mode<synchronous>, transform_indices = @transform_18, window_bounds = array<i64: 1, 3>}, {transform_indices = @transform_19, window_bounds = array<i64: 1, 8, 128>}]} {
    %c0 = arith.constant 0 : index
    %c0_0 = arith.constant 0 : index
    %c0_1 = arith.constant 0 : index
    %0 = vector.load %arg1[%c0, %c0_0, %c0_1] : memref<1x8x32xf32, #tpu.memory_space<vmem>>, vector<1x8x32xf32>
    %1 = vector.shape_cast %0 : vector<1x8x32xf32> to vector<8x32xf32>
    %c0_2 = arith.constant 0 : index
    %c0_3 = arith.constant 0 : index
    %c0_4 = arith.constant 0 : index
    %2 = vector.load %arg2[%c0_2, %c0_3, %c0_4] : memref<1x8x1xf32, #tpu.memory_space<vmem>>, vector<1x8x1xf32>
    %3 = vector.shape_cast %2 : vector<1x8x1xf32> to vector<8x1xf32>
    %c0_5 = arith.constant 0 : index
    %c0_6 = arith.constant 0 : index
    %4 = vector.load %arg3[%c0_5, %c0_6] : memref<32x64xf32, #tpu.memory_space<vmem>>, vector<32x64xf32>
    %cst = arith.constant dense<0.000000e+00> : vector<8x64xf32>
    %5 = tpu.matmul %1, %4, %cst {dimension_numbers = #tpu.dot_dimension_numbers<[1], [0], [0], [1], [0, 0, 1, 1], [], []>} : vector<8x32xf32>, vector<32x64xf32>, vector<8x64xf32> -> vector<8x64xf32>
    %c0_7 = arith.constant 0 : index
    %c0_8 = arith.constant 0 : index
    %6 = vector.load %arg5[%c0_7, %c0_8] : memref<1x64xf32, #tpu.memory_space<vmem>>, vector<1x64xf32>
    %7 = vector.broadcast %6 : vector<1x64xf32> to vector<8x64xf32>
    %8 = arith.addf %5, %7 : vector<8x64xf32>
    %c0_9 = arith.constant 0 : index
    %c0_10 = arith.constant 0 : index
    %9 = vector.load %arg6[%c0_9, %c0_10] : memref<32x64xf32, #tpu.memory_space<vmem>>, vector<32x64xf32>
    %cst_11 = arith.constant dense<0.000000e+00> : vector<8x64xf32>
    %10 = tpu.matmul %1, %9, %cst_11 {dimension_numbers = #tpu.dot_dimension_numbers<[1], [0], [0], [1], [0, 0, 1, 1], [], []>} : vector<8x32xf32>, vector<32x64xf32>, vector<8x64xf32> -> vector<8x64xf32>
    %c0_12 = arith.constant 0 : index
    %c0_13 = arith.constant 0 : index
    %11 = vector.load %arg8[%c0_12, %c0_13] : memref<1x64xf32, #tpu.memory_space<vmem>>, vector<1x64xf32>
    %12 = vector.broadcast %11 : vector<1x64xf32> to vector<8x64xf32>
    %13 = arith.addf %10, %12 : vector<8x64xf32>
    %c0_14 = arith.constant 0 : index
    %c0_15 = arith.constant 0 : index
    %14 = vector.load %arg4[%c0_14, %c0_15] : memref<16x64xf32, #tpu.memory_space<vmem>>, vector<16x64xf32>
    %c0_16 = arith.constant 0 : index
    %c0_17 = arith.constant 0 : index
    %15 = vector.load %arg7[%c0_16, %c0_17] : memref<16x64xf32, #tpu.memory_space<vmem>>, vector<16x64xf32>
    %cst_18 = arith.constant 0.000000e+00 : f32
    %16 = vector.broadcast %cst_18 : f32 to vector<1x16xf32>
    %cst_19 = arith.constant 0.000000e+00 : f32
    %17 = vector.broadcast %cst_19 : f32 to vector<1x16xf32>
    %18 = vector.extract_strided_slice %8 {offsets = [0, 0], sizes = [1, 64], strides = [1, 1]} : vector<8x64xf32> to vector<1x64xf32>
    %cst_20 = arith.constant dense<0.000000e+00> : vector<1x64xf32>
    %19 = tpu.matmul %16, %14, %cst_20 {dimension_numbers = #tpu.dot_dimension_numbers<[1], [0], [0], [1], [0, 0, 1, 1], [], []>} : vector<1x16xf32>, vector<16x64xf32>, vector<1x64xf32> -> vector<1x64xf32>
    %20 = arith.addf %18, %19 : vector<1x64xf32>
    %21 = vector.extract_strided_slice %20 {offsets = [0, 0], sizes = [1, 16], strides = [1, 1]} : vector<1x64xf32> to vector<1x16xf32>
    %22 = arith.negf %21 : vector<1x16xf32>
    %23 = math.exp %22 : vector<1x16xf32>
    %cst_21 = arith.constant 1.000000e+00 : f32
    %24 = vector.broadcast %cst_21 : f32 to vector<1x16xf32>
    %25 = arith.addf %24, %23 : vector<1x16xf32>
    %26 = arith.divf %24, %25 : vector<1x16xf32>
    %27 = vector.extract_strided_slice %20 {offsets = [0, 16], sizes = [1, 16], strides = [1, 1]} : vector<1x64xf32> to vector<1x16xf32>
    %28 = arith.negf %27 : vector<1x16xf32>
    %29 = math.exp %28 : vector<1x16xf32>
    %cst_22 = arith.constant 1.000000e+00 : f32
    %30 = vector.broadcast %cst_22 : f32 to vector<1x16xf32>
    %31 = arith.addf %30, %29 : vector<1x16xf32>
    %32 = arith.divf %30, %31 : vector<1x16xf32>
    %33 = vector.extract_strided_slice %20 {offsets = [0, 32], sizes = [1, 16], strides = [1, 1]} : vector<1x64xf32> to vector<1x16xf32>
    %34 = math.tanh %33 : vector<1x16xf32>
    %35 = vector.extract_strided_slice %20 {offsets = [0, 48], sizes = [1, 16], strides = [1, 1]} : vector<1x64xf32> to vector<1x16xf32>
    %36 = arith.negf %35 : vector<1x16xf32>
    %37 = math.exp %36 : vector<1x16xf32>
    %cst_23 = arith.constant 1.000000e+00 : f32
    %38 = vector.broadcast %cst_23 : f32 to vector<1x16xf32>
    %39 = arith.addf %38, %37 : vector<1x16xf32>
    %40 = arith.divf %38, %39 : vector<1x16xf32>
    %41 = arith.mulf %32, %17 : vector<1x16xf32>
    %42 = arith.mulf %26, %34 : vector<1x16xf32>
    %43 = arith.addf %41, %42 : vector<1x16xf32>
    %44 = math.tanh %43 : vector<1x16xf32>
    %45 = arith.mulf %40, %44 : vector<1x16xf32>
    %46 = vector.extract_strided_slice %8 {offsets = [1, 0], sizes = [1, 64], strides = [1, 1]} : vector<8x64xf32> to vector<1x64xf32>
    %cst_24 = arith.constant dense<0.000000e+00> : vector<1x64xf32>
    %47 = tpu.matmul %45, %14, %cst_24 {dimension_numbers = #tpu.dot_dimension_numbers<[1], [0], [0], [1], [0, 0, 1, 1], [], []>} : vector<1x16xf32>, vector<16x64xf32>, vector<1x64xf32> -> vector<1x64xf32>
    %48 = arith.addf %46, %47 : vector<1x64xf32>
    %49 = vector.extract_strided_slice %48 {offsets = [0, 0], sizes = [1, 16], strides = [1, 1]} : vector<1x64xf32> to vector<1x16xf32>
    %50 = arith.negf %49 : vector<1x16xf32>
    %51 = math.exp %50 : vector<1x16xf32>
    %cst_25 = arith.constant 1.000000e+00 : f32
    %52 = vector.broadcast %cst_25 : f32 to vector<1x16xf32>
    %53 = arith.addf %52, %51 : vector<1x16xf32>
    %54 = arith.divf %52, %53 : vector<1x16xf32>
    %55 = vector.extract_strided_slice %48 {offsets = [0, 16], sizes = [1, 16], strides = [1, 1]} : vector<1x64xf32> to vector<1x16xf32>
    %56 = arith.negf %55 : vector<1x16xf32>
    %57 = math.exp %56 : vector<1x16xf32>
    %cst_26 = arith.constant 1.000000e+00 : f32
    %58 = vector.broadcast %cst_26 : f32 to vector<1x16xf32>
    %59 = arith.addf %58, %57 : vector<1x16xf32>
    %60 = arith.divf %58, %59 : vector<1x16xf32>
    %61 = vector.extract_strided_slice %48 {offsets = [0, 32], sizes = [1, 16], strides = [1, 1]} : vector<1x64xf32> to vector<1x16xf32>
    %62 = math.tanh %61 : vector<1x16xf32>
    %63 = vector.extract_strided_slice %48 {offsets = [0, 48], sizes = [1, 16], strides = [1, 1]} : vector<1x64xf32> to vector<1x16xf32>
    %64 = arith.negf %63 : vector<1x16xf32>
    %65 = math.exp %64 : vector<1x16xf32>
    %cst_27 = arith.constant 1.000000e+00 : f32
    %66 = vector.broadcast %cst_27 : f32 to vector<1x16xf32>
    %67 = arith.addf %66, %65 : vector<1x16xf32>
    %68 = arith.divf %66, %67 : vector<1x16xf32>
    %69 = arith.mulf %60, %43 : vector<1x16xf32>
    %70 = arith.mulf %54, %62 : vector<1x16xf32>
    %71 = arith.addf %69, %70 : vector<1x16xf32>
    %72 = math.tanh %71 : vector<1x16xf32>
    %73 = arith.mulf %68, %72 : vector<1x16xf32>
    %74 = vector.extract_strided_slice %8 {offsets = [2, 0], sizes = [1, 64], strides = [1, 1]} : vector<8x64xf32> to vector<1x64xf32>
    %cst_28 = arith.constant dense<0.000000e+00> : vector<1x64xf32>
    %75 = tpu.matmul %73, %14, %cst_28 {dimension_numbers = #tpu.dot_dimension_numbers<[1], [0], [0], [1], [0, 0, 1, 1], [], []>} : vector<1x16xf32>, vector<16x64xf32>, vector<1x64xf32> -> vector<1x64xf32>
    %76 = arith.addf %74, %75 : vector<1x64xf32>
    %77 = vector.extract_strided_slice %76 {offsets = [0, 0], sizes = [1, 16], strides = [1, 1]} : vector<1x64xf32> to vector<1x16xf32>
    %78 = arith.negf %77 : vector<1x16xf32>
    %79 = math.exp %78 : vector<1x16xf32>
    %cst_29 = arith.constant 1.000000e+00 : f32
    %80 = vector.broadcast %cst_29 : f32 to vector<1x16xf32>
    %81 = arith.addf %80, %79 : vector<1x16xf32>
    %82 = arith.divf %80, %81 : vector<1x16xf32>
    %83 = vector.extract_strided_slice %76 {offsets = [0, 16], sizes = [1, 16], strides = [1, 1]} : vector<1x64xf32> to vector<1x16xf32>
    %84 = arith.negf %83 : vector<1x16xf32>
    %85 = math.exp %84 : vector<1x16xf32>
    %cst_30 = arith.constant 1.000000e+00 : f32
    %86 = vector.broadcast %cst_30 : f32 to vector<1x16xf32>
    %87 = arith.addf %86, %85 : vector<1x16xf32>
    %88 = arith.divf %86, %87 : vector<1x16xf32>
    %89 = vector.extract_strided_slice %76 {offsets = [0, 32], sizes = [1, 16], strides = [1, 1]} : vector<1x64xf32> to vector<1x16xf32>
    %90 = math.tanh %89 : vector<1x16xf32>
    %91 = vector.extract_strided_slice %76 {offsets = [0, 48], sizes = [1, 16], strides = [1, 1]} : vector<1x64xf32> to vector<1x16xf32>
    %92 = arith.negf %91 : vector<1x16xf32>
    %93 = math.exp %92 : vector<1x16xf32>
    %cst_31 = arith.constant 1.000000e+00 : f32
    %94 = vector.broadcast %cst_31 : f32 to vector<1x16xf32>
    %95 = arith.addf %94, %93 : vector<1x16xf32>
    %96 = arith.divf %94, %95 : vector<1x16xf32>
    %97 = arith.mulf %88, %71 : vector<1x16xf32>
    %98 = arith.mulf %82, %90 : vector<1x16xf32>
    %99 = arith.addf %97, %98 : vector<1x16xf32>
    %100 = math.tanh %99 : vector<1x16xf32>
    %101 = arith.mulf %96, %100 : vector<1x16xf32>
    %102 = vector.extract_strided_slice %8 {offsets = [3, 0], sizes = [1, 64], strides = [1, 1]} : vector<8x64xf32> to vector<1x64xf32>
    %cst_32 = arith.constant dense<0.000000e+00> : vector<1x64xf32>
    %103 = tpu.matmul %101, %14, %cst_32 {dimension_numbers = #tpu.dot_dimension_numbers<[1], [0], [0], [1], [0, 0, 1, 1], [], []>} : vector<1x16xf32>, vector<16x64xf32>, vector<1x64xf32> -> vector<1x64xf32>
    %104 = arith.addf %102, %103 : vector<1x64xf32>
    %105 = vector.extract_strided_slice %104 {offsets = [0, 0], sizes = [1, 16], strides = [1, 1]} : vector<1x64xf32> to vector<1x16xf32>
    %106 = arith.negf %105 : vector<1x16xf32>
    %107 = math.exp %106 : vector<1x16xf32>
    %cst_33 = arith.constant 1.000000e+00 : f32
    %108 = vector.broadcast %cst_33 : f32 to vector<1x16xf32>
    %109 = arith.addf %108, %107 : vector<1x16xf32>
    %110 = arith.divf %108, %109 : vector<1x16xf32>
    %111 = vector.extract_strided_slice %104 {offsets = [0, 16], sizes = [1, 16], strides = [1, 1]} : vector<1x64xf32> to vector<1x16xf32>
    %112 = arith.negf %111 : vector<1x16xf32>
    %113 = math.exp %112 : vector<1x16xf32>
    %cst_34 = arith.constant 1.000000e+00 : f32
    %114 = vector.broadcast %cst_34 : f32 to vector<1x16xf32>
    %115 = arith.addf %114, %113 : vector<1x16xf32>
    %116 = arith.divf %114, %115 : vector<1x16xf32>
    %117 = vector.extract_strided_slice %104 {offsets = [0, 32], sizes = [1, 16], strides = [1, 1]} : vector<1x64xf32> to vector<1x16xf32>
    %118 = math.tanh %117 : vector<1x16xf32>
    %119 = vector.extract_strided_slice %104 {offsets = [0, 48], sizes = [1, 16], strides = [1, 1]} : vector<1x64xf32> to vector<1x16xf32>
    %120 = arith.negf %119 : vector<1x16xf32>
    %121 = math.exp %120 : vector<1x16xf32>
    %cst_35 = arith.constant 1.000000e+00 : f32
    %122 = vector.broadcast %cst_35 : f32 to vector<1x16xf32>
    %123 = arith.addf %122, %121 : vector<1x16xf32>
    %124 = arith.divf %122, %123 : vector<1x16xf32>
    %125 = arith.mulf %116, %99 : vector<1x16xf32>
    %126 = arith.mulf %110, %118 : vector<1x16xf32>
    %127 = arith.addf %125, %126 : vector<1x16xf32>
    %128 = math.tanh %127 : vector<1x16xf32>
    %129 = arith.mulf %124, %128 : vector<1x16xf32>
    %130 = vector.extract_strided_slice %8 {offsets = [4, 0], sizes = [1, 64], strides = [1, 1]} : vector<8x64xf32> to vector<1x64xf32>
    %cst_36 = arith.constant dense<0.000000e+00> : vector<1x64xf32>
    %131 = tpu.matmul %129, %14, %cst_36 {dimension_numbers = #tpu.dot_dimension_numbers<[1], [0], [0], [1], [0, 0, 1, 1], [], []>} : vector<1x16xf32>, vector<16x64xf32>, vector<1x64xf32> -> vector<1x64xf32>
    %132 = arith.addf %130, %131 : vector<1x64xf32>
    %133 = vector.extract_strided_slice %132 {offsets = [0, 0], sizes = [1, 16], strides = [1, 1]} : vector<1x64xf32> to vector<1x16xf32>
    %134 = arith.negf %133 : vector<1x16xf32>
    %135 = math.exp %134 : vector<1x16xf32>
    %cst_37 = arith.constant 1.000000e+00 : f32
    %136 = vector.broadcast %cst_37 : f32 to vector<1x16xf32>
    %137 = arith.addf %136, %135 : vector<1x16xf32>
    %138 = arith.divf %136, %137 : vector<1x16xf32>
    %139 = vector.extract_strided_slice %132 {offsets = [0, 16], sizes = [1, 16], strides = [1, 1]} : vector<1x64xf32> to vector<1x16xf32>
    %140 = arith.negf %139 : vector<1x16xf32>
    %141 = math.exp %140 : vector<1x16xf32>
    %cst_38 = arith.constant 1.000000e+00 : f32
    %142 = vector.broadcast %cst_38 : f32 to vector<1x16xf32>
    %143 = arith.addf %142, %141 : vector<1x16xf32>
    %144 = arith.divf %142, %143 : vector<1x16xf32>
    %145 = vector.extract_strided_slice %132 {offsets = [0, 32], sizes = [1, 16], strides = [1, 1]} : vector<1x64xf32> to vector<1x16xf32>
    %146 = math.tanh %145 : vector<1x16xf32>
    %147 = vector.extract_strided_slice %132 {offsets = [0, 48], sizes = [1, 16], strides = [1, 1]} : vector<1x64xf32> to vector<1x16xf32>
    %148 = arith.negf %147 : vector<1x16xf32>
    %149 = math.exp %148 : vector<1x16xf32>
    %cst_39 = arith.constant 1.000000e+00 : f32
    %150 = vector.broadcast %cst_39 : f32 to vector<1x16xf32>
    %151 = arith.addf %150, %149 : vector<1x16xf32>
    %152 = arith.divf %150, %151 : vector<1x16xf32>
    %153 = arith.mulf %144, %127 : vector<1x16xf32>
    %154 = arith.mulf %138, %146 : vector<1x16xf32>
    %155 = arith.addf %153, %154 : vector<1x16xf32>
    %156 = math.tanh %155 : vector<1x16xf32>
    %157 = arith.mulf %152, %156 : vector<1x16xf32>
    %158 = vector.extract_strided_slice %8 {offsets = [5, 0], sizes = [1, 64], strides = [1, 1]} : vector<8x64xf32> to vector<1x64xf32>
    %cst_40 = arith.constant dense<0.000000e+00> : vector<1x64xf32>
    %159 = tpu.matmul %157, %14, %cst_40 {dimension_numbers = #tpu.dot_dimension_numbers<[1], [0], [0], [1], [0, 0, 1, 1], [], []>} : vector<1x16xf32>, vector<16x64xf32>, vector<1x64xf32> -> vector<1x64xf32>
    %160 = arith.addf %158, %159 : vector<1x64xf32>
    %161 = vector.extract_strided_slice %160 {offsets = [0, 0], sizes = [1, 16], strides = [1, 1]} : vector<1x64xf32> to vector<1x16xf32>
    %162 = arith.negf %161 : vector<1x16xf32>
    %163 = math.exp %162 : vector<1x16xf32>
    %cst_41 = arith.constant 1.000000e+00 : f32
    %164 = vector.broadcast %cst_41 : f32 to vector<1x16xf32>
    %165 = arith.addf %164, %163 : vector<1x16xf32>
    %166 = arith.divf %164, %165 : vector<1x16xf32>
    %167 = vector.extract_strided_slice %160 {offsets = [0, 16], sizes = [1, 16], strides = [1, 1]} : vector<1x64xf32> to vector<1x16xf32>
    %168 = arith.negf %167 : vector<1x16xf32>
    %169 = math.exp %168 : vector<1x16xf32>
    %cst_42 = arith.constant 1.000000e+00 : f32
    %170 = vector.broadcast %cst_42 : f32 to vector<1x16xf32>
    %171 = arith.addf %170, %169 : vector<1x16xf32>
    %172 = arith.divf %170, %171 : vector<1x16xf32>
    %173 = vector.extract_strided_slice %160 {offsets = [0, 32], sizes = [1, 16], strides = [1, 1]} : vector<1x64xf32> to vector<1x16xf32>
    %174 = math.tanh %173 : vector<1x16xf32>
    %175 = vector.extract_strided_slice %160 {offsets = [0, 48], sizes = [1, 16], strides = [1, 1]} : vector<1x64xf32> to vector<1x16xf32>
    %176 = arith.negf %175 : vector<1x16xf32>
    %177 = math.exp %176 : vector<1x16xf32>
    %cst_43 = arith.constant 1.000000e+00 : f32
    %178 = vector.broadcast %cst_43 : f32 to vector<1x16xf32>
    %179 = arith.addf %178, %177 : vector<1x16xf32>
    %180 = arith.divf %178, %179 : vector<1x16xf32>
    %181 = arith.mulf %172, %155 : vector<1x16xf32>
    %182 = arith.mulf %166, %174 : vector<1x16xf32>
    %183 = arith.addf %181, %182 : vector<1x16xf32>
    %184 = math.tanh %183 : vector<1x16xf32>
    %185 = arith.mulf %180, %184 : vector<1x16xf32>
    %186 = vector.extract_strided_slice %8 {offsets = [6, 0], sizes = [1, 64], strides = [1, 1]} : vector<8x64xf32> to vector<1x64xf32>
    %cst_44 = arith.constant dense<0.000000e+00> : vector<1x64xf32>
    %187 = tpu.matmul %185, %14, %cst_44 {dimension_numbers = #tpu.dot_dimension_numbers<[1], [0], [0], [1], [0, 0, 1, 1], [], []>} : vector<1x16xf32>, vector<16x64xf32>, vector<1x64xf32> -> vector<1x64xf32>
    %188 = arith.addf %186, %187 : vector<1x64xf32>
    %189 = vector.extract_strided_slice %188 {offsets = [0, 0], sizes = [1, 16], strides = [1, 1]} : vector<1x64xf32> to vector<1x16xf32>
    %190 = arith.negf %189 : vector<1x16xf32>
    %191 = math.exp %190 : vector<1x16xf32>
    %cst_45 = arith.constant 1.000000e+00 : f32
    %192 = vector.broadcast %cst_45 : f32 to vector<1x16xf32>
    %193 = arith.addf %192, %191 : vector<1x16xf32>
    %194 = arith.divf %192, %193 : vector<1x16xf32>
    %195 = vector.extract_strided_slice %188 {offsets = [0, 16], sizes = [1, 16], strides = [1, 1]} : vector<1x64xf32> to vector<1x16xf32>
    %196 = arith.negf %195 : vector<1x16xf32>
    %197 = math.exp %196 : vector<1x16xf32>
    %cst_46 = arith.constant 1.000000e+00 : f32
    %198 = vector.broadcast %cst_46 : f32 to vector<1x16xf32>
    %199 = arith.addf %198, %197 : vector<1x16xf32>
    %200 = arith.divf %198, %199 : vector<1x16xf32>
    %201 = vector.extract_strided_slice %188 {offsets = [0, 32], sizes = [1, 16], strides = [1, 1]} : vector<1x64xf32> to vector<1x16xf32>
    %202 = math.tanh %201 : vector<1x16xf32>
    %203 = vector.extract_strided_slice %188 {offsets = [0, 48], sizes = [1, 16], strides = [1, 1]} : vector<1x64xf32> to vector<1x16xf32>
    %204 = arith.negf %203 : vector<1x16xf32>
    %205 = math.exp %204 : vector<1x16xf32>
    %cst_47 = arith.constant 1.000000e+00 : f32
    %206 = vector.broadcast %cst_47 : f32 to vector<1x16xf32>
    %207 = arith.addf %206, %205 : vector<1x16xf32>
    %208 = arith.divf %206, %207 : vector<1x16xf32>
    %209 = arith.mulf %200, %183 : vector<1x16xf32>
    %210 = arith.mulf %194, %202 : vector<1x16xf32>
    %211 = arith.addf %209, %210 : vector<1x16xf32>
    %212 = math.tanh %211 : vector<1x16xf32>
    %213 = arith.mulf %208, %212 : vector<1x16xf32>
    %214 = vector.extract_strided_slice %8 {offsets = [7, 0], sizes = [1, 64], strides = [1, 1]} : vector<8x64xf32> to vector<1x64xf32>
    %cst_48 = arith.constant dense<0.000000e+00> : vector<1x64xf32>
    %215 = tpu.matmul %213, %14, %cst_48 {dimension_numbers = #tpu.dot_dimension_numbers<[1], [0], [0], [1], [0, 0, 1, 1], [], []>} : vector<1x16xf32>, vector<16x64xf32>, vector<1x64xf32> -> vector<1x64xf32>
    %216 = arith.addf %214, %215 : vector<1x64xf32>
    %217 = vector.extract_strided_slice %216 {offsets = [0, 0], sizes = [1, 16], strides = [1, 1]} : vector<1x64xf32> to vector<1x16xf32>
    %218 = arith.negf %217 : vector<1x16xf32>
    %219 = math.exp %218 : vector<1x16xf32>
    %cst_49 = arith.constant 1.000000e+00 : f32
    %220 = vector.broadcast %cst_49 : f32 to vector<1x16xf32>
    %221 = arith.addf %220, %219 : vector<1x16xf32>
    %222 = arith.divf %220, %221 : vector<1x16xf32>
    %223 = vector.extract_strided_slice %216 {offsets = [0, 16], sizes = [1, 16], strides = [1, 1]} : vector<1x64xf32> to vector<1x16xf32>
    %224 = arith.negf %223 : vector<1x16xf32>
    %225 = math.exp %224 : vector<1x16xf32>
    %cst_50 = arith.constant 1.000000e+00 : f32
    %226 = vector.broadcast %cst_50 : f32 to vector<1x16xf32>
    %227 = arith.addf %226, %225 : vector<1x16xf32>
    %228 = arith.divf %226, %227 : vector<1x16xf32>
    %229 = vector.extract_strided_slice %216 {offsets = [0, 32], sizes = [1, 16], strides = [1, 1]} : vector<1x64xf32> to vector<1x16xf32>
    %230 = math.tanh %229 : vector<1x16xf32>
    %231 = vector.extract_strided_slice %216 {offsets = [0, 48], sizes = [1, 16], strides = [1, 1]} : vector<1x64xf32> to vector<1x16xf32>
    %232 = arith.negf %231 : vector<1x16xf32>
    %233 = math.exp %232 : vector<1x16xf32>
    %cst_51 = arith.constant 1.000000e+00 : f32
    %234 = vector.broadcast %cst_51 : f32 to vector<1x16xf32>
    %235 = arith.addf %234, %233 : vector<1x16xf32>
    %236 = arith.divf %234, %235 : vector<1x16xf32>
    %237 = arith.mulf %228, %211 : vector<1x16xf32>
    %238 = arith.mulf %222, %230 : vector<1x16xf32>
    %239 = arith.addf %237, %238 : vector<1x16xf32>
    %240 = math.tanh %239 : vector<1x16xf32>
    %241 = arith.mulf %236, %240 : vector<1x16xf32>
    %cst_52 = arith.constant 0.000000e+00 : f32
    %242 = vector.broadcast %cst_52 : f32 to vector<1x16xf32>
    %cst_53 = arith.constant 0.000000e+00 : f32
    %243 = vector.broadcast %cst_53 : f32 to vector<1x16xf32>
    %244 = vector.extract_strided_slice %13 {offsets = [7, 0], sizes = [1, 64], strides = [1, 1]} : vector<8x64xf32> to vector<1x64xf32>
    %cst_54 = arith.constant dense<0.000000e+00> : vector<1x64xf32>
    %245 = tpu.matmul %242, %15, %cst_54 {dimension_numbers = #tpu.dot_dimension_numbers<[1], [0], [0], [1], [0, 0, 1, 1], [], []>} : vector<1x16xf32>, vector<16x64xf32>, vector<1x64xf32> -> vector<1x64xf32>
    %246 = arith.addf %244, %245 : vector<1x64xf32>
    %247 = vector.extract_strided_slice %246 {offsets = [0, 0], sizes = [1, 16], strides = [1, 1]} : vector<1x64xf32> to vector<1x16xf32>
    %248 = arith.negf %247 : vector<1x16xf32>
    %249 = math.exp %248 : vector<1x16xf32>
    %cst_55 = arith.constant 1.000000e+00 : f32
    %250 = vector.broadcast %cst_55 : f32 to vector<1x16xf32>
    %251 = arith.addf %250, %249 : vector<1x16xf32>
    %252 = arith.divf %250, %251 : vector<1x16xf32>
    %253 = vector.extract_strided_slice %246 {offsets = [0, 16], sizes = [1, 16], strides = [1, 1]} : vector<1x64xf32> to vector<1x16xf32>
    %254 = arith.negf %253 : vector<1x16xf32>
    %255 = math.exp %254 : vector<1x16xf32>
    %cst_56 = arith.constant 1.000000e+00 : f32
    %256 = vector.broadcast %cst_56 : f32 to vector<1x16xf32>
    %257 = arith.addf %256, %255 : vector<1x16xf32>
    %258 = arith.divf %256, %257 : vector<1x16xf32>
    %259 = vector.extract_strided_slice %246 {offsets = [0, 32], sizes = [1, 16], strides = [1, 1]} : vector<1x64xf32> to vector<1x16xf32>
    %260 = math.tanh %259 : vector<1x16xf32>
    %261 = vector.extract_strided_slice %246 {offsets = [0, 48], sizes = [1, 16], strides = [1, 1]} : vector<1x64xf32> to vector<1x16xf32>
    %262 = arith.negf %261 : vector<1x16xf32>
    %263 = math.exp %262 : vector<1x16xf32>
    %cst_57 = arith.constant 1.000000e+00 : f32
    %264 = vector.broadcast %cst_57 : f32 to vector<1x16xf32>
    %265 = arith.addf %264, %263 : vector<1x16xf32>
    %266 = arith.divf %264, %265 : vector<1x16xf32>
    %267 = arith.mulf %258, %243 : vector<1x16xf32>
    %268 = arith.mulf %252, %260 : vector<1x16xf32>
    %269 = arith.addf %267, %268 : vector<1x16xf32>
    %270 = math.tanh %269 : vector<1x16xf32>
    %271 = arith.mulf %266, %270 : vector<1x16xf32>
    %272 = vector.extract_strided_slice %13 {offsets = [6, 0], sizes = [1, 64], strides = [1, 1]} : vector<8x64xf32> to vector<1x64xf32>
    %cst_58 = arith.constant dense<0.000000e+00> : vector<1x64xf32>
    %273 = tpu.matmul %271, %15, %cst_58 {dimension_numbers = #tpu.dot_dimension_numbers<[1], [0], [0], [1], [0, 0, 1, 1], [], []>} : vector<1x16xf32>, vector<16x64xf32>, vector<1x64xf32> -> vector<1x64xf32>
    %274 = arith.addf %272, %273 : vector<1x64xf32>
    %275 = vector.extract_strided_slice %274 {offsets = [0, 0], sizes = [1, 16], strides = [1, 1]} : vector<1x64xf32> to vector<1x16xf32>
    %276 = arith.negf %275 : vector<1x16xf32>
    %277 = math.exp %276 : vector<1x16xf32>
    %cst_59 = arith.constant 1.000000e+00 : f32
    %278 = vector.broadcast %cst_59 : f32 to vector<1x16xf32>
    %279 = arith.addf %278, %277 : vector<1x16xf32>
    %280 = arith.divf %278, %279 : vector<1x16xf32>
    %281 = vector.extract_strided_slice %274 {offsets = [0, 16], sizes = [1, 16], strides = [1, 1]} : vector<1x64xf32> to vector<1x16xf32>
    %282 = arith.negf %281 : vector<1x16xf32>
    %283 = math.exp %282 : vector<1x16xf32>
    %cst_60 = arith.constant 1.000000e+00 : f32
    %284 = vector.broadcast %cst_60 : f32 to vector<1x16xf32>
    %285 = arith.addf %284, %283 : vector<1x16xf32>
    %286 = arith.divf %284, %285 : vector<1x16xf32>
    %287 = vector.extract_strided_slice %274 {offsets = [0, 32], sizes = [1, 16], strides = [1, 1]} : vector<1x64xf32> to vector<1x16xf32>
    %288 = math.tanh %287 : vector<1x16xf32>
    %289 = vector.extract_strided_slice %274 {offsets = [0, 48], sizes = [1, 16], strides = [1, 1]} : vector<1x64xf32> to vector<1x16xf32>
    %290 = arith.negf %289 : vector<1x16xf32>
    %291 = math.exp %290 : vector<1x16xf32>
    %cst_61 = arith.constant 1.000000e+00 : f32
    %292 = vector.broadcast %cst_61 : f32 to vector<1x16xf32>
    %293 = arith.addf %292, %291 : vector<1x16xf32>
    %294 = arith.divf %292, %293 : vector<1x16xf32>
    %295 = arith.mulf %286, %269 : vector<1x16xf32>
    %296 = arith.mulf %280, %288 : vector<1x16xf32>
    %297 = arith.addf %295, %296 : vector<1x16xf32>
    %298 = math.tanh %297 : vector<1x16xf32>
    %299 = arith.mulf %294, %298 : vector<1x16xf32>
    %300 = vector.extract_strided_slice %13 {offsets = [5, 0], sizes = [1, 64], strides = [1, 1]} : vector<8x64xf32> to vector<1x64xf32>
    %cst_62 = arith.constant dense<0.000000e+00> : vector<1x64xf32>
    %301 = tpu.matmul %299, %15, %cst_62 {dimension_numbers = #tpu.dot_dimension_numbers<[1], [0], [0], [1], [0, 0, 1, 1], [], []>} : vector<1x16xf32>, vector<16x64xf32>, vector<1x64xf32> -> vector<1x64xf32>
    %302 = arith.addf %300, %301 : vector<1x64xf32>
    %303 = vector.extract_strided_slice %302 {offsets = [0, 0], sizes = [1, 16], strides = [1, 1]} : vector<1x64xf32> to vector<1x16xf32>
    %304 = arith.negf %303 : vector<1x16xf32>
    %305 = math.exp %304 : vector<1x16xf32>
    %cst_63 = arith.constant 1.000000e+00 : f32
    %306 = vector.broadcast %cst_63 : f32 to vector<1x16xf32>
    %307 = arith.addf %306, %305 : vector<1x16xf32>
    %308 = arith.divf %306, %307 : vector<1x16xf32>
    %309 = vector.extract_strided_slice %302 {offsets = [0, 16], sizes = [1, 16], strides = [1, 1]} : vector<1x64xf32> to vector<1x16xf32>
    %310 = arith.negf %309 : vector<1x16xf32>
    %311 = math.exp %310 : vector<1x16xf32>
    %cst_64 = arith.constant 1.000000e+00 : f32
    %312 = vector.broadcast %cst_64 : f32 to vector<1x16xf32>
    %313 = arith.addf %312, %311 : vector<1x16xf32>
    %314 = arith.divf %312, %313 : vector<1x16xf32>
    %315 = vector.extract_strided_slice %302 {offsets = [0, 32], sizes = [1, 16], strides = [1, 1]} : vector<1x64xf32> to vector<1x16xf32>
    %316 = math.tanh %315 : vector<1x16xf32>
    %317 = vector.extract_strided_slice %302 {offsets = [0, 48], sizes = [1, 16], strides = [1, 1]} : vector<1x64xf32> to vector<1x16xf32>
    %318 = arith.negf %317 : vector<1x16xf32>
    %319 = math.exp %318 : vector<1x16xf32>
    %cst_65 = arith.constant 1.000000e+00 : f32
    %320 = vector.broadcast %cst_65 : f32 to vector<1x16xf32>
    %321 = arith.addf %320, %319 : vector<1x16xf32>
    %322 = arith.divf %320, %321 : vector<1x16xf32>
    %323 = arith.mulf %314, %297 : vector<1x16xf32>
    %324 = arith.mulf %308, %316 : vector<1x16xf32>
    %325 = arith.addf %323, %324 : vector<1x16xf32>
    %326 = math.tanh %325 : vector<1x16xf32>
    %327 = arith.mulf %322, %326 : vector<1x16xf32>
    %328 = vector.extract_strided_slice %13 {offsets = [4, 0], sizes = [1, 64], strides = [1, 1]} : vector<8x64xf32> to vector<1x64xf32>
    %cst_66 = arith.constant dense<0.000000e+00> : vector<1x64xf32>
    %329 = tpu.matmul %327, %15, %cst_66 {dimension_numbers = #tpu.dot_dimension_numbers<[1], [0], [0], [1], [0, 0, 1, 1], [], []>} : vector<1x16xf32>, vector<16x64xf32>, vector<1x64xf32> -> vector<1x64xf32>
    %330 = arith.addf %328, %329 : vector<1x64xf32>
    %331 = vector.extract_strided_slice %330 {offsets = [0, 0], sizes = [1, 16], strides = [1, 1]} : vector<1x64xf32> to vector<1x16xf32>
    %332 = arith.negf %331 : vector<1x16xf32>
    %333 = math.exp %332 : vector<1x16xf32>
    %cst_67 = arith.constant 1.000000e+00 : f32
    %334 = vector.broadcast %cst_67 : f32 to vector<1x16xf32>
    %335 = arith.addf %334, %333 : vector<1x16xf32>
    %336 = arith.divf %334, %335 : vector<1x16xf32>
    %337 = vector.extract_strided_slice %330 {offsets = [0, 16], sizes = [1, 16], strides = [1, 1]} : vector<1x64xf32> to vector<1x16xf32>
    %338 = arith.negf %337 : vector<1x16xf32>
    %339 = math.exp %338 : vector<1x16xf32>
    %cst_68 = arith.constant 1.000000e+00 : f32
    %340 = vector.broadcast %cst_68 : f32 to vector<1x16xf32>
    %341 = arith.addf %340, %339 : vector<1x16xf32>
    %342 = arith.divf %340, %341 : vector<1x16xf32>
    %343 = vector.extract_strided_slice %330 {offsets = [0, 32], sizes = [1, 16], strides = [1, 1]} : vector<1x64xf32> to vector<1x16xf32>
    %344 = math.tanh %343 : vector<1x16xf32>
    %345 = vector.extract_strided_slice %330 {offsets = [0, 48], sizes = [1, 16], strides = [1, 1]} : vector<1x64xf32> to vector<1x16xf32>
    %346 = arith.negf %345 : vector<1x16xf32>
    %347 = math.exp %346 : vector<1x16xf32>
    %cst_69 = arith.constant 1.000000e+00 : f32
    %348 = vector.broadcast %cst_69 : f32 to vector<1x16xf32>
    %349 = arith.addf %348, %347 : vector<1x16xf32>
    %350 = arith.divf %348, %349 : vector<1x16xf32>
    %351 = arith.mulf %342, %325 : vector<1x16xf32>
    %352 = arith.mulf %336, %344 : vector<1x16xf32>
    %353 = arith.addf %351, %352 : vector<1x16xf32>
    %354 = math.tanh %353 : vector<1x16xf32>
    %355 = arith.mulf %350, %354 : vector<1x16xf32>
    %356 = vector.extract_strided_slice %13 {offsets = [3, 0], sizes = [1, 64], strides = [1, 1]} : vector<8x64xf32> to vector<1x64xf32>
    %cst_70 = arith.constant dense<0.000000e+00> : vector<1x64xf32>
    %357 = tpu.matmul %355, %15, %cst_70 {dimension_numbers = #tpu.dot_dimension_numbers<[1], [0], [0], [1], [0, 0, 1, 1], [], []>} : vector<1x16xf32>, vector<16x64xf32>, vector<1x64xf32> -> vector<1x64xf32>
    %358 = arith.addf %356, %357 : vector<1x64xf32>
    %359 = vector.extract_strided_slice %358 {offsets = [0, 0], sizes = [1, 16], strides = [1, 1]} : vector<1x64xf32> to vector<1x16xf32>
    %360 = arith.negf %359 : vector<1x16xf32>
    %361 = math.exp %360 : vector<1x16xf32>
    %cst_71 = arith.constant 1.000000e+00 : f32
    %362 = vector.broadcast %cst_71 : f32 to vector<1x16xf32>
    %363 = arith.addf %362, %361 : vector<1x16xf32>
    %364 = arith.divf %362, %363 : vector<1x16xf32>
    %365 = vector.extract_strided_slice %358 {offsets = [0, 16], sizes = [1, 16], strides = [1, 1]} : vector<1x64xf32> to vector<1x16xf32>
    %366 = arith.negf %365 : vector<1x16xf32>
    %367 = math.exp %366 : vector<1x16xf32>
    %cst_72 = arith.constant 1.000000e+00 : f32
    %368 = vector.broadcast %cst_72 : f32 to vector<1x16xf32>
    %369 = arith.addf %368, %367 : vector<1x16xf32>
    %370 = arith.divf %368, %369 : vector<1x16xf32>
    %371 = vector.extract_strided_slice %358 {offsets = [0, 32], sizes = [1, 16], strides = [1, 1]} : vector<1x64xf32> to vector<1x16xf32>
    %372 = math.tanh %371 : vector<1x16xf32>
    %373 = vector.extract_strided_slice %358 {offsets = [0, 48], sizes = [1, 16], strides = [1, 1]} : vector<1x64xf32> to vector<1x16xf32>
    %374 = arith.negf %373 : vector<1x16xf32>
    %375 = math.exp %374 : vector<1x16xf32>
    %cst_73 = arith.constant 1.000000e+00 : f32
    %376 = vector.broadcast %cst_73 : f32 to vector<1x16xf32>
    %377 = arith.addf %376, %375 : vector<1x16xf32>
    %378 = arith.divf %376, %377 : vector<1x16xf32>
    %379 = arith.mulf %370, %353 : vector<1x16xf32>
    %380 = arith.mulf %364, %372 : vector<1x16xf32>
    %381 = arith.addf %379, %380 : vector<1x16xf32>
    %382 = math.tanh %381 : vector<1x16xf32>
    %383 = arith.mulf %378, %382 : vector<1x16xf32>
    %384 = vector.extract_strided_slice %13 {offsets = [2, 0], sizes = [1, 64], strides = [1, 1]} : vector<8x64xf32> to vector<1x64xf32>
    %cst_74 = arith.constant dense<0.000000e+00> : vector<1x64xf32>
    %385 = tpu.matmul %383, %15, %cst_74 {dimension_numbers = #tpu.dot_dimension_numbers<[1], [0], [0], [1], [0, 0, 1, 1], [], []>} : vector<1x16xf32>, vector<16x64xf32>, vector<1x64xf32> -> vector<1x64xf32>
    %386 = arith.addf %384, %385 : vector<1x64xf32>
    %387 = vector.extract_strided_slice %386 {offsets = [0, 0], sizes = [1, 16], strides = [1, 1]} : vector<1x64xf32> to vector<1x16xf32>
    %388 = arith.negf %387 : vector<1x16xf32>
    %389 = math.exp %388 : vector<1x16xf32>
    %cst_75 = arith.constant 1.000000e+00 : f32
    %390 = vector.broadcast %cst_75 : f32 to vector<1x16xf32>
    %391 = arith.addf %390, %389 : vector<1x16xf32>
    %392 = arith.divf %390, %391 : vector<1x16xf32>
    %393 = vector.extract_strided_slice %386 {offsets = [0, 16], sizes = [1, 16], strides = [1, 1]} : vector<1x64xf32> to vector<1x16xf32>
    %394 = arith.negf %393 : vector<1x16xf32>
    %395 = math.exp %394 : vector<1x16xf32>
    %cst_76 = arith.constant 1.000000e+00 : f32
    %396 = vector.broadcast %cst_76 : f32 to vector<1x16xf32>
    %397 = arith.addf %396, %395 : vector<1x16xf32>
    %398 = arith.divf %396, %397 : vector<1x16xf32>
    %399 = vector.extract_strided_slice %386 {offsets = [0, 32], sizes = [1, 16], strides = [1, 1]} : vector<1x64xf32> to vector<1x16xf32>
    %400 = math.tanh %399 : vector<1x16xf32>
    %401 = vector.extract_strided_slice %386 {offsets = [0, 48], sizes = [1, 16], strides = [1, 1]} : vector<1x64xf32> to vector<1x16xf32>
    %402 = arith.negf %401 : vector<1x16xf32>
    %403 = math.exp %402 : vector<1x16xf32>
    %cst_77 = arith.constant 1.000000e+00 : f32
    %404 = vector.broadcast %cst_77 : f32 to vector<1x16xf32>
    %405 = arith.addf %404, %403 : vector<1x16xf32>
    %406 = arith.divf %404, %405 : vector<1x16xf32>
    %407 = arith.mulf %398, %381 : vector<1x16xf32>
    %408 = arith.mulf %392, %400 : vector<1x16xf32>
    %409 = arith.addf %407, %408 : vector<1x16xf32>
    %410 = math.tanh %409 : vector<1x16xf32>
    %411 = arith.mulf %406, %410 : vector<1x16xf32>
    %412 = vector.extract_strided_slice %13 {offsets = [1, 0], sizes = [1, 64], strides = [1, 1]} : vector<8x64xf32> to vector<1x64xf32>
    %cst_78 = arith.constant dense<0.000000e+00> : vector<1x64xf32>
    %413 = tpu.matmul %411, %15, %cst_78 {dimension_numbers = #tpu.dot_dimension_numbers<[1], [0], [0], [1], [0, 0, 1, 1], [], []>} : vector<1x16xf32>, vector<16x64xf32>, vector<1x64xf32> -> vector<1x64xf32>
    %414 = arith.addf %412, %413 : vector<1x64xf32>
    %415 = vector.extract_strided_slice %414 {offsets = [0, 0], sizes = [1, 16], strides = [1, 1]} : vector<1x64xf32> to vector<1x16xf32>
    %416 = arith.negf %415 : vector<1x16xf32>
    %417 = math.exp %416 : vector<1x16xf32>
    %cst_79 = arith.constant 1.000000e+00 : f32
    %418 = vector.broadcast %cst_79 : f32 to vector<1x16xf32>
    %419 = arith.addf %418, %417 : vector<1x16xf32>
    %420 = arith.divf %418, %419 : vector<1x16xf32>
    %421 = vector.extract_strided_slice %414 {offsets = [0, 16], sizes = [1, 16], strides = [1, 1]} : vector<1x64xf32> to vector<1x16xf32>
    %422 = arith.negf %421 : vector<1x16xf32>
    %423 = math.exp %422 : vector<1x16xf32>
    %cst_80 = arith.constant 1.000000e+00 : f32
    %424 = vector.broadcast %cst_80 : f32 to vector<1x16xf32>
    %425 = arith.addf %424, %423 : vector<1x16xf32>
    %426 = arith.divf %424, %425 : vector<1x16xf32>
    %427 = vector.extract_strided_slice %414 {offsets = [0, 32], sizes = [1, 16], strides = [1, 1]} : vector<1x64xf32> to vector<1x16xf32>
    %428 = math.tanh %427 : vector<1x16xf32>
    %429 = vector.extract_strided_slice %414 {offsets = [0, 48], sizes = [1, 16], strides = [1, 1]} : vector<1x64xf32> to vector<1x16xf32>
    %430 = arith.negf %429 : vector<1x16xf32>
    %431 = math.exp %430 : vector<1x16xf32>
    %cst_81 = arith.constant 1.000000e+00 : f32
    %432 = vector.broadcast %cst_81 : f32 to vector<1x16xf32>
    %433 = arith.addf %432, %431 : vector<1x16xf32>
    %434 = arith.divf %432, %433 : vector<1x16xf32>
    %435 = arith.mulf %426, %409 : vector<1x16xf32>
    %436 = arith.mulf %420, %428 : vector<1x16xf32>
    %437 = arith.addf %435, %436 : vector<1x16xf32>
    %438 = math.tanh %437 : vector<1x16xf32>
    %439 = arith.mulf %434, %438 : vector<1x16xf32>
    %440 = vector.extract_strided_slice %13 {offsets = [0, 0], sizes = [1, 64], strides = [1, 1]} : vector<8x64xf32> to vector<1x64xf32>
    %cst_82 = arith.constant dense<0.000000e+00> : vector<1x64xf32>
    %441 = tpu.matmul %439, %15, %cst_82 {dimension_numbers = #tpu.dot_dimension_numbers<[1], [0], [0], [1], [0, 0, 1, 1], [], []>} : vector<1x16xf32>, vector<16x64xf32>, vector<1x64xf32> -> vector<1x64xf32>
    %442 = arith.addf %440, %441 : vector<1x64xf32>
    %443 = vector.extract_strided_slice %442 {offsets = [0, 0], sizes = [1, 16], strides = [1, 1]} : vector<1x64xf32> to vector<1x16xf32>
    %444 = arith.negf %443 : vector<1x16xf32>
    %445 = math.exp %444 : vector<1x16xf32>
    %cst_83 = arith.constant 1.000000e+00 : f32
    %446 = vector.broadcast %cst_83 : f32 to vector<1x16xf32>
    %447 = arith.addf %446, %445 : vector<1x16xf32>
    %448 = arith.divf %446, %447 : vector<1x16xf32>
    %449 = vector.extract_strided_slice %442 {offsets = [0, 16], sizes = [1, 16], strides = [1, 1]} : vector<1x64xf32> to vector<1x16xf32>
    %450 = arith.negf %449 : vector<1x16xf32>
    %451 = math.exp %450 : vector<1x16xf32>
    %cst_84 = arith.constant 1.000000e+00 : f32
    %452 = vector.broadcast %cst_84 : f32 to vector<1x16xf32>
    %453 = arith.addf %452, %451 : vector<1x16xf32>
    %454 = arith.divf %452, %453 : vector<1x16xf32>
    %455 = vector.extract_strided_slice %442 {offsets = [0, 32], sizes = [1, 16], strides = [1, 1]} : vector<1x64xf32> to vector<1x16xf32>
    %456 = math.tanh %455 : vector<1x16xf32>
    %457 = vector.extract_strided_slice %442 {offsets = [0, 48], sizes = [1, 16], strides = [1, 1]} : vector<1x64xf32> to vector<1x16xf32>
    %458 = arith.negf %457 : vector<1x16xf32>
    %459 = math.exp %458 : vector<1x16xf32>
    %cst_85 = arith.constant 1.000000e+00 : f32
    %460 = vector.broadcast %cst_85 : f32 to vector<1x16xf32>
    %461 = arith.addf %460, %459 : vector<1x16xf32>
    %462 = arith.divf %460, %461 : vector<1x16xf32>
    %463 = arith.mulf %454, %437 : vector<1x16xf32>
    %464 = arith.mulf %448, %456 : vector<1x16xf32>
    %465 = arith.addf %463, %464 : vector<1x16xf32>
    %466 = math.tanh %465 : vector<1x16xf32>
    %467 = arith.mulf %462, %466 : vector<1x16xf32>
    %468 = tpu.concatenate %45, %73, %101, %129, %157, %185, %213, %241 in 0 : vector<1x16xf32>, vector<1x16xf32>, vector<1x16xf32>, vector<1x16xf32>, vector<1x16xf32>, vector<1x16xf32>, vector<1x16xf32>, vector<1x16xf32> -> vector<8x16xf32>
    %469 = tpu.concatenate %467, %439, %411, %383, %355, %327, %299, %271 in 0 : vector<1x16xf32>, vector<1x16xf32>, vector<1x16xf32>, vector<1x16xf32>, vector<1x16xf32>, vector<1x16xf32>, vector<1x16xf32>, vector<1x16xf32> -> vector<8x16xf32>
    %470 = tpu.concatenate %468, %469 in 1 : vector<8x16xf32>, vector<8x16xf32> -> vector<8x32xf32>
    %cst_86 = arith.constant dense<0.000000e+00> : vector<1xf32>
    %471 = vector.multi_reduction <add>, %3, %cst_86 [0] : vector<8x1xf32> to vector<1xf32>
    %472 = vector.shape_cast %471 : vector<1xf32> to vector<1x1xf32>
    %cst_87 = arith.constant 1.000000e+00 : f32
    %473 = vector.broadcast %cst_87 : f32 to vector<1x1xf32>
    %474 = arith.maximumf %472, %473 : vector<1x1xf32>
    %475 = vector.broadcast %3 : vector<8x1xf32> to vector<8x32xf32>
    %476 = arith.mulf %1, %475 : vector<8x32xf32>
    %cst_88 = arith.constant dense<0.000000e+00> : vector<32xf32>
    %477 = vector.multi_reduction <add>, %476, %cst_88 [0] : vector<8x32xf32> to vector<32xf32>
    %478 = vector.shape_cast %477 : vector<32xf32> to vector<1x32xf32>
    %479 = vector.broadcast %474 : vector<1x1xf32> to vector<1x32xf32>
    %480 = arith.divf %478, %479 : vector<1x32xf32>
    %c0_89 = arith.constant 0 : index
    %c0_90 = arith.constant 0 : index
    %481 = vector.load %arg14[%c0_89, %c0_90] : memref<32x128xf32, #tpu.memory_space<vmem>>, vector<32x128xf32>
    %cst_91 = arith.constant dense<0.000000e+00> : vector<1x128xf32>
    %482 = tpu.matmul %480, %481, %cst_91 {dimension_numbers = #tpu.dot_dimension_numbers<[1], [0], [0], [1], [0, 0, 1, 1], [], []>} : vector<1x32xf32>, vector<32x128xf32>, vector<1x128xf32> -> vector<1x128xf32>
    %c0_92 = arith.constant 0 : index
    %c0_93 = arith.constant 0 : index
    %483 = vector.load %arg15[%c0_92, %c0_93] : memref<1x128xf32, #tpu.memory_space<vmem>>, vector<1x128xf32>
    %484 = arith.addf %482, %483 : vector<1x128xf32>
    %c0_94 = arith.constant 0 : index
    %c0_95 = arith.constant 0 : index
    %485 = vector.load %arg12[%c0_94, %c0_95] : memref<32x128xf32, #tpu.memory_space<vmem>>, vector<32x128xf32>
    %cst_96 = arith.constant dense<0.000000e+00> : vector<8x128xf32>
    %486 = tpu.matmul %470, %485, %cst_96 {dimension_numbers = #tpu.dot_dimension_numbers<[1], [0], [0], [1], [0, 0, 1, 1], [], []>} : vector<8x32xf32>, vector<32x128xf32>, vector<8x128xf32> -> vector<8x128xf32>
    %c0_97 = arith.constant 0 : index
    %c0_98 = arith.constant 0 : index
    %487 = vector.load %arg13[%c0_97, %c0_98] : memref<1x128xf32, #tpu.memory_space<vmem>>, vector<1x128xf32>
    %488 = vector.broadcast %487 : vector<1x128xf32> to vector<8x128xf32>
    %489 = arith.addf %486, %488 : vector<8x128xf32>
    %490 = vector.broadcast %484 : vector<1x128xf32> to vector<8x128xf32>
    %491 = arith.addf %489, %490 : vector<8x128xf32>
    %492 = math.tanh %491 : vector<8x128xf32>
    %c0_99 = arith.constant 0 : index
    %c0_100 = arith.constant 0 : index
    %493 = vector.load %arg16[%c0_99, %c0_100] : memref<128x2xf32, #tpu.memory_space<vmem>>, vector<128x2xf32>
    %cst_101 = arith.constant dense<0.000000e+00> : vector<8x2xf32>
    %494 = tpu.matmul %492, %493, %cst_101 {dimension_numbers = #tpu.dot_dimension_numbers<[1], [0], [0], [1], [0, 0, 1, 1], [], []>} : vector<8x128xf32>, vector<128x2xf32>, vector<8x2xf32> -> vector<8x2xf32>
    %c0_102 = arith.constant 0 : index
    %c0_103 = arith.constant 0 : index
    %495 = vector.load %arg17[%c0_102, %c0_103] : memref<1x2xf32, #tpu.memory_space<vmem>>, vector<1x2xf32>
    %496 = vector.broadcast %495 : vector<1x2xf32> to vector<8x2xf32>
    %497 = arith.addf %494, %496 : vector<8x2xf32>
    %cst_104 = arith.constant dense<0xFF800000> : vector<8xf32>
    %498 = vector.multi_reduction <maximumf>, %497, %cst_104 [1] : vector<8x2xf32> to vector<8xf32>
    %499 = vector.shape_cast %498 : vector<8xf32> to vector<8x1xf32>
    %500 = vector.broadcast %499 : vector<8x1xf32> to vector<8x2xf32>
    %501 = arith.subf %497, %500 : vector<8x2xf32>
    %502 = math.exp %501 : vector<8x2xf32>
    %cst_105 = arith.constant dense<0.000000e+00> : vector<8xf32>
    %503 = vector.multi_reduction <add>, %502, %cst_105 [1] : vector<8x2xf32> to vector<8xf32>
    %504 = vector.shape_cast %503 : vector<8xf32> to vector<8x1xf32>
    %505 = math.log %504 : vector<8x1xf32>
    %506 = vector.broadcast %505 : vector<8x1xf32> to vector<8x2xf32>
    %507 = arith.subf %501, %506 : vector<8x2xf32>
    %cst_106 = arith.constant 0.000000e+00 : f32
    %508 = vector.broadcast %cst_106 : f32 to vector<8x2xf32>
    %509 = arith.subf %508, %507 : vector<8x2xf32>
    %510 = vector.extract_strided_slice %497 {offsets = [0, 1], sizes = [8, 1], strides = [1, 1]} : vector<8x2xf32> to vector<8x1xf32>
    %511 = vector.extract_strided_slice %497 {offsets = [0, 0], sizes = [8, 1], strides = [1, 1]} : vector<8x2xf32> to vector<8x1xf32>
    %512 = arith.cmpf ogt, %510, %511 : vector<8x1xf32>
    %513 = arith.extui %512 : vector<8x1xi1> to vector<8x1xi32>
    %514 = arith.sitofp %513 : vector<8x1xi32> to vector<8x1xf32>
    %c0_107 = arith.constant 0 : index
    %c0_108 = arith.constant 0 : index
    %515 = vector.load %arg9[%c0_107, %c0_108] : memref<32x128xf32, #tpu.memory_space<vmem>>, vector<32x128xf32>
    %cst_109 = arith.constant dense<0.000000e+00> : vector<8x128xf32>
    %516 = tpu.matmul %1, %515, %cst_109 {dimension_numbers = #tpu.dot_dimension_numbers<[1], [0], [0], [1], [0, 0, 1, 1], [], []>} : vector<8x32xf32>, vector<32x128xf32>, vector<8x128xf32> -> vector<8x128xf32>
    %c0_110 = arith.constant 0 : index
    %c0_111 = arith.constant 0 : index
    %517 = vector.load %arg11[%c0_110, %c0_111] : memref<1x128xf32, #tpu.memory_space<vmem>>, vector<1x128xf32>
    %518 = vector.broadcast %517 : vector<1x128xf32> to vector<8x128xf32>
    %519 = arith.addf %516, %518 : vector<8x128xf32>
    %c0_112 = arith.constant 0 : index
    %c0_113 = arith.constant 0 : index
    %520 = vector.load %arg10[%c0_112, %c0_113] : memref<32x128xf32, #tpu.memory_space<vmem>>, vector<32x128xf32>
    %cst_114 = arith.constant 0.000000e+00 : f32
    %521 = vector.broadcast %cst_114 : f32 to vector<1x32xf32>
    %cst_115 = arith.constant 0.000000e+00 : f32
    %522 = vector.broadcast %cst_115 : f32 to vector<1x32xf32>
    %523 = vector.extract_strided_slice %519 {offsets = [0, 0], sizes = [1, 128], strides = [1, 1]} : vector<8x128xf32> to vector<1x128xf32>
    %cst_116 = arith.constant dense<0.000000e+00> : vector<1x128xf32>
    %524 = tpu.matmul %521, %520, %cst_116 {dimension_numbers = #tpu.dot_dimension_numbers<[1], [0], [0], [1], [0, 0, 1, 1], [], []>} : vector<1x32xf32>, vector<32x128xf32>, vector<1x128xf32> -> vector<1x128xf32>
    %525 = arith.addf %523, %524 : vector<1x128xf32>
    %526 = vector.extract_strided_slice %525 {offsets = [0, 0], sizes = [1, 32], strides = [1, 1]} : vector<1x128xf32> to vector<1x32xf32>
    %527 = arith.negf %526 : vector<1x32xf32>
    %528 = math.exp %527 : vector<1x32xf32>
    %cst_117 = arith.constant 1.000000e+00 : f32
    %529 = vector.broadcast %cst_117 : f32 to vector<1x32xf32>
    %530 = arith.addf %529, %528 : vector<1x32xf32>
    %531 = arith.divf %529, %530 : vector<1x32xf32>
    %532 = vector.extract_strided_slice %525 {offsets = [0, 32], sizes = [1, 32], strides = [1, 1]} : vector<1x128xf32> to vector<1x32xf32>
    %533 = arith.negf %532 : vector<1x32xf32>
    %534 = math.exp %533 : vector<1x32xf32>
    %cst_118 = arith.constant 1.000000e+00 : f32
    %535 = vector.broadcast %cst_118 : f32 to vector<1x32xf32>
    %536 = arith.addf %535, %534 : vector<1x32xf32>
    %537 = arith.divf %535, %536 : vector<1x32xf32>
    %538 = vector.extract_strided_slice %525 {offsets = [0, 64], sizes = [1, 32], strides = [1, 1]} : vector<1x128xf32> to vector<1x32xf32>
    %539 = math.tanh %538 : vector<1x32xf32>
    %540 = vector.extract_strided_slice %525 {offsets = [0, 96], sizes = [1, 32], strides = [1, 1]} : vector<1x128xf32> to vector<1x32xf32>
    %541 = arith.negf %540 : vector<1x32xf32>
    %542 = math.exp %541 : vector<1x32xf32>
    %cst_119 = arith.constant 1.000000e+00 : f32
    %543 = vector.broadcast %cst_119 : f32 to vector<1x32xf32>
    %544 = arith.addf %543, %542 : vector<1x32xf32>
    %545 = arith.divf %543, %544 : vector<1x32xf32>
    %546 = arith.mulf %537, %522 : vector<1x32xf32>
    %547 = arith.mulf %531, %539 : vector<1x32xf32>
    %548 = arith.addf %546, %547 : vector<1x32xf32>
    %549 = math.tanh %548 : vector<1x32xf32>
    %550 = arith.mulf %545, %549 : vector<1x32xf32>
    %551 = vector.extract_strided_slice %514 {offsets = [0, 0], sizes = [1, 1], strides = [1, 1]} : vector<8x1xf32> to vector<1x1xf32>
    %cst_120 = arith.constant 5.000000e-01 : f32
    %552 = vector.broadcast %cst_120 : f32 to vector<1x1xf32>
    %553 = arith.cmpf ogt, %551, %552 : vector<1x1xf32>
    %554 = vector.shape_cast %553 : vector<1x1xi1> to vector<1x1xi1>
    %555 = vector.broadcast %554 : vector<1x1xi1> to vector<1x32xi1>
    %556 = arith.select %555, %550, %521 : vector<1x32xi1>, vector<1x32xf32>
    %557 = vector.shape_cast %553 : vector<1x1xi1> to vector<1x1xi1>
    %558 = vector.broadcast %557 : vector<1x1xi1> to vector<1x32xi1>
    %559 = arith.select %558, %548, %522 : vector<1x32xi1>, vector<1x32xf32>
    %560 = vector.extract_strided_slice %519 {offsets = [1, 0], sizes = [1, 128], strides = [1, 1]} : vector<8x128xf32> to vector<1x128xf32>
    %cst_121 = arith.constant dense<0.000000e+00> : vector<1x128xf32>
    %561 = tpu.matmul %556, %520, %cst_121 {dimension_numbers = #tpu.dot_dimension_numbers<[1], [0], [0], [1], [0, 0, 1, 1], [], []>} : vector<1x32xf32>, vector<32x128xf32>, vector<1x128xf32> -> vector<1x128xf32>
    %562 = arith.addf %560, %561 : vector<1x128xf32>
    %563 = vector.extract_strided_slice %562 {offsets = [0, 0], sizes = [1, 32], strides = [1, 1]} : vector<1x128xf32> to vector<1x32xf32>
    %564 = arith.negf %563 : vector<1x32xf32>
    %565 = math.exp %564 : vector<1x32xf32>
    %cst_122 = arith.constant 1.000000e+00 : f32
    %566 = vector.broadcast %cst_122 : f32 to vector<1x32xf32>
    %567 = arith.addf %566, %565 : vector<1x32xf32>
    %568 = arith.divf %566, %567 : vector<1x32xf32>
    %569 = vector.extract_strided_slice %562 {offsets = [0, 32], sizes = [1, 32], strides = [1, 1]} : vector<1x128xf32> to vector<1x32xf32>
    %570 = arith.negf %569 : vector<1x32xf32>
    %571 = math.exp %570 : vector<1x32xf32>
    %cst_123 = arith.constant 1.000000e+00 : f32
    %572 = vector.broadcast %cst_123 : f32 to vector<1x32xf32>
    %573 = arith.addf %572, %571 : vector<1x32xf32>
    %574 = arith.divf %572, %573 : vector<1x32xf32>
    %575 = vector.extract_strided_slice %562 {offsets = [0, 64], sizes = [1, 32], strides = [1, 1]} : vector<1x128xf32> to vector<1x32xf32>
    %576 = math.tanh %575 : vector<1x32xf32>
    %577 = vector.extract_strided_slice %562 {offsets = [0, 96], sizes = [1, 32], strides = [1, 1]} : vector<1x128xf32> to vector<1x32xf32>
    %578 = arith.negf %577 : vector<1x32xf32>
    %579 = math.exp %578 : vector<1x32xf32>
    %cst_124 = arith.constant 1.000000e+00 : f32
    %580 = vector.broadcast %cst_124 : f32 to vector<1x32xf32>
    %581 = arith.addf %580, %579 : vector<1x32xf32>
    %582 = arith.divf %580, %581 : vector<1x32xf32>
    %583 = arith.mulf %574, %559 : vector<1x32xf32>
    %584 = arith.mulf %568, %576 : vector<1x32xf32>
    %585 = arith.addf %583, %584 : vector<1x32xf32>
    %586 = math.tanh %585 : vector<1x32xf32>
    %587 = arith.mulf %582, %586 : vector<1x32xf32>
    %588 = vector.extract_strided_slice %514 {offsets = [1, 0], sizes = [1, 1], strides = [1, 1]} : vector<8x1xf32> to vector<1x1xf32>
    %cst_125 = arith.constant 5.000000e-01 : f32
    %589 = vector.broadcast %cst_125 : f32 to vector<1x1xf32>
    %590 = arith.cmpf ogt, %588, %589 : vector<1x1xf32>
    %591 = vector.shape_cast %590 : vector<1x1xi1> to vector<1x1xi1>
    %592 = vector.broadcast %591 : vector<1x1xi1> to vector<1x32xi1>
    %593 = arith.select %592, %587, %556 : vector<1x32xi1>, vector<1x32xf32>
    %594 = vector.shape_cast %590 : vector<1x1xi1> to vector<1x1xi1>
    %595 = vector.broadcast %594 : vector<1x1xi1> to vector<1x32xi1>
    %596 = arith.select %595, %585, %559 : vector<1x32xi1>, vector<1x32xf32>
    %597 = vector.extract_strided_slice %519 {offsets = [2, 0], sizes = [1, 128], strides = [1, 1]} : vector<8x128xf32> to vector<1x128xf32>
    %cst_126 = arith.constant dense<0.000000e+00> : vector<1x128xf32>
    %598 = tpu.matmul %593, %520, %cst_126 {dimension_numbers = #tpu.dot_dimension_numbers<[1], [0], [0], [1], [0, 0, 1, 1], [], []>} : vector<1x32xf32>, vector<32x128xf32>, vector<1x128xf32> -> vector<1x128xf32>
    %599 = arith.addf %597, %598 : vector<1x128xf32>
    %600 = vector.extract_strided_slice %599 {offsets = [0, 0], sizes = [1, 32], strides = [1, 1]} : vector<1x128xf32> to vector<1x32xf32>
    %601 = arith.negf %600 : vector<1x32xf32>
    %602 = math.exp %601 : vector<1x32xf32>
    %cst_127 = arith.constant 1.000000e+00 : f32
    %603 = vector.broadcast %cst_127 : f32 to vector<1x32xf32>
    %604 = arith.addf %603, %602 : vector<1x32xf32>
    %605 = arith.divf %603, %604 : vector<1x32xf32>
    %606 = vector.extract_strided_slice %599 {offsets = [0, 32], sizes = [1, 32], strides = [1, 1]} : vector<1x128xf32> to vector<1x32xf32>
    %607 = arith.negf %606 : vector<1x32xf32>
    %608 = math.exp %607 : vector<1x32xf32>
    %cst_128 = arith.constant 1.000000e+00 : f32
    %609 = vector.broadcast %cst_128 : f32 to vector<1x32xf32>
    %610 = arith.addf %609, %608 : vector<1x32xf32>
    %611 = arith.divf %609, %610 : vector<1x32xf32>
    %612 = vector.extract_strided_slice %599 {offsets = [0, 64], sizes = [1, 32], strides = [1, 1]} : vector<1x128xf32> to vector<1x32xf32>
    %613 = math.tanh %612 : vector<1x32xf32>
    %614 = vector.extract_strided_slice %599 {offsets = [0, 96], sizes = [1, 32], strides = [1, 1]} : vector<1x128xf32> to vector<1x32xf32>
    %615 = arith.negf %614 : vector<1x32xf32>
    %616 = math.exp %615 : vector<1x32xf32>
    %cst_129 = arith.constant 1.000000e+00 : f32
    %617 = vector.broadcast %cst_129 : f32 to vector<1x32xf32>
    %618 = arith.addf %617, %616 : vector<1x32xf32>
    %619 = arith.divf %617, %618 : vector<1x32xf32>
    %620 = arith.mulf %611, %596 : vector<1x32xf32>
    %621 = arith.mulf %605, %613 : vector<1x32xf32>
    %622 = arith.addf %620, %621 : vector<1x32xf32>
    %623 = math.tanh %622 : vector<1x32xf32>
    %624 = arith.mulf %619, %623 : vector<1x32xf32>
    %625 = vector.extract_strided_slice %514 {offsets = [2, 0], sizes = [1, 1], strides = [1, 1]} : vector<8x1xf32> to vector<1x1xf32>
    %cst_130 = arith.constant 5.000000e-01 : f32
    %626 = vector.broadcast %cst_130 : f32 to vector<1x1xf32>
    %627 = arith.cmpf ogt, %625, %626 : vector<1x1xf32>
    %628 = vector.shape_cast %627 : vector<1x1xi1> to vector<1x1xi1>
    %629 = vector.broadcast %628 : vector<1x1xi1> to vector<1x32xi1>
    %630 = arith.select %629, %624, %593 : vector<1x32xi1>, vector<1x32xf32>
    %631 = vector.shape_cast %627 : vector<1x1xi1> to vector<1x1xi1>
    %632 = vector.broadcast %631 : vector<1x1xi1> to vector<1x32xi1>
    %633 = arith.select %632, %622, %596 : vector<1x32xi1>, vector<1x32xf32>
    %634 = vector.extract_strided_slice %519 {offsets = [3, 0], sizes = [1, 128], strides = [1, 1]} : vector<8x128xf32> to vector<1x128xf32>
    %cst_131 = arith.constant dense<0.000000e+00> : vector<1x128xf32>
    %635 = tpu.matmul %630, %520, %cst_131 {dimension_numbers = #tpu.dot_dimension_numbers<[1], [0], [0], [1], [0, 0, 1, 1], [], []>} : vector<1x32xf32>, vector<32x128xf32>, vector<1x128xf32> -> vector<1x128xf32>
    %636 = arith.addf %634, %635 : vector<1x128xf32>
    %637 = vector.extract_strided_slice %636 {offsets = [0, 0], sizes = [1, 32], strides = [1, 1]} : vector<1x128xf32> to vector<1x32xf32>
    %638 = arith.negf %637 : vector<1x32xf32>
    %639 = math.exp %638 : vector<1x32xf32>
    %cst_132 = arith.constant 1.000000e+00 : f32
    %640 = vector.broadcast %cst_132 : f32 to vector<1x32xf32>
    %641 = arith.addf %640, %639 : vector<1x32xf32>
    %642 = arith.divf %640, %641 : vector<1x32xf32>
    %643 = vector.extract_strided_slice %636 {offsets = [0, 32], sizes = [1, 32], strides = [1, 1]} : vector<1x128xf32> to vector<1x32xf32>
    %644 = arith.negf %643 : vector<1x32xf32>
    %645 = math.exp %644 : vector<1x32xf32>
    %cst_133 = arith.constant 1.000000e+00 : f32
    %646 = vector.broadcast %cst_133 : f32 to vector<1x32xf32>
    %647 = arith.addf %646, %645 : vector<1x32xf32>
    %648 = arith.divf %646, %647 : vector<1x32xf32>
    %649 = vector.extract_strided_slice %636 {offsets = [0, 64], sizes = [1, 32], strides = [1, 1]} : vector<1x128xf32> to vector<1x32xf32>
    %650 = math.tanh %649 : vector<1x32xf32>
    %651 = vector.extract_strided_slice %636 {offsets = [0, 96], sizes = [1, 32], strides = [1, 1]} : vector<1x128xf32> to vector<1x32xf32>
    %652 = arith.negf %651 : vector<1x32xf32>
    %653 = math.exp %652 : vector<1x32xf32>
    %cst_134 = arith.constant 1.000000e+00 : f32
    %654 = vector.broadcast %cst_134 : f32 to vector<1x32xf32>
    %655 = arith.addf %654, %653 : vector<1x32xf32>
    %656 = arith.divf %654, %655 : vector<1x32xf32>
    %657 = arith.mulf %648, %633 : vector<1x32xf32>
    %658 = arith.mulf %642, %650 : vector<1x32xf32>
    %659 = arith.addf %657, %658 : vector<1x32xf32>
    %660 = math.tanh %659 : vector<1x32xf32>
    %661 = arith.mulf %656, %660 : vector<1x32xf32>
    %662 = vector.extract_strided_slice %514 {offsets = [3, 0], sizes = [1, 1], strides = [1, 1]} : vector<8x1xf32> to vector<1x1xf32>
    %cst_135 = arith.constant 5.000000e-01 : f32
    %663 = vector.broadcast %cst_135 : f32 to vector<1x1xf32>
    %664 = arith.cmpf ogt, %662, %663 : vector<1x1xf32>
    %665 = vector.shape_cast %664 : vector<1x1xi1> to vector<1x1xi1>
    %666 = vector.broadcast %665 : vector<1x1xi1> to vector<1x32xi1>
    %667 = arith.select %666, %661, %630 : vector<1x32xi1>, vector<1x32xf32>
    %668 = vector.shape_cast %664 : vector<1x1xi1> to vector<1x1xi1>
    %669 = vector.broadcast %668 : vector<1x1xi1> to vector<1x32xi1>
    %670 = arith.select %669, %659, %633 : vector<1x32xi1>, vector<1x32xf32>
    %671 = vector.extract_strided_slice %519 {offsets = [4, 0], sizes = [1, 128], strides = [1, 1]} : vector<8x128xf32> to vector<1x128xf32>
    %cst_136 = arith.constant dense<0.000000e+00> : vector<1x128xf32>
    %672 = tpu.matmul %667, %520, %cst_136 {dimension_numbers = #tpu.dot_dimension_numbers<[1], [0], [0], [1], [0, 0, 1, 1], [], []>} : vector<1x32xf32>, vector<32x128xf32>, vector<1x128xf32> -> vector<1x128xf32>
    %673 = arith.addf %671, %672 : vector<1x128xf32>
    %674 = vector.extract_strided_slice %673 {offsets = [0, 0], sizes = [1, 32], strides = [1, 1]} : vector<1x128xf32> to vector<1x32xf32>
    %675 = arith.negf %674 : vector<1x32xf32>
    %676 = math.exp %675 : vector<1x32xf32>
    %cst_137 = arith.constant 1.000000e+00 : f32
    %677 = vector.broadcast %cst_137 : f32 to vector<1x32xf32>
    %678 = arith.addf %677, %676 : vector<1x32xf32>
    %679 = arith.divf %677, %678 : vector<1x32xf32>
    %680 = vector.extract_strided_slice %673 {offsets = [0, 32], sizes = [1, 32], strides = [1, 1]} : vector<1x128xf32> to vector<1x32xf32>
    %681 = arith.negf %680 : vector<1x32xf32>
    %682 = math.exp %681 : vector<1x32xf32>
    %cst_138 = arith.constant 1.000000e+00 : f32
    %683 = vector.broadcast %cst_138 : f32 to vector<1x32xf32>
    %684 = arith.addf %683, %682 : vector<1x32xf32>
    %685 = arith.divf %683, %684 : vector<1x32xf32>
    %686 = vector.extract_strided_slice %673 {offsets = [0, 64], sizes = [1, 32], strides = [1, 1]} : vector<1x128xf32> to vector<1x32xf32>
    %687 = math.tanh %686 : vector<1x32xf32>
    %688 = vector.extract_strided_slice %673 {offsets = [0, 96], sizes = [1, 32], strides = [1, 1]} : vector<1x128xf32> to vector<1x32xf32>
    %689 = arith.negf %688 : vector<1x32xf32>
    %690 = math.exp %689 : vector<1x32xf32>
    %cst_139 = arith.constant 1.000000e+00 : f32
    %691 = vector.broadcast %cst_139 : f32 to vector<1x32xf32>
    %692 = arith.addf %691, %690 : vector<1x32xf32>
    %693 = arith.divf %691, %692 : vector<1x32xf32>
    %694 = arith.mulf %685, %670 : vector<1x32xf32>
    %695 = arith.mulf %679, %687 : vector<1x32xf32>
    %696 = arith.addf %694, %695 : vector<1x32xf32>
    %697 = math.tanh %696 : vector<1x32xf32>
    %698 = arith.mulf %693, %697 : vector<1x32xf32>
    %699 = vector.extract_strided_slice %514 {offsets = [4, 0], sizes = [1, 1], strides = [1, 1]} : vector<8x1xf32> to vector<1x1xf32>
    %cst_140 = arith.constant 5.000000e-01 : f32
    %700 = vector.broadcast %cst_140 : f32 to vector<1x1xf32>
    %701 = arith.cmpf ogt, %699, %700 : vector<1x1xf32>
    %702 = vector.shape_cast %701 : vector<1x1xi1> to vector<1x1xi1>
    %703 = vector.broadcast %702 : vector<1x1xi1> to vector<1x32xi1>
    %704 = arith.select %703, %698, %667 : vector<1x32xi1>, vector<1x32xf32>
    %705 = vector.shape_cast %701 : vector<1x1xi1> to vector<1x1xi1>
    %706 = vector.broadcast %705 : vector<1x1xi1> to vector<1x32xi1>
    %707 = arith.select %706, %696, %670 : vector<1x32xi1>, vector<1x32xf32>
    %708 = vector.extract_strided_slice %519 {offsets = [5, 0], sizes = [1, 128], strides = [1, 1]} : vector<8x128xf32> to vector<1x128xf32>
    %cst_141 = arith.constant dense<0.000000e+00> : vector<1x128xf32>
    %709 = tpu.matmul %704, %520, %cst_141 {dimension_numbers = #tpu.dot_dimension_numbers<[1], [0], [0], [1], [0, 0, 1, 1], [], []>} : vector<1x32xf32>, vector<32x128xf32>, vector<1x128xf32> -> vector<1x128xf32>
    %710 = arith.addf %708, %709 : vector<1x128xf32>
    %711 = vector.extract_strided_slice %710 {offsets = [0, 0], sizes = [1, 32], strides = [1, 1]} : vector<1x128xf32> to vector<1x32xf32>
    %712 = arith.negf %711 : vector<1x32xf32>
    %713 = math.exp %712 : vector<1x32xf32>
    %cst_142 = arith.constant 1.000000e+00 : f32
    %714 = vector.broadcast %cst_142 : f32 to vector<1x32xf32>
    %715 = arith.addf %714, %713 : vector<1x32xf32>
    %716 = arith.divf %714, %715 : vector<1x32xf32>
    %717 = vector.extract_strided_slice %710 {offsets = [0, 32], sizes = [1, 32], strides = [1, 1]} : vector<1x128xf32> to vector<1x32xf32>
    %718 = arith.negf %717 : vector<1x32xf32>
    %719 = math.exp %718 : vector<1x32xf32>
    %cst_143 = arith.constant 1.000000e+00 : f32
    %720 = vector.broadcast %cst_143 : f32 to vector<1x32xf32>
    %721 = arith.addf %720, %719 : vector<1x32xf32>
    %722 = arith.divf %720, %721 : vector<1x32xf32>
    %723 = vector.extract_strided_slice %710 {offsets = [0, 64], sizes = [1, 32], strides = [1, 1]} : vector<1x128xf32> to vector<1x32xf32>
    %724 = math.tanh %723 : vector<1x32xf32>
    %725 = vector.extract_strided_slice %710 {offsets = [0, 96], sizes = [1, 32], strides = [1, 1]} : vector<1x128xf32> to vector<1x32xf32>
    %726 = arith.negf %725 : vector<1x32xf32>
    %727 = math.exp %726 : vector<1x32xf32>
    %cst_144 = arith.constant 1.000000e+00 : f32
    %728 = vector.broadcast %cst_144 : f32 to vector<1x32xf32>
    %729 = arith.addf %728, %727 : vector<1x32xf32>
    %730 = arith.divf %728, %729 : vector<1x32xf32>
    %731 = arith.mulf %722, %707 : vector<1x32xf32>
    %732 = arith.mulf %716, %724 : vector<1x32xf32>
    %733 = arith.addf %731, %732 : vector<1x32xf32>
    %734 = math.tanh %733 : vector<1x32xf32>
    %735 = arith.mulf %730, %734 : vector<1x32xf32>
    %736 = vector.extract_strided_slice %514 {offsets = [5, 0], sizes = [1, 1], strides = [1, 1]} : vector<8x1xf32> to vector<1x1xf32>
    %cst_145 = arith.constant 5.000000e-01 : f32
    %737 = vector.broadcast %cst_145 : f32 to vector<1x1xf32>
    %738 = arith.cmpf ogt, %736, %737 : vector<1x1xf32>
    %739 = vector.shape_cast %738 : vector<1x1xi1> to vector<1x1xi1>
    %740 = vector.broadcast %739 : vector<1x1xi1> to vector<1x32xi1>
    %741 = arith.select %740, %735, %704 : vector<1x32xi1>, vector<1x32xf32>
    %742 = vector.shape_cast %738 : vector<1x1xi1> to vector<1x1xi1>
    %743 = vector.broadcast %742 : vector<1x1xi1> to vector<1x32xi1>
    %744 = arith.select %743, %733, %707 : vector<1x32xi1>, vector<1x32xf32>
    %745 = vector.extract_strided_slice %519 {offsets = [6, 0], sizes = [1, 128], strides = [1, 1]} : vector<8x128xf32> to vector<1x128xf32>
    %cst_146 = arith.constant dense<0.000000e+00> : vector<1x128xf32>
    %746 = tpu.matmul %741, %520, %cst_146 {dimension_numbers = #tpu.dot_dimension_numbers<[1], [0], [0], [1], [0, 0, 1, 1], [], []>} : vector<1x32xf32>, vector<32x128xf32>, vector<1x128xf32> -> vector<1x128xf32>
    %747 = arith.addf %745, %746 : vector<1x128xf32>
    %748 = vector.extract_strided_slice %747 {offsets = [0, 0], sizes = [1, 32], strides = [1, 1]} : vector<1x128xf32> to vector<1x32xf32>
    %749 = arith.negf %748 : vector<1x32xf32>
    %750 = math.exp %749 : vector<1x32xf32>
    %cst_147 = arith.constant 1.000000e+00 : f32
    %751 = vector.broadcast %cst_147 : f32 to vector<1x32xf32>
    %752 = arith.addf %751, %750 : vector<1x32xf32>
    %753 = arith.divf %751, %752 : vector<1x32xf32>
    %754 = vector.extract_strided_slice %747 {offsets = [0, 32], sizes = [1, 32], strides = [1, 1]} : vector<1x128xf32> to vector<1x32xf32>
    %755 = arith.negf %754 : vector<1x32xf32>
    %756 = math.exp %755 : vector<1x32xf32>
    %cst_148 = arith.constant 1.000000e+00 : f32
    %757 = vector.broadcast %cst_148 : f32 to vector<1x32xf32>
    %758 = arith.addf %757, %756 : vector<1x32xf32>
    %759 = arith.divf %757, %758 : vector<1x32xf32>
    %760 = vector.extract_strided_slice %747 {offsets = [0, 64], sizes = [1, 32], strides = [1, 1]} : vector<1x128xf32> to vector<1x32xf32>
    %761 = math.tanh %760 : vector<1x32xf32>
    %762 = vector.extract_strided_slice %747 {offsets = [0, 96], sizes = [1, 32], strides = [1, 1]} : vector<1x128xf32> to vector<1x32xf32>
    %763 = arith.negf %762 : vector<1x32xf32>
    %764 = math.exp %763 : vector<1x32xf32>
    %cst_149 = arith.constant 1.000000e+00 : f32
    %765 = vector.broadcast %cst_149 : f32 to vector<1x32xf32>
    %766 = arith.addf %765, %764 : vector<1x32xf32>
    %767 = arith.divf %765, %766 : vector<1x32xf32>
    %768 = arith.mulf %759, %744 : vector<1x32xf32>
    %769 = arith.mulf %753, %761 : vector<1x32xf32>
    %770 = arith.addf %768, %769 : vector<1x32xf32>
    %771 = math.tanh %770 : vector<1x32xf32>
    %772 = arith.mulf %767, %771 : vector<1x32xf32>
    %773 = vector.extract_strided_slice %514 {offsets = [6, 0], sizes = [1, 1], strides = [1, 1]} : vector<8x1xf32> to vector<1x1xf32>
    %cst_150 = arith.constant 5.000000e-01 : f32
    %774 = vector.broadcast %cst_150 : f32 to vector<1x1xf32>
    %775 = arith.cmpf ogt, %773, %774 : vector<1x1xf32>
    %776 = vector.shape_cast %775 : vector<1x1xi1> to vector<1x1xi1>
    %777 = vector.broadcast %776 : vector<1x1xi1> to vector<1x32xi1>
    %778 = arith.select %777, %772, %741 : vector<1x32xi1>, vector<1x32xf32>
    %779 = vector.shape_cast %775 : vector<1x1xi1> to vector<1x1xi1>
    %780 = vector.broadcast %779 : vector<1x1xi1> to vector<1x32xi1>
    %781 = arith.select %780, %770, %744 : vector<1x32xi1>, vector<1x32xf32>
    %782 = vector.extract_strided_slice %519 {offsets = [7, 0], sizes = [1, 128], strides = [1, 1]} : vector<8x128xf32> to vector<1x128xf32>
    %cst_151 = arith.constant dense<0.000000e+00> : vector<1x128xf32>
    %783 = tpu.matmul %778, %520, %cst_151 {dimension_numbers = #tpu.dot_dimension_numbers<[1], [0], [0], [1], [0, 0, 1, 1], [], []>} : vector<1x32xf32>, vector<32x128xf32>, vector<1x128xf32> -> vector<1x128xf32>
    %784 = arith.addf %782, %783 : vector<1x128xf32>
    %785 = vector.extract_strided_slice %784 {offsets = [0, 0], sizes = [1, 32], strides = [1, 1]} : vector<1x128xf32> to vector<1x32xf32>
    %786 = arith.negf %785 : vector<1x32xf32>
    %787 = math.exp %786 : vector<1x32xf32>
    %cst_152 = arith.constant 1.000000e+00 : f32
    %788 = vector.broadcast %cst_152 : f32 to vector<1x32xf32>
    %789 = arith.addf %788, %787 : vector<1x32xf32>
    %790 = arith.divf %788, %789 : vector<1x32xf32>
    %791 = vector.extract_strided_slice %784 {offsets = [0, 32], sizes = [1, 32], strides = [1, 1]} : vector<1x128xf32> to vector<1x32xf32>
    %792 = arith.negf %791 : vector<1x32xf32>
    %793 = math.exp %792 : vector<1x32xf32>
    %cst_153 = arith.constant 1.000000e+00 : f32
    %794 = vector.broadcast %cst_153 : f32 to vector<1x32xf32>
    %795 = arith.addf %794, %793 : vector<1x32xf32>
    %796 = arith.divf %794, %795 : vector<1x32xf32>
    %797 = vector.extract_strided_slice %784 {offsets = [0, 64], sizes = [1, 32], strides = [1, 1]} : vector<1x128xf32> to vector<1x32xf32>
    %798 = math.tanh %797 : vector<1x32xf32>
    %799 = vector.extract_strided_slice %784 {offsets = [0, 96], sizes = [1, 32], strides = [1, 1]} : vector<1x128xf32> to vector<1x32xf32>
    %800 = arith.negf %799 : vector<1x32xf32>
    %801 = math.exp %800 : vector<1x32xf32>
    %cst_154 = arith.constant 1.000000e+00 : f32
    %802 = vector.broadcast %cst_154 : f32 to vector<1x32xf32>
    %803 = arith.addf %802, %801 : vector<1x32xf32>
    %804 = arith.divf %802, %803 : vector<1x32xf32>
    %805 = arith.mulf %796, %781 : vector<1x32xf32>
    %806 = arith.mulf %790, %798 : vector<1x32xf32>
    %807 = arith.addf %805, %806 : vector<1x32xf32>
    %808 = math.tanh %807 : vector<1x32xf32>
    %809 = arith.mulf %804, %808 : vector<1x32xf32>
    %810 = vector.extract_strided_slice %514 {offsets = [7, 0], sizes = [1, 1], strides = [1, 1]} : vector<8x1xf32> to vector<1x1xf32>
    %cst_155 = arith.constant 5.000000e-01 : f32
    %811 = vector.broadcast %cst_155 : f32 to vector<1x1xf32>
    %812 = arith.cmpf ogt, %810, %811 : vector<1x1xf32>
    %813 = vector.shape_cast %812 : vector<1x1xi1> to vector<1x1xi1>
    %814 = vector.broadcast %813 : vector<1x1xi1> to vector<1x32xi1>
    %815 = arith.select %814, %809, %778 : vector<1x32xi1>, vector<1x32xf32>
    %c0_156 = arith.constant 0 : index
    %c0_157 = arith.constant 0 : index
    %816 = vector.load %arg18[%c0_156, %c0_157] : memref<32x3xf32, #tpu.memory_space<vmem>>, vector<32x3xf32>
    %cst_158 = arith.constant dense<0.000000e+00> : vector<1x3xf32>
    %817 = tpu.matmul %815, %816, %cst_158 {dimension_numbers = #tpu.dot_dimension_numbers<[1], [0], [0], [1], [0, 0, 1, 1], [], []>} : vector<1x32xf32>, vector<32x3xf32>, vector<1x3xf32> -> vector<1x3xf32>
    %c0_159 = arith.constant 0 : index
    %c0_160 = arith.constant 0 : index
    %818 = vector.load %arg19[%c0_159, %c0_160] : memref<1x3xf32, #tpu.memory_space<vmem>>, vector<1x3xf32>
    %819 = arith.addf %817, %818 : vector<1x3xf32>
    %cst_161 = arith.constant dense<0xFF800000> : vector<1xf32>
    %820 = vector.multi_reduction <maximumf>, %819, %cst_161 [1] : vector<1x3xf32> to vector<1xf32>
    %821 = vector.shape_cast %820 : vector<1xf32> to vector<1x1xf32>
    %822 = vector.broadcast %821 : vector<1x1xf32> to vector<1x3xf32>
    %823 = arith.subf %819, %822 : vector<1x3xf32>
    %824 = math.exp %823 : vector<1x3xf32>
    %cst_162 = arith.constant dense<0.000000e+00> : vector<1xf32>
    %825 = vector.multi_reduction <add>, %824, %cst_162 [1] : vector<1x3xf32> to vector<1xf32>
    %826 = vector.shape_cast %825 : vector<1xf32> to vector<1x1xf32>
    %827 = math.log %826 : vector<1x1xf32>
    %828 = vector.broadcast %827 : vector<1x1xf32> to vector<1x3xf32>
    %829 = arith.subf %823, %828 : vector<1x3xf32>
    %830 = vector.shape_cast %829 : vector<1x3xf32> to vector<1x3xf32>
    %831 = vector.broadcast %830 : vector<1x3xf32> to vector<8x3xf32>
    %cst_163 = arith.constant 0.000000e+00 : f32
    %832 = vector.broadcast %cst_163 : f32 to vector<8x122xf32>
    %833 = tpu.concatenate %509, %514, %831, %832 in 1 : vector<8x2xf32>, vector<8x1xf32>, vector<8x3xf32>, vector<8x122xf32> -> vector<8x128xf32>
    %c0_164 = arith.constant 0 : index
    %c0_165 = arith.constant 0 : index
    %c0_166 = arith.constant 0 : index
    %834 = vector.load %arg20[%c0_164, %c0_165, %c0_166] : memref<1x8x128xf32, #tpu.memory_space<vmem>>, vector<1x8x128xf32>
    %835 = vector.shape_cast %834 : vector<1x8x128xf32> to vector<8x128xf32>
    %836 = vector.shape_cast %833 : vector<8x128xf32> to vector<1x8x128xf32>
    tpu.vector_store %arg20[%c0_164, %c0_165, %c0_166], %836 {strides = array<i32>} : memref<1x8x128xf32, #tpu.memory_space<vmem>>, vector<1x8x128xf32>,
    return
  }
  func.func @transform_0(%arg0: i32) -> (i32, i32, i32) {
    %c0_i32 = arith.constant 0 : i32
    %c0_i32_0 = arith.constant 0 : i32
    %c0_i32_1 = arith.constant 0 : i32
    return %arg0, %c0_i32, %c0_i32_0 : i32, i32, i32
  }
  func.func @transform_1(%arg0: i32) -> (i32, i32, i32) {
    %c0_i32 = arith.constant 0 : i32
    %c0_i32_0 = arith.constant 0 : i32
    %c0_i32_1 = arith.constant 0 : i32
    return %arg0, %c0_i32, %c0_i32_0 : i32, i32, i32
  }
  func.func @transform_2(%arg0: i32) -> (i32, i32) {
    %c0_i32 = arith.constant 0 : i32
    %c0_i32_0 = arith.constant 0 : i32
    %c0_i32_1 = arith.constant 0 : i32
    return %c0_i32, %c0_i32_0 : i32, i32
  }
  func.func @transform_3(%arg0: i32) -> (i32, i32) {
    %c0_i32 = arith.constant 0 : i32
    %c0_i32_0 = arith.constant 0 : i32
    %c0_i32_1 = arith.constant 0 : i32
    return %c0_i32, %c0_i32_0 : i32, i32
  }
  func.func @transform_4(%arg0: i32) -> (i32, i32) {
    %c0_i32 = arith.constant 0 : i32
    %c0_i32_0 = arith.constant 0 : i32
    %c0_i32_1 = arith.constant 0 : i32
    return %c0_i32, %c0_i32_0 : i32, i32
  }
  func.func @transform_5(%arg0: i32) -> (i32, i32) {
    %c0_i32 = arith.constant 0 : i32
    %c0_i32_0 = arith.constant 0 : i32
    %c0_i32_1 = arith.constant 0 : i32
    return %c0_i32, %c0_i32_0 : i32, i32
  }
  func.func @transform_6(%arg0: i32) -> (i32, i32) {
    %c0_i32 = arith.constant 0 : i32
    %c0_i32_0 = arith.constant 0 : i32
    %c0_i32_1 = arith.constant 0 : i32
    return %c0_i32, %c0_i32_0 : i32, i32
  }
  func.func @transform_7(%arg0: i32) -> (i32, i32) {
    %c0_i32 = arith.constant 0 : i32
    %c0_i32_0 = arith.constant 0 : i32
    %c0_i32_1 = arith.constant 0 : i32
    return %c0_i32, %c0_i32_0 : i32, i32
  }
  func.func @transform_8(%arg0: i32) -> (i32, i32) {
    %c0_i32 = arith.constant 0 : i32
    %c0_i32_0 = arith.constant 0 : i32
    %c0_i32_1 = arith.constant 0 : i32
    return %c0_i32, %c0_i32_0 : i32, i32
  }
  func.func @transform_9(%arg0: i32) -> (i32, i32) {
    %c0_i32 = arith.constant 0 : i32
    %c0_i32_0 = arith.constant 0 : i32
    %c0_i32_1 = arith.constant 0 : i32
    return %c0_i32, %c0_i32_0 : i32, i32
  }
  func.func @transform_10(%arg0: i32) -> (i32, i32) {
    %c0_i32 = arith.constant 0 : i32
    %c0_i32_0 = arith.constant 0 : i32
    %c0_i32_1 = arith.constant 0 : i32
    return %c0_i32, %c0_i32_0 : i32, i32
  }
  func.func @transform_11(%arg0: i32) -> (i32, i32) {
    %c0_i32 = arith.constant 0 : i32
    %c0_i32_0 = arith.constant 0 : i32
    %c0_i32_1 = arith.constant 0 : i32
    return %c0_i32, %c0_i32_0 : i32, i32
  }
  func.func @transform_12(%arg0: i32) -> (i32, i32) {
    %c0_i32 = arith.constant 0 : i32
    %c0_i32_0 = arith.constant 0 : i32
    %c0_i32_1 = arith.constant 0 : i32
    return %c0_i32, %c0_i32_0 : i32, i32
  }
  func.func @transform_13(%arg0: i32) -> (i32, i32) {
    %c0_i32 = arith.constant 0 : i32
    %c0_i32_0 = arith.constant 0 : i32
    %c0_i32_1 = arith.constant 0 : i32
    return %c0_i32, %c0_i32_0 : i32, i32
  }
  func.func @transform_14(%arg0: i32) -> (i32, i32) {
    %c0_i32 = arith.constant 0 : i32
    %c0_i32_0 = arith.constant 0 : i32
    %c0_i32_1 = arith.constant 0 : i32
    return %c0_i32, %c0_i32_0 : i32, i32
  }
  func.func @transform_15(%arg0: i32) -> (i32, i32) {
    %c0_i32 = arith.constant 0 : i32
    %c0_i32_0 = arith.constant 0 : i32
    %c0_i32_1 = arith.constant 0 : i32
    return %c0_i32, %c0_i32_0 : i32, i32
  }
  func.func @transform_16(%arg0: i32) -> (i32, i32) {
    %c0_i32 = arith.constant 0 : i32
    %c0_i32_0 = arith.constant 0 : i32
    %c0_i32_1 = arith.constant 0 : i32
    return %c0_i32, %c0_i32_0 : i32, i32
  }
  func.func @transform_17(%arg0: i32) -> (i32, i32) {
    %c0_i32 = arith.constant 0 : i32
    %c0_i32_0 = arith.constant 0 : i32
    %c0_i32_1 = arith.constant 0 : i32
    return %c0_i32, %c0_i32_0 : i32, i32
  }
  func.func @transform_18(%arg0: i32) -> (i32, i32) {
    %c0_i32 = arith.constant 0 : i32
    %c0_i32_0 = arith.constant 0 : i32
    %c0_i32_1 = arith.constant 0 : i32
    return %c0_i32, %c0_i32_0 : i32, i32
  }
  func.func @transform_19(%arg0: i32) -> (i32, i32, i32) {
    %c0_i32 = arith.constant 0 : i32
    %c0_i32_0 = arith.constant 0 : i32
    %c0_i32_1 = arith.constant 0 : i32
    return %arg0, %c0_i32, %c0_i32_0 : i32, i32, i32
  }
}

</mosaic_0001>

<llo_original>
// kernel: tpu_custom_call.1
$region0: #{tpu_custom_call.1}
  #allocation0 [shape = 'u32[]', space=smem, size = 0x4, offset = 0x4, fixed_abs, tag = 'smem constant byte address 0x4 - core index']
  #allocation1 [shape = 'u32[144,128]{1,0:T(1,128)}', space=vmem, size = 0x12000, scoped, tag = 'internal scratch']
  %s0 = inlined_call_operand.hbm [shape: f32[2,8,32], index: 0, kind: input, shape index: {}]
  %s1 = inlined_call_operand.vmem [shape: f32[2,8,1], index: 1, kind: input, shape index: {}]
  %s2 = inlined_call_operand.vmem [shape: f32[32,64], index: 2, kind: input, shape index: {}]
  %s3 = inlined_call_operand.hbm [shape: f32[16,64], index: 3, kind: input, shape index: {}]
  %s4 = inlined_call_operand.vmem [shape: f32[1,64], index: 4, kind: input, shape index: {}]
  %s5 = inlined_call_operand.vmem [shape: f32[32,64], index: 5, kind: input, shape index: {}]
  %s6 = inlined_call_operand.hbm [shape: f32[16,64], index: 6, kind: input, shape index: {}]
  %s7 = inlined_call_operand.vmem [shape: f32[1,64], index: 7, kind: input, shape index: {}]
  %s8 = inlined_call_operand.vmem [shape: f32[32,128], index: 8, kind: input, shape index: {}]
  %s9 = inlined_call_operand.vmem [shape: f32[32,128], index: 9, kind: input, shape index: {}]
  %s10 = inlined_call_operand.vmem [shape: f32[1,128], index: 10, kind: input, shape index: {}]
  %s11 = inlined_call_operand.vmem [shape: f32[32,128], index: 11, kind: input, shape index: {}]
  %s12 = inlined_call_operand.vmem [shape: f32[1,128], index: 12, kind: input, shape index: {}]
  %s13 = inlined_call_operand.vmem [shape: f32[32,128], index: 13, kind: input, shape index: {}]
  %s14 = inlined_call_operand.vmem [shape: f32[1,128], index: 14, kind: input, shape index: {}]
  %s15 = inlined_call_operand.vmem [shape: f32[128,2], index: 15, kind: input, shape index: {}]
  %s16 = inlined_call_operand.vmem [shape: f32[1,2], index: 16, kind: input, shape index: {}]
  %s17 = inlined_call_operand.vmem [shape: f32[32,3], index: 17, kind: input, shape index: {}]
  %s18 = inlined_call_operand.vmem [shape: f32[1,3], index: 18, kind: input, shape index: {}]
  %s19 = inlined_call_operand.hbm [shape: f32[2,8,128], index: 19, kind: output, shape index: {}]
  %s20 = sld [smem:[#allocation0]]
  $region121: #{tpu_custom_call.1} parent=0
    _
  %s22 = ssub.s32 1, %s20
  %s23 = scalar_select 0, %s22, %s20
  $region1: #{tpu_custom_call.1} parent=0
    #allocation2 [shape = 'u8[8192]{0}', space=vmem, size = 0x2000, scoped, tag = 'input window, operand 0']
    #allocation3 [shape = 's32[2]{0}', space=sflag, size = 0x8, scoped, tag = 'scoped memory for tpu_custom_call.1']
    #allocation4 [shape = 's32[2]{0}', space=sflag, size = 0x8, scoped, tag = 'scoped memory for tpu_custom_call.1']
    #allocation5 [shape = 'u8[8192]{0}', space=vmem, size = 0x2000, scoped, tag = 'input window, operand 3, single buffered']
    #allocation6 [shape = 's32[1]{0}', space=sflag, size = 0x4, scoped, tag = 'scoped memory for tpu_custom_call.1']
    #allocation7 [shape = 'u8[8192]{0}', space=vmem, size = 0x2000, scoped, tag = 'input window, operand 6, single buffered']
    #allocation8 [shape = 'u8[8192]{0}', space=vmem, size = 0x2000, scoped, tag = 'output window, operand 0']
    %24 = vsyncpa [#allocation3], 0
    %s25 = scalar_lea.sflag [#allocation3], 1
    %26 = vsyncpa %s25, 0
    %27 = vsyncpa [#allocation6], 0
    %28 = vsyncpa [#allocation4], 0
    %s29 = scalar_lea.sflag [#allocation4], 1
    %30 = vsyncpa %s29, 0
    loop: start=0, step=1, limit=4
    $region2: #{tpu_custom_call.1} parent=1 // loop_pre_header
      _
    $region3: #{tpu_custom_call.1} parent=1 // loop_header
      %s32 = sphi 0, %s36
      %p33 = scmp.ge.s32.totalorder %s32, 4
      %s42 = sphi 0, %s44
      %s45 = sphi 0, %s42
      %s46 = sphi 0, %s45
      %s62 = sphi 0, %s46
      %s68 = sphi 0, %s70
      %s71 = sphi 0, %s68
      %s72 = sphi 0, %s71
      %s88 = sphi 0, %s72
      %s92 = sphi 0, %s92
      %s94 = sphi 0, %s92
      %s95 = sphi 0, %s94
      %s109 = sphi 0, %s95
      %s113 = sphi 0, %s113
      %s115 = sphi 0, %s113
      %s116 = sphi 0, %s115
      %s130 = sphi 0, %s116
      %s134 = sphi 0, %s134
      %s136 = sphi 0, %s134
      %s137 = sphi 0, %s136
      %s151 = sphi 0, %s137
      %s155 = sphi 0, %s155
      %s157 = sphi 0, %s155
      %s158 = sphi 0, %s157
      %s172 = sphi 0, %s158
      %s176 = sphi 0, %s176
      %s178 = sphi 0, %s176
      %s179 = sphi 0, %s178
      %s193 = sphi 0, %s179
      %s197 = sphi 0, %s197
      %s199 = sphi 0, %s197
      %s200 = sphi 0, %s199
      %s214 = sphi 0, %s200
      %s218 = sphi 0, %s218
      %s220 = sphi 0, %s218
      %s221 = sphi 0, %s220
      %s235 = sphi 0, %s221
      %s239 = sphi 0, %s239
      %s241 = sphi 0, %s239
      %s242 = sphi 0, %s241
      %s256 = sphi 0, %s242
      %s260 = sphi 0, %s260
      %s262 = sphi 0, %s260
      %s263 = sphi 0, %s262
      %s277 = sphi 0, %s263
      %s281 = sphi 0, %s281
      %s283 = sphi 0, %s281
      %s284 = sphi 0, %s283
      %s298 = sphi 0, %s284
      %s302 = sphi 0, %s302
      %s304 = sphi 0, %s302
      %s305 = sphi 0, %s304
      %s319 = sphi 0, %s305
      %s323 = sphi 0, %s323
      %s325 = sphi 0, %s323
      %s326 = sphi 0, %s325
      %s340 = sphi 0, %s326
      %s344 = sphi 0, %s344
      %s346 = sphi 0, %s344
      %s347 = sphi 0, %s346
      %s361 = sphi 0, %s347
      %s365 = sphi 0, %s365
      %s367 = sphi 0, %s365
      %s368 = sphi 0, %s367
      %s382 = sphi 0, %s368
      %s386 = sphi 0, %s386
      %s388 = sphi 0, %s386
      %s389 = sphi 0, %s388
      %s403 = sphi 0, %s389
      %s407 = sphi 0, %s407
      %s409 = sphi 0, %s407
      %s410 = sphi 0, %s409
      %s424 = sphi 0, %s410
      %s428 = sphi 0, %s428
      %s430 = sphi 0, %s428
      %s431 = sphi 0, %s430
      %s445 = sphi 0, %s431
      %s451 = sphi 0, %s453
      %s454 = sphi 0, %s451
      %s455 = sphi 0, %s454
      %s471 = sphi 0, %s455
    $region4: #{tpu_custom_call.1} parent=1 // loop_header_branch
      %35 = sbr.rel (%p33) target = $region8
    $region5: #{tpu_custom_call.1} parent=1 // loop_body
      %s37 = ssub.s32 %s32, 1
      %s38 = ssub.s32 %s32, 2
      %s39 = sadd.s32 %s32, 1
      %s40 = ssub.s32 %s32, %s39
      %p41 = scmp.eq.s32.totalorder %s40, 0
      %s43 = sadd.s32 %s42, 1
      %s44 = scalar_select %p41, %s42, %s43
      %p47 = pneg %p41
      %p48 = scmp.eq.s32.totalorder %s32, 1
      %p49 = por %p47, %p48
      %p50 = scmp.ne.s32.totalorder %s42, %s45
      %p51 = scmp.eq.s32.totalorder %s32, 0
      %p52 = por %p50, %p51
      %p53 = scmp.ne.s32.totalorder %s42, %s45
      %p54 = scmp.eq.s32.totalorder %s37, 1
      %p55 = por %p53, %p54
      %p56 = scmp.ne.s32.totalorder %s45, %s46
      %p57 = scmp.eq.s32.totalorder %s37, 0
      %p58 = por %p56, %p57
      %p59 = scmp.ne.s32.totalorder %s45, %s46
      %p60 = scmp.eq.s32.totalorder %s38, 1
      %p61 = por %p59, %p60
      %p63 = scmp.ne.s32.totalorder %s46, %s62
      %p64 = scmp.eq.s32.totalorder %s38, 0
      %p65 = por %p63, %p64
      %s66 = ssub.s32 %s32, %s39
      %p67 = scmp.eq.s32.totalorder %s66, 0
      %s69 = sadd.s32 %s68, 1
      %s70 = scalar_select %p67, %s68, %s69
      %p73 = pneg %p67
      %p74 = scmp.eq.s32.totalorder %s32, 1
      %p75 = por %p73, %p74
      %p76 = scmp.ne.s32.totalorder %s68, %s71
      %p77 = scmp.eq.s32.totalorder %s32, 0
      %p78 = por %p76, %p77
      %p79 = scmp.ne.s32.totalorder %s68, %s71
      %p80 = scmp.eq.s32.totalorder %s37, 1
      %p81 = por %p79, %p80
      %p82 = scmp.ne.s32.totalorder %s71, %s72
      %p83 = scmp.eq.s32.totalorder %s37, 0
      %p84 = por %p82, %p83
      %p85 = scmp.ne.s32.totalorder %s71, %s72
      %p86 = scmp.eq.s32.totalorder %s38, 1
      %p87 = por %p85, %p86
      %p89 = scmp.ne.s32.totalorder %s72, %s88
      %p90 = scmp.eq.s32.totalorder %s38, 0
      %p91 = por %p89, %p90
      %s93 = sadd.s32 %s92, 1
      %p96 = scmp.eq.s32.totalorder %s32, 1
      %p97 = scmp.ne.s32.totalorder %s92, %s94
      %p98 = scmp.eq.s32.totalorder %s32, 0
      %p99 = por %p97, %p98
      %p100 = scmp.ne.s32.totalorder %s92, %s94
      %p101 = scmp.eq.s32.totalorder %s37, 1
      %p102 = por %p100, %p101
      %p103 = scmp.ne.s32.totalorder %s94, %s95
      %p104 = scmp.eq.s32.totalorder %s37, 0
      %p105 = por %p103, %p104
      %p106 = scmp.ne.s32.totalorder %s94, %s95
      %p107 = scmp.eq.s32.totalorder %s38, 1
      %p108 = por %p106, %p107
      %p110 = scmp.ne.s32.totalorder %s95, %s109
      %p111 = scmp.eq.s32.totalorder %s38, 0
      %p112 = por %p110, %p111
      %s114 = sadd.s32 %s113, 1
      %p117 = scmp.eq.s32.totalorder %s32, 1
      %p118 = scmp.ne.s32.totalorder %s113, %s115
      %p119 = scmp.eq.s32.totalorder %s32, 0
      %p120 = por %p118, %p119
      %p121 = scmp.ne.s32.totalorder %s113, %s115
      %p122 = scmp.eq.s32.totalorder %s37, 1
      %p123 = por %p121, %p122
      %p124 = scmp.ne.s32.totalorder %s115, %s116
      %p125 = scmp.eq.s32.totalorder %s37, 0
      %p126 = por %p124, %p125
      %p127 = scmp.ne.s32.totalorder %s115, %s116
      %p128 = scmp.eq.s32.totalorder %s38, 1
      %p129 = por %p127, %p128
      %p131 = scmp.ne.s32.totalorder %s116, %s130
      %p132 = scmp.eq.s32.totalorder %s38, 0
      %p133 = por %p131, %p132
      %s135 = sadd.s32 %s134, 1
      %p138 = scmp.eq.s32.totalorder %s32, 1
      %p139 = scmp.ne.s32.totalorder %s134, %s136
      %p140 = scmp.eq.s32.totalorder %s32, 0
      %p141 = por %p139, %p140
      %p142 = scmp.ne.s32.totalorder %s134, %s136
      %p143 = scmp.eq.s32.totalorder %s37, 1
      %p144 = por %p142, %p143
      %p145 = scmp.ne.s32.totalorder %s136, %s137
      %p146 = scmp.eq.s32.totalorder %s37, 0
      %p147 = por %p145, %p146
      %p148 = scmp.ne.s32.totalorder %s136, %s137
      %p149 = scmp.eq.s32.totalorder %s38, 1
      %p150 = por %p148, %p149
      %p152 = scmp.ne.s32.totalorder %s137, %s151
      %p153 = scmp.eq.s32.totalorder %s38, 0
      %p154 = por %p152, %p153
      %s156 = sadd.s32 %s155, 1
      %p159 = scmp.eq.s32.totalorder %s32, 1
      %p160 = scmp.ne.s32.totalorder %s155, %s157
      %p161 = scmp.eq.s32.totalorder %s32, 0
      %p162 = por %p160, %p161
      %p163 = scmp.ne.s32.totalorder %s155, %s157
      %p164 = scmp.eq.s32.totalorder %s37, 1
      %p165 = por %p163, %p164
      %p166 = scmp.ne.s32.totalorder %s157, %s158
      %p167 = scmp.eq.s32.totalorder %s37, 0
      %p168 = por %p166, %p167
      %p169 = scmp.ne.s32.totalorder %s157, %s158
      %p170 = scmp.eq.s32.totalorder %s38, 1
      %p171 = por %p169, %p170
      %p173 = scmp.ne.s32.totalorder %s158, %s172
      %p174 = scmp.eq.s32.totalorder %s38, 0
      %p175 = por %p173, %p174
      %s177 = sadd.s32 %s176, 1
      %p180 = scmp.eq.s32.totalorder %s32, 1
      %p181 = scmp.ne.s32.totalorder %s176, %s178
      %p182 = scmp.eq.s32.totalorder %s32, 0
      %p183 = por %p181, %p182
      %p184 = scmp.ne.s32.totalorder %s176, %s178
      %p185 = scmp.eq.s32.totalorder %s37, 1
      %p186 = por %p184, %p185
      %p187 = scmp.ne.s32.totalorder %s178, %s179
      %p188 = scmp.eq.s32.totalorder %s37, 0
      %p189 = por %p187, %p188
      %p190 = scmp.ne.s32.totalorder %s178, %s179
      %p191 = scmp.eq.s32.totalorder %s38, 1
      %p192 = por %p190, %p191
      %p194 = scmp.ne.s32.totalorder %s179, %s193
      %p195 = scmp.eq.s32.totalorder %s38, 0
      %p196 = por %p194, %p195
      %s198 = sadd.s32 %s197, 1
      %p201 = scmp.eq.s32.totalorder %s32, 1
      %p202 = scmp.ne.s32.totalorder %s197, %s199
      %p203 = scmp.eq.s32.totalorder %s32, 0
      %p204 = por %p202, %p203
      %p205 = scmp.ne.s32.totalorder %s197, %s199
      %p206 = scmp.eq.s32.totalorder %s37, 1
      %p207 = por %p205, %p206
      %p208 = scmp.ne.s32.totalorder %s199, %s200
      %p209 = scmp.eq.s32.totalorder %s37, 0
      %p210 = por %p208, %p209
      %p211 = scmp.ne.s32.totalorder %s199, %s200
      %p212 = scmp.eq.s32.totalorder %s38, 1
      %p213 = por %p211, %p212
      %p215 = scmp.ne.s32.totalorder %s200, %s214
      %p216 = scmp.eq.s32.totalorder %s38, 0
      %p217 = por %p215, %p216
      %s219 = sadd.s32 %s218, 1
      %p222 = scmp.eq.s32.totalorder %s32, 1
      %p223 = scmp.ne.s32.totalorder %s218, %s220
      %p224 = scmp.eq.s32.totalorder %s32, 0
      %p225 = por %p223, %p224
      %p226 = scmp.ne.s32.totalorder %s218, %s220
      %p227 = scmp.eq.s32.totalorder %s37, 1
      %p228 = por %p226, %p227
      %p229 = scmp.ne.s32.totalorder %s220, %s221
      %p230 = scmp.eq.s32.totalorder %s37, 0
      %p231 = por %p229, %p230
      %p232 = scmp.ne.s32.totalorder %s220, %s221
      %p233 = scmp.eq.s32.totalorder %s38, 1
      %p234 = por %p232, %p233
      %p236 = scmp.ne.s32.totalorder %s221, %s235
      %p237 = scmp.eq.s32.totalorder %s38, 0
      %p238 = por %p236, %p237
      %s240 = sadd.s32 %s239, 1
      %p243 = scmp.eq.s32.totalorder %s32, 1
      %p244 = scmp.ne.s32.totalorder %s239, %s241
      %p245 = scmp.eq.s32.totalorder %s32, 0
      %p246 = por %p244, %p245
      %p247 = scmp.ne.s32.totalorder %s239, %s241
      %p248 = scmp.eq.s32.totalorder %s37, 1
      %p249 = por %p247, %p248
      %p250 = scmp.ne.s32.totalorder %s241, %s242
      %p251 = scmp.eq.s32.totalorder %s37, 0
      %p252 = por %p250, %p251
      %p253 = scmp.ne.s32.totalorder %s241, %s242
      %p254 = scmp.eq.s32.totalorder %s38, 1
      %p255 = por %p253, %p254
      %p257 = scmp.ne.s32.totalorder %s242, %s256
      %p258 = scmp.eq.s32.totalorder %s38, 0
      %p259 = por %p257, %p258
      %s261 = sadd.s32 %s260, 1
      %p264 = scmp.eq.s32.totalorder %s32, 1
      %p265 = scmp.ne.s32.totalorder %s260, %s262
      %p266 = scmp.eq.s32.totalorder %s32, 0
      %p267 = por %p265, %p266
      %p268 = scmp.ne.s32.totalorder %s260, %s262
      %p269 = scmp.eq.s32.totalorder %s37, 1
      %p270 = por %p268, %p269
      %p271 = scmp.ne.s32.totalorder %s262, %s263
      %p272 = scmp.eq.s32.totalorder %s37, 0
      %p273 = por %p271, %p272
      %p274 = scmp.ne.s32.totalorder %s262, %s263
      %p275 = scmp.eq.s32.totalorder %s38, 1
      %p276 = por %p274, %p275
      %p278 = scmp.ne.s32.totalorder %s263, %s277
      %p279 = scmp.eq.s32.totalorder %s38, 0
      %p280 = por %p278, %p279
      %s282 = sadd.s32 %s281, 1
      %p285 = scmp.eq.s32.totalorder %s32, 1
      %p286 = scmp.ne.s32.totalorder %s281, %s283
      %p287 = scmp.eq.s32.totalorder %s32, 0
      %p288 = por %p286, %p287
      %p289 = scmp.ne.s32.totalorder %s281, %s283
      %p290 = scmp.eq.s32.totalorder %s37, 1
      %p291 = por %p289, %p290
      %p292 = scmp.ne.s32.totalorder %s283, %s284
      %p293 = scmp.eq.s32.totalorder %s37, 0
      %p294 = por %p292, %p293
      %p295 = scmp.ne.s32.totalorder %s283, %s284
      %p296 = scmp.eq.s32.totalorder %s38, 1
      %p297 = por %p295, %p296
      %p299 = scmp.ne.s32.totalorder %s284, %s298
      %p300 = scmp.eq.s32.totalorder %s38, 0
      %p301 = por %p299, %p300
      %s303 = sadd.s32 %s302, 1
      %p306 = scmp.eq.s32.totalorder %s32, 1
      %p307 = scmp.ne.s32.totalorder %s302, %s304
      %p308 = scmp.eq.s32.totalorder %s32, 0
      %p309 = por %p307, %p308
      %p310 = scmp.ne.s32.totalorder %s302, %s304
      %p311 = scmp.eq.s32.totalorder %s37, 1
      %p312 = por %p310, %p311
      %p313 = scmp.ne.s32.totalorder %s304, %s305
      %p314 = scmp.eq.s32.totalorder %s37, 0
      %p315 = por %p313, %p314
      %p316 = scmp.ne.s32.totalorder %s304, %s305
      %p317 = scmp.eq.s32.totalorder %s38, 1
      %p318 = por %p316, %p317
      %p320 = scmp.ne.s32.totalorder %s305, %s319
      %p321 = scmp.eq.s32.totalorder %s38, 0
      %p322 = por %p320, %p321
      %s324 = sadd.s32 %s323, 1
      %p327 = scmp.eq.s32.totalorder %s32, 1
      %p328 = scmp.ne.s32.totalorder %s323, %s325
      %p329 = scmp.eq.s32.totalorder %s32, 0
      %p330 = por %p328, %p329
      %p331 = scmp.ne.s32.totalorder %s323, %s325
      %p332 = scmp.eq.s32.totalorder %s37, 1
      %p333 = por %p331, %p332
      %p334 = scmp.ne.s32.totalorder %s325, %s326
      %p335 = scmp.eq.s32.totalorder %s37, 0
      %p336 = por %p334, %p335
      %p337 = scmp.ne.s32.totalorder %s325, %s326
      %p338 = scmp.eq.s32.totalorder %s38, 1
      %p339 = por %p337, %p338
      %p341 = scmp.ne.s32.totalorder %s326, %s340
      %p342 = scmp.eq.s32.totalorder %s38, 0
      %p343 = por %p341, %p342
      %s345 = sadd.s32 %s344, 1
      %p348 = scmp.eq.s32.totalorder %s32, 1
      %p349 = scmp.ne.s32.totalorder %s344, %s346
      %p350 = scmp.eq.s32.totalorder %s32, 0
      %p351 = por %p349, %p350
      %p352 = scmp.ne.s32.totalorder %s344, %s346
      %p353 = scmp.eq.s32.totalorder %s37, 1
      %p354 = por %p352, %p353
      %p355 = scmp.ne.s32.totalorder %s346, %s347
      %p356 = scmp.eq.s32.totalorder %s37, 0
      %p357 = por %p355, %p356
      %p358 = scmp.ne.s32.totalorder %s346, %s347
      %p359 = scmp.eq.s32.totalorder %s38, 1
      %p360 = por %p358, %p359
      %p362 = scmp.ne.s32.totalorder %s347, %s361
      %p363 = scmp.eq.s32.totalorder %s38, 0
      %p364 = por %p362, %p363
      %s366 = sadd.s32 %s365, 1
      %p369 = scmp.eq.s32.totalorder %s32, 1
      %p370 = scmp.ne.s32.totalorder %s365, %s367
      %p371 = scmp.eq.s32.totalorder %s32, 0
      %p372 = por %p370, %p371
      %p373 = scmp.ne.s32.totalorder %s365, %s367
      %p374 = scmp.eq.s32.totalorder %s37, 1
      %p375 = por %p373, %p374
      %p376 = scmp.ne.s32.totalorder %s367, %s368
      %p377 = scmp.eq.s32.totalorder %s37, 0
      %p378 = por %p376, %p377
      %p379 = scmp.ne.s32.totalorder %s367, %s368
      %p380 = scmp.eq.s32.totalorder %s38, 1
      %p381 = por %p379, %p380
      %p383 = scmp.ne.s32.totalorder %s368, %s382
      %p384 = scmp.eq.s32.totalorder %s38, 0
      %p385 = por %p383, %p384
      %s387 = sadd.s32 %s386, 1
      %p390 = scmp.eq.s32.totalorder %s32, 1
      %p391 = scmp.ne.s32.totalorder %s386, %s388
      %p392 = scmp.eq.s32.totalorder %s32, 0
      %p393 = por %p391, %p392
      %p394 = scmp.ne.s32.totalorder %s386, %s388
      %p395 = scmp.eq.s32.totalorder %s37, 1
      %p396 = por %p394, %p395
      %p397 = scmp.ne.s32.totalorder %s388, %s389
      %p398 = scmp.eq.s32.totalorder %s37, 0
      %p399 = por %p397, %p398
      %p400 = scmp.ne.s32.totalorder %s388, %s389
      %p401 = scmp.eq.s32.totalorder %s38, 1
      %p402 = por %p400, %p401
      %p404 = scmp.ne.s32.totalorder %s389, %s403
      %p405 = scmp.eq.s32.totalorder %s38, 0
      %p406 = por %p404, %p405
      %s408 = sadd.s32 %s407, 1
      %p411 = scmp.eq.s32.totalorder %s32, 1
      %p412 = scmp.ne.s32.totalorder %s407, %s409
      %p413 = scmp.eq.s32.totalorder %s32, 0
      %p414 = por %p412, %p413
      %p415 = scmp.ne.s32.totalorder %s407, %s409
      %p416 = scmp.eq.s32.totalorder %s37, 1
      %p417 = por %p415, %p416
      %p418 = scmp.ne.s32.totalorder %s409, %s410
      %p419 = scmp.eq.s32.totalorder %s37, 0
      %p420 = por %p418, %p419
      %p421 = scmp.ne.s32.totalorder %s409, %s410
      %p422 = scmp.eq.s32.totalorder %s38, 1
      %p423 = por %p421, %p422
      %p425 = scmp.ne.s32.totalorder %s410, %s424
      %p426 = scmp.eq.s32.totalorder %s38, 0
      %p427 = por %p425, %p426
      %s429 = sadd.s32 %s428, 1
      %p432 = scmp.eq.s32.totalorder %s32, 1
      %p433 = scmp.ne.s32.totalorder %s428, %s430
      %p434 = scmp.eq.s32.totalorder %s32, 0
      %p435 = por %p433, %p434
      %p436 = scmp.ne.s32.totalorder %s428, %s430
      %p437 = scmp.eq.s32.totalorder %s37, 1
      %p438 = por %p436, %p437
      %p439 = scmp.ne.s32.totalorder %s430, %s431
      %p440 = scmp.eq.s32.totalorder %s37, 0
      %p441 = por %p439, %p440
      %p442 = scmp.ne.s32.totalorder %s430, %s431
      %p443 = scmp.eq.s32.totalorder %s38, 1
      %p444 = por %p442, %p443
      %p446 = scmp.ne.s32.totalorder %s431, %s445
      %p447 = scmp.eq.s32.totalorder %s38, 0
      %p448 = por %p446, %p447
      %s449 = ssub.s32 %s32, %s39
      %p450 = scmp.eq.s32.totalorder %s449, 0
      %s452 = sadd.s32 %s451, 1
      %s453 = scalar_select %p450, %s451, %s452
      %p456 = pneg %p450
      %p457 = scmp.eq.s32.totalorder %s32, 1
      %p458 = por %p456, %p457
      %p459 = scmp.ne.s32.totalorder %s451, %s454
      %p460 = scmp.eq.s32.totalorder %s32, 0
      %p461 = por %p459, %p460
      %p462 = scmp.ne.s32.totalorder %s451, %s454
      %p463 = scmp.eq.s32.totalorder %s37, 1
      %p464 = por %p462, %p463
      %p465 = scmp.ne.s32.totalorder %s454, %s455
      %p466 = scmp.eq.s32.totalorder %s37, 0
      %p467 = por %p465, %p466
      %p468 = scmp.ne.s32.totalorder %s454, %s455
      %p469 = scmp.eq.s32.totalorder %s38, 1
      %p470 = por %p468, %p469
      %p472 = scmp.ne.s32.totalorder %s455, %s471
      %p473 = scmp.eq.s32.totalorder %s38, 0
      %p474 = por %p472, %p473
      %p475 = scmp.le.s32.totalorder 1, %s32
      %p476 = scmp.lt.s32.totalorder %s32, 3
      %p477 = pnand %p475, %p476
      %p478 = pneg %p477
      // Predicated region
      $region9: #{tpu_custom_call.1} parent=5 // pred_check
        _
      $region10: #{tpu_custom_call.1} parent=5 // pred_check_branch
        %480 = sbr.rel (%p477) target = $region12
      $region11: #{tpu_custom_call.1} parent=5 // pred_region
        %s481 = ssub.s32 %s32, 1
        // Predicated region
        $region13: #{tpu_custom_call.1} parent=11 // pred_check
          %p482 = pneg %p105
        $region14: #{tpu_custom_call.1} parent=11 // pred_check_branch
          %484 = sbr.rel (%p482) target = $region16
        $region15: #{tpu_custom_call.1} parent=11 // pred_region
          _
        $region16: #{tpu_custom_call.1} parent=11 // pred_fallthru
          _
        // Predicated region
        $region17: #{tpu_custom_call.1} parent=11 // pred_check
          %p485 = pneg %p126
        $region18: #{tpu_custom_call.1} parent=11 // pred_check_branch
          %487 = sbr.rel (%p485) target = $region20
        $region19: #{tpu_custom_call.1} parent=11 // pred_region
          %s489 = ssub.s32 256, 256
          %490 = vsyncadd [#allocation6], %s489
          %s491 = sshll.u32 [#allocation5], 4
          %s492 = int_to_ptr.vmem [resolvable:$true] %s491
          %497 = dma.hbm_to_vmem [thread:$0]  %s3, 256, %s492, [#allocation6], 128, 128, 8
        $region20: #{tpu_custom_call.1} parent=11 // pred_fallthru
          _
        // Predicated region
        $region21: #{tpu_custom_call.1} parent=11 // pred_check
          %p498 = pneg %p147
        $region22: #{tpu_custom_call.1} parent=11 // pred_check_branch
          %500 = sbr.rel (%p498) target = $region24
        $region23: #{tpu_custom_call.1} parent=11 // pred_region
          _
        $region24: #{tpu_custom_call.1} parent=11 // pred_fallthru
          _
        // Predicated region
        $region25: #{tpu_custom_call.1} parent=11 // pred_check
          %p501 = pneg %p168
        $region26: #{tpu_custom_call.1} parent=11 // pred_check_branch
          %503 = sbr.rel (%p501) target = $region28
        $region27: #{tpu_custom_call.1} parent=11 // pred_region
          _
        $region28: #{tpu_custom_call.1} parent=11 // pred_fallthru
          _
        // Predicated region
        $region29: #{tpu_custom_call.1} parent=11 // pred_check
          %p504 = pneg %p189
        $region30: #{tpu_custom_call.1} parent=11 // pred_check_branch
          %506 = sbr.rel (%p504) target = $region32
        $region31: #{tpu_custom_call.1} parent=11 // pred_region
          %s508 = ssub.s32 256, 256
          %509 = vsyncadd [#allocation6], %s508
          %s510 = sshll.u32 [#allocation7], 4
          %s511 = int_to_ptr.vmem [resolvable:$true] %s510
          %516 = dma.hbm_to_vmem [thread:$0]  %s6, 256, %s511, [#allocation6], 128, 128, 8
        $region32: #{tpu_custom_call.1} parent=11 // pred_fallthru
          _
        // Predicated region
        $region33: #{tpu_custom_call.1} parent=11 // pred_check
          %p517 = pneg %p210
        $region34: #{tpu_custom_call.1} parent=11 // pred_check_branch
          %519 = sbr.rel (%p517) target = $region36
        $region35: #{tpu_custom_call.1} parent=11 // pred_region
          _
        $region36: #{tpu_custom_call.1} parent=11 // pred_fallthru
          _
        // Predicated region
        $region37: #{tpu_custom_call.1} parent=11 // pred_check
          %p520 = pneg %p231
        $region38: #{tpu_custom_call.1} parent=11 // pred_check_branch
          %522 = sbr.rel (%p520) target = $region40
        $region39: #{tpu_custom_call.1} parent=11 // pred_region
          _
        $region40: #{tpu_custom_call.1} parent=11 // pred_fallthru
          _
        // Predicated region
        $region41: #{tpu_custom_call.1} parent=11 // pred_check
          %p523 = pneg %p252
        $region42: #{tpu_custom_call.1} parent=11 // pred_check_branch
          %525 = sbr.rel (%p523) target = $region44
        $region43: #{tpu_custom_call.1} parent=11 // pred_region
          _
        $region44: #{tpu_custom_call.1} parent=11 // pred_fallthru
          _
        // Predicated region
        $region45: #{tpu_custom_call.1} parent=11 // pred_check
          %p526 = pneg %p273
        $region46: #{tpu_custom_call.1} parent=11 // pred_check_branch
          %528 = sbr.rel (%p526) target = $region48
        $region47: #{tpu_custom_call.1} parent=11 // pred_region
          _
        $region48: #{tpu_custom_call.1} parent=11 // pred_fallthru
          _
        // Predicated region
        $region49: #{tpu_custom_call.1} parent=11 // pred_check
          %p529 = pneg %p294
        $region50: #{tpu_custom_call.1} parent=11 // pred_check_branch
          %531 = sbr.rel (%p529) target = $region52
        $region51: #{tpu_custom_call.1} parent=11 // pred_region
          _
        $region52: #{tpu_custom_call.1} parent=11 // pred_fallthru
          _
        // Predicated region
        $region53: #{tpu_custom_call.1} parent=11 // pred_check
          %p532 = pneg %p315
        $region54: #{tpu_custom_call.1} parent=11 // pred_check_branch
          %534 = sbr.rel (%p532) target = $region56
        $region55: #{tpu_custom_call.1} parent=11 // pred_region
          _
        $region56: #{tpu_custom_call.1} parent=11 // pred_fallthru
          _
        // Predicated region
        $region57: #{tpu_custom_call.1} parent=11 // pred_check
          %p535 = pneg %p336
        $region58: #{tpu_custom_call.1} parent=11 // pred_check_branch
          %537 = sbr.rel (%p535) target = $region60
        $region59: #{tpu_custom_call.1} parent=11 // pred_region
          _
        $region60: #{tpu_custom_call.1} parent=11 // pred_fallthru
          _
        // Predicated region
        $region61: #{tpu_custom_call.1} parent=11 // pred_check
          %p538 = pneg %p357
        $region62: #{tpu_custom_call.1} parent=11 // pred_check_branch
          %540 = sbr.rel (%p538) target = $region64
        $region63: #{tpu_custom_call.1} parent=11 // pred_region
          _
        $region64: #{tpu_custom_call.1} parent=11 // pred_fallthru
          _
        // Predicated region
        $region65: #{tpu_custom_call.1} parent=11 // pred_check
          %p541 = pneg %p378
        $region66: #{tpu_custom_call.1} parent=11 // pred_check_branch
          %543 = sbr.rel (%p541) target = $region68
        $region67: #{tpu_custom_call.1} parent=11 // pred_region
          _
        $region68: #{tpu_custom_call.1} parent=11 // pred_fallthru
          _
        // Predicated region
        $region69: #{tpu_custom_call.1} parent=11 // pred_check
          %p544 = pneg %p399
        $region70: #{tpu_custom_call.1} parent=11 // pred_check_branch
          %546 = sbr.rel (%p544) target = $region72
        $region71: #{tpu_custom_call.1} parent=11 // pred_region
          _
        $region72: #{tpu_custom_call.1} parent=11 // pred_fallthru
          _
        // Predicated region
        $region73: #{tpu_custom_call.1} parent=11 // pred_check
          %p547 = pneg %p420
        $region74: #{tpu_custom_call.1} parent=11 // pred_check_branch
          %549 = sbr.rel (%p547) target = $region76
        $region75: #{tpu_custom_call.1} parent=11 // pred_region
          _
        $region76: #{tpu_custom_call.1} parent=11 // pred_fallthru
          _
        // Predicated region
        $region77: #{tpu_custom_call.1} parent=11 // pred_check
          %p550 = pneg %p441
        $region78: #{tpu_custom_call.1} parent=11 // pred_check_branch
          %552 = sbr.rel (%p550) target = $region80
        $region79: #{tpu_custom_call.1} parent=11 // pred_region
          _
        $region80: #{tpu_custom_call.1} parent=11 // pred_fallthru
          _
      $region12: #{tpu_custom_call.1} parent=5 // pred_fallthru
        _
      %p553 = scmp.lt.s32.totalorder %s32, 2
      // Predicated region
      $region81: #{tpu_custom_call.1} parent=5 // pred_check
        %p554 = pneg %p553
      $region82: #{tpu_custom_call.1} parent=5 // pred_check_branch
        %556 = sbr.rel (%p554) target = $region84
      $region83: #{tpu_custom_call.1} parent=5 // pred_region
        // Predicated region
        $region85: #{tpu_custom_call.1} parent=83 // pred_check
          %p557 = pneg %p52
        $region86: #{tpu_custom_call.1} parent=83 // pred_check_branch
          %559 = sbr.rel (%p557) target = $region88
        $region87: #{tpu_custom_call.1} parent=83 // pred_region
          %s560 = sand.u32 %s42, 1
          %s561 = scalar_lea.sflag [#allocation3], %s560
          %s562 = sand.u32 %s42, 1
          %s563 = smul.addr %s562, 8
          %s564 = scalar_lea.vmem [#allocation2], %s563
          %s566 = ssub.s32 128, 128
          %567 = vsyncadd %s561, %s566
          %s568 = smul.addr %s32, 128
          %s569 = scalar_lea.hbm %s0, %s568
          %s571 = sshll.u32 %s564, 4
          %s572 = int_to_ptr.vmem [resolvable:$true] %s571
          %574 = dma.hbm_to_vmem [thread:$0]  %s569, 128, %s572, %s561
        $region88: #{tpu_custom_call.1} parent=83 // pred_fallthru
          _
        // Predicated region
        $region89: #{tpu_custom_call.1} parent=83 // pred_check
          %p575 = pneg %p78
        $region90: #{tpu_custom_call.1} parent=83 // pred_check_branch
          %577 = sbr.rel (%p575) target = $region92
        $region91: #{tpu_custom_call.1} parent=83 // pred_region
          %p578 = scmp.lt.s32.totalorder %s32, 1
          %s579 = scalar_select %p578, %s32, 1
          %s580 = smul.addr %s579, 8
          %s581 = scalar_lea.vmem %s1, %s580
        $region92: #{tpu_custom_call.1} parent=83 // pred_fallthru
          _
      $region84: #{tpu_custom_call.1} parent=5 // pred_fallthru
        _
      %p582 = scmp.le.s32.totalorder 1, %s32
      %p583 = scmp.lt.s32.totalorder %s32, 3
      %p584 = pnand %p582, %p583
      %p585 = pneg %p584
      // Predicated region
      $region93: #{tpu_custom_call.1} parent=5 // pred_check
        _
      $region94: #{tpu_custom_call.1} parent=5 // pred_check_branch
        %587 = sbr.rel (%p584) target = $region96
      $region95: #{tpu_custom_call.1} parent=5 // pred_region
        %s588 = ssub.s32 %s32, 1
        %s589 = sand.u32 %s45, 1
        %s590 = scalar_lea.sflag [#allocation3], %s589
        %s591 = sand.u32 %s45, 1
        %s592 = smul.addr %s591, 8
        %s593 = scalar_lea.vmem [#allocation2], %s592
        // Predicated region
        $region97: #{tpu_custom_call.1} parent=95 // pred_check
          %p594 = pneg %p58
        $region98: #{tpu_custom_call.1} parent=95 // pred_check_branch
          %596 = sbr.rel (%p594) target = $region100
        $region99: #{tpu_custom_call.1} parent=95 // pred_region
          %597 = dma.done %s590, 128
        $region100: #{tpu_custom_call.1} parent=95 // pred_fallthru
          _
        // Predicated region
        $region101: #{tpu_custom_call.1} parent=95 // pred_check
          %p598 = pneg %p126
        $region102: #{tpu_custom_call.1} parent=95 // pred_check_branch
          %600 = sbr.rel (%p598) target = $region104
        $region103: #{tpu_custom_call.1} parent=95 // pred_region
          %601 = dma.done [#allocation6], 256
        $region104: #{tpu_custom_call.1} parent=95 // pred_fallthru
          _
        // Predicated region
        $region105: #{tpu_custom_call.1} parent=95 // pred_check
          %p602 = pneg %p189
        $region106: #{tpu_custom_call.1} parent=95 // pred_check_branch
          %604 = sbr.rel (%p602) target = $region108
        $region107: #{tpu_custom_call.1} parent=95 // pred_region
          %605 = dma.done [#allocation6], 256
        $region108: #{tpu_custom_call.1} parent=95 // pred_fallthru
          _
        %s606 = sand.u32 %s45, 1
        %s607 = scalar_lea.sflag [#allocation3], %s606
        %s608 = sand.u32 %s45, 1
        %s609 = smul.addr %s608, 8
        %s610 = scalar_lea.vmem [#allocation2], %s609
        %p611 = pneg %p58
        %p612 = pneg %p55
        %p613 = scmp.lt.s32.totalorder %s37, 1
        %s614 = scalar_select %p613, %s37, 1
        %s615 = smul.addr %s614, 8
        %s616 = scalar_lea.vmem %s1, %s615
        %p617 = pneg %p84
        %p618 = pneg %p81
        %p619 = pneg %p105
        %p620 = pneg %p102
        %p621 = pneg %p126
        %p622 = pneg %p123
        %p623 = pneg %p147
        %p624 = pneg %p144
        %p625 = pneg %p168
        %p626 = pneg %p165
        %p627 = pneg %p189
        %p628 = pneg %p186
        %p629 = pneg %p210
        %p630 = pneg %p207
        %p631 = pneg %p231
        %p632 = pneg %p228
        %p633 = pneg %p252
        %p634 = pneg %p249
        %p635 = pneg %p273
        %p636 = pneg %p270
        %p637 = pneg %p294
        %p638 = pneg %p291
        %p639 = pneg %p315
        %p640 = pneg %p312
        %p641 = pneg %p336
        %p642 = pneg %p333
        %p643 = pneg %p357
        %p644 = pneg %p354
        %p645 = pneg %p378
        %p646 = pneg %p375
        %p647 = pneg %p399
        %p648 = pneg %p396
        %p649 = pneg %p420
        %p650 = pneg %p417
        %p651 = pneg %p441
        %p652 = pneg %p438
        %p653 = pneg %p467
        %p654 = pneg %p464
        %s655 = sand.u32 %s454, 1
        %s656 = scalar_lea.sflag [#allocation4], %s655
        %s657 = sand.u32 %s454, 1
        %s658 = smul.addr %s657, 8
        %s659 = scalar_lea.vmem [#allocation8], %s658
        %p660 = scmp.lt.s32.totalorder %s37, 1
        %s661 = scalar_select %p660, %s37, 1
        %s662 = smul.addr %s661, 8
        %s663 = scalar_lea.vmem %s1, %s662
        %v664 = vld [vmem:[%s593] sm:$0xff]
        %v665 = vld [vmem:[%s663] sm:$0xff]
        %v666 = vld [vmem:[%s2] sm:$0xff]
        %v667 = vld [vmem:[%s2 + $0x8] sm:$0xff]
        %v668 = vld [vmem:[%s2 + $0x10] sm:$0xff]
        %v669 = vld [vmem:[%s2 + $0x18] sm:$0xff]
        %v670 = vld [vmem:[%s4] sm:$0x1]
        %v672 = vlaneseq
        %v673 = vshrl.u32 %v672, 7
        %v674 = vsub.s32 0, %v673
        %v675 = vrot.slane %v670, %v674
        %vm677 = vcmask 261120
        %v679 = vsel %vm677, %v664, 0
        %681 = vmatprep.subr.mxu0 0.0
        %682 = vmatpush1.msra.mxu0 %v666
        %683 = vmatprep.subr.mxu0 0.0
        %684 = vmatpush1.msra.mxu0 %v667
        %685 = vmatprep.subr.mxu0 0.0
        %686 = vmatpush1.msra.mxu0 %v668
        %687 = vmatprep.subr.mxu0 0.0
        %688 = vmatpush1.msra.mxu0 %v669
        %689 = vmatprep.subr.mxu0 0.0
        %690 = vmatpush1.msra.mxu0 0.0
        %691 = vmatprep.subr.mxu0 0.0
        %692 = vmatpush1.msra.mxu0 0.0
        %693 = vmatprep.subr.mxu0 0.0
        %694 = vmatpush1.msra.mxu0 0.0
        %695 = vmatprep.subr.mxu0 0.0
        %696 = vmatpush1.msra.mxu0 0.0
        %697 = vmatprep.subr.mxu0 0.0
        %698 = vmatpush1.msra.mxu0 0.0
        %699 = vmatprep.subr.mxu0 0.0
        %700 = vmatpush1.msra.mxu0 0.0
        %701 = vmatprep.subr.mxu0 0.0
        %702 = vmatpush1.msra.mxu0 0.0
        %703 = vmatprep.subr.mxu0 0.0
        %704 = vmatpush1.msra.mxu0 0.0
        %705 = vmatprep.subr.mxu0 0.0
        %706 = vmatpush1.msra.mxu0 0.0
        %707 = vmatprep.subr.mxu0 0.0
        %708 = vmatpush1.msra.mxu0 0.0
        %709 = vmatprep.subr.mxu0 0.0
        %710 = vmatpush1.msra.mxu0 0.0
        %711 = vmatprep.subr.mxu0 0.0
        %712 = vmatpush1.msra.mxu0 0.0
        %713 = vmatprep.subr.mxu0 0.0
        %714 = vmatpush1.msra.mxu0 0.0
        %715 = vmatprep.subr.mxu0 0.0
        %716 = vmatpush1.msra.mxu0 0.0
        %717 = vmatprep.subr.mxu0 0.0
        %718 = vmatpush1.msra.mxu0 0.0
        %719 = vmatprep.subr.mxu0 0.0
        %720 = vmatpush1.msra.mxu0 0.0
        %721 = vmatprep.subr.mxu0 0.0
        %722 = vmatpush1.msra.mxu0 0.0
        %723 = vmatprep.subr.mxu0 0.0
        %724 = vmatpush1.msra.mxu0 0.0
        %725 = vmatprep.subr.mxu0 0.0
        %726 = vmatpush1.msra.mxu0 0.0
        %727 = vmatprep.subr.mxu0 0.0
        %728 = vmatpush1.msra.mxu0 0.0
        %729 = vmatprep.subr.mxu0 0.0
        %730 = vmatpush1.msra.mxu0 0.0
        %731 = vmatprep.subr.mxu0 0.0
        %732 = vmatpush1.msra.mxu0 0.0
        %733 = vmatprep.subr.mxu0 0.0
        %734 = vmatpush1.msra.mxu0 0.0
        %735 = vmatprep.subr.mxu0 0.0
        %736 = vmatpush1.msra.mxu0 0.0
        %737 = vmatprep.subr.mxu0 0.0
        %738 = vmatpush1.msra.mxu0 0.0
        %739 = vmatprep.subr.mxu0 0.0
        %740 = vmatpush1.msra.mxu0 0.0
        %741 = vmatprep.subr.mxu0 0.0
        %742 = vmatpush1.msra.mxu0 0.0
        %743 = vmatprep.subr.mxu0 0.0
        %744 = vmatpush1.msra.mxu0 0.0
        %745 = vmatprep.mubr.f32.mxu0 0.0
        %746 = vmatmul.mubr.f32.gmra.mrb[0].mxu0 %v679
        %v747 = vpop.f32.mrb[0].mxu0
        %v748 = vadd.f32 %v675, %v747
        %v749 = vpop.f32.mrb[0].mxu0
        %750 = vdwg.mxu0
        %v751 = vld [vmem:[%s5] sm:$0xff]
        %v752 = vld [vmem:[%s5 + $0x8] sm:$0xff]
        %v753 = vld [vmem:[%s5 + $0x10] sm:$0xff]
        %v754 = vld [vmem:[%s5 + $0x18] sm:$0xff]
        %v755 = vld [vmem:[%s7] sm:$0x1]
        %v757 = vlaneseq
        %v758 = vshrl.u32 %v757, 7
        %v759 = vsub.s32 0, %v758
        %v760 = vrot.slane %v755, %v759
        %762 = vmatprep.subr.mxu0 0.0
        %763 = vmatpush1.msra.mxu0 %v751
        %764 = vmatprep.subr.mxu0 0.0
        %765 = vmatpush1.msra.mxu0 %v752
        %766 = vmatprep.subr.mxu0 0.0
        %767 = vmatpush1.msra.mxu0 %v753
        %768 = vmatprep.subr.mxu0 0.0
        %769 = vmatpush1.msra.mxu0 %v754
        %770 = vmatprep.subr.mxu0 0.0
        %771 = vmatpush1.msra.mxu0 0.0
        %772 = vmatprep.subr.mxu0 0.0
        %773 = vmatpush1.msra.mxu0 0.0
        %774 = vmatprep.subr.mxu0 0.0
        %775 = vmatpush1.msra.mxu0 0.0
        %776 = vmatprep.subr.mxu0 0.0
        %777 = vmatpush1.msra.mxu0 0.0
        %778 = vmatprep.subr.mxu0 0.0
        %779 = vmatpush1.msra.mxu0 0.0
        %780 = vmatprep.subr.mxu0 0.0
        %781 = vmatpush1.msra.mxu0 0.0
        %782 = vmatprep.subr.mxu0 0.0
        %783 = vmatpush1.msra.mxu0 0.0
        %784 = vmatprep.subr.mxu0 0.0
        %785 = vmatpush1.msra.mxu0 0.0
        %786 = vmatprep.subr.mxu0 0.0
        %787 = vmatpush1.msra.mxu0 0.0
        %788 = vmatprep.subr.mxu0 0.0
        %789 = vmatpush1.msra.mxu0 0.0
        %790 = vmatprep.subr.mxu0 0.0
        %791 = vmatpush1.msra.mxu0 0.0
        %792 = vmatprep.subr.mxu0 0.0
        %793 = vmatpush1.msra.mxu0 0.0
        %794 = vmatprep.subr.mxu0 0.0
        %795 = vmatpush1.msra.mxu0 0.0
        %796 = vmatprep.subr.mxu0 0.0
        %797 = vmatpush1.msra.mxu0 0.0
        %798 = vmatprep.subr.mxu0 0.0
        %799 = vmatpush1.msra.mxu0 0.0
        %800 = vmatprep.subr.mxu0 0.0
        %801 = vmatpush1.msra.mxu0 0.0
        %802 = vmatprep.subr.mxu0 0.0
        %803 = vmatpush1.msra.mxu0 0.0
        %804 = vmatprep.subr.mxu0 0.0
        %805 = vmatpush1.msra.mxu0 0.0
        %806 = vmatprep.subr.mxu0 0.0
        %807 = vmatpush1.msra.mxu0 0.0
        %808 = vmatprep.subr.mxu0 0.0
        %809 = vmatpush1.msra.mxu0 0.0
        %810 = vmatprep.subr.mxu0 0.0
        %811 = vmatpush1.msra.mxu0 0.0
        %812 = vmatprep.subr.mxu0 0.0
        %813 = vmatpush1.msra.mxu0 0.0
        %814 = vmatprep.subr.mxu0 0.0
        %815 = vmatpush1.msra.mxu0 0.0
        %816 = vmatprep.subr.mxu0 0.0
        %817 = vmatpush1.msra.mxu0 0.0
        %818 = vmatprep.subr.mxu0 0.0
        %819 = vmatpush1.msra.mxu0 0.0
        %820 = vmatprep.subr.mxu0 0.0
        %821 = vmatpush1.msra.mxu0 0.0
        %822 = vmatprep.subr.mxu0 0.0
        %823 = vmatpush1.msra.mxu0 0.0
        %824 = vmatprep.subr.mxu0 0.0
        %825 = vmatpush1.msra.mxu0 0.0
        %826 = vmatprep.mubr.f32.mxu0 0.0
        %827 = vmatmul.mubr.f32.gmra.mrb[0].mxu0 %v679
        %v828 = vpop.f32.mrb[0].mxu0
        %v829 = vadd.f32 %v760, %v828
        %v830 = vpop.f32.mrb[0].mxu0
        %831 = vdwg.mxu0
        %v832 = vld [vmem:[#allocation5] sm:$0xff]
        %v833 = vld [vmem:[#allocation5 + $0x8] sm:$0xff]
        %v834 = vld [vmem:[#allocation7] sm:$0xff]
        %v835 = vld [vmem:[#allocation7 + $0x8] sm:$0xff]
        %vm836 = vcmask 130048
        %v838 = vsel %vm836, 0.0, 0
        %840 = vmatprep.subr.mxu0 0.0
        %841 = vmatpush1.msra.mxu0 %v832
        %842 = vmatprep.subr.mxu0 0.0
        %843 = vmatpush1.msra.mxu0 %v833
        %844 = vmatprep.subr.mxu0 0.0
        %845 = vmatpush1.msra.mxu0 0.0
        %846 = vmatprep.subr.mxu0 0.0
        %847 = vmatpush1.msra.mxu0 0.0
        %848 = vmatprep.subr.mxu0 0.0
        %849 = vmatpush1.msra.mxu0 0.0
        %850 = vmatprep.subr.mxu0 0.0
        %851 = vmatpush1.msra.mxu0 0.0
        %852 = vmatprep.subr.mxu0 0.0
        %853 = vmatpush1.msra.mxu0 0.0
        %854 = vmatprep.subr.mxu0 0.0
        %855 = vmatpush1.msra.mxu0 0.0
        %856 = vmatprep.subr.mxu0 0.0
        %857 = vmatpush1.msra.mxu0 0.0
        %858 = vmatprep.subr.mxu0 0.0
        %859 = vmatpush1.msra.mxu0 0.0
        %860 = vmatprep.subr.mxu0 0.0
        %861 = vmatpush1.msra.mxu0 0.0
        %862 = vmatprep.subr.mxu0 0.0
        %863 = vmatpush1.msra.mxu0 0.0
        %864 = vmatprep.subr.mxu0 0.0
        %865 = vmatpush1.msra.mxu0 0.0
        %866 = vmatprep.subr.mxu0 0.0
        %867 = vmatpush1.msra.mxu0 0.0
        %868 = vmatprep.subr.mxu0 0.0
        %869 = vmatpush1.msra.mxu0 0.0
        %870 = vmatprep.subr.mxu0 0.0
        %871 = vmatpush1.msra.mxu0 0.0
        %872 = vmatprep.subr.mxu0 0.0
        %873 = vmatpush1.msra.mxu0 0.0
        %874 = vmatprep.subr.mxu0 0.0
        %875 = vmatpush1.msra.mxu0 0.0
        %876 = vmatprep.subr.mxu0 0.0
        %877 = vmatpush1.msra.mxu0 0.0
        %878 = vmatprep.subr.mxu0 0.0
        %879 = vmatpush1.msra.mxu0 0.0
        %880 = vmatprep.subr.mxu0 0.0
        %881 = vmatpush1.msra.mxu0 0.0
        %882 = vmatprep.subr.mxu0 0.0
        %883 = vmatpush1.msra.mxu0 0.0
        %884 = vmatprep.subr.mxu0 0.0
        %885 = vmatpush1.msra.mxu0 0.0
        %886 = vmatprep.subr.mxu0 0.0
        %887 = vmatpush1.msra.mxu0 0.0
        %888 = vmatprep.subr.mxu0 0.0
        %889 = vmatpush1.msra.mxu0 0.0
        %890 = vmatprep.subr.mxu0 0.0
        %891 = vmatpush1.msra.mxu0 0.0
        %892 = vmatprep.subr.mxu0 0.0
        %893 = vmatpush1.msra.mxu0 0.0
        %894 = vmatprep.subr.mxu0 0.0
        %895 = vmatpush1.msra.mxu0 0.0
        %896 = vmatprep.subr.mxu0 0.0
        %897 = vmatpush1.msra.mxu0 0.0
        %898 = vmatprep.subr.mxu0 0.0
        %899 = vmatpush1.msra.mxu0 0.0
        %900 = vmatprep.subr.mxu0 0.0
        %901 = vmatpush1.msra.mxu0 0.0
        %902 = vmatprep.subr.mxu0 0.0
        %903 = vmatpush1.msra.mxu0 0.0
        %904 = vmatprep.mubr.f32.mxu0 0.0
        %905 = vmatmul.mubr.f32.gmra.mrb[0].mxu0 %v838
        %v906 = vpop.f32.mrb[0].mxu0
        %v907 = vadd.f32 0.0, %v906
        %v908 = vpop.f32.mrb[0].mxu0
        %909 = vdwg.mxu0
        %v910 = vadd.f32 %v748, %v907
        %v911 = vxor.u32 %v910, 2147483648
        %v912 = vmul.f32 %v911, 1.442695
        %v913 = vpow.pop %v912
        %v914 = vadd.f32 %v913, 1.0
        %v915 = vrcp.pop %v914
        %v916 = vmul.f32 1.0, %v915
        %v917 = vtanh.pop %v910
        %v918 = vmul.f32 %v916, 0.0
        %920 = vrot.lane.b32.xlu0 %v917, 96
        %v921 = vpop.permute.xlu0 %920
        %v923 = vmul.f32 %v916, %v921
        %925 = vrot.lane.b32.xlu0 %v923, 16
        %v926 = vpop.permute.xlu0 %925
        %v928 = vadd.f32 %v918, %v926
        %v929 = vtanh.pop %v928
        %931 = vrot.lane.b32.xlu0 %v929, 32
        %v932 = vpop.permute.xlu0 %931
        %v934 = vmul.f32 %v916, %v932
        %936 = vrot.lane.b32.xlu0 %v934, 80
        %v937 = vpop.permute.xlu0 %936
        %v938 = vsel %vm836, %v937, 0
        %940 = vmatprep.subr.mxu0 0.0
        %941 = vmatpush1.msra.mxu0 %v832
        %942 = vmatprep.subr.mxu0 0.0
        %943 = vmatpush1.msra.mxu0 %v833
        %944 = vmatprep.subr.mxu0 0.0
        %945 = vmatpush1.msra.mxu0 0.0
        %946 = vmatprep.subr.mxu0 0.0
        %947 = vmatpush1.msra.mxu0 0.0
        %948 = vmatprep.subr.mxu0 0.0
        %949 = vmatpush1.msra.mxu0 0.0
        %950 = vmatprep.subr.mxu0 0.0
        %951 = vmatpush1.msra.mxu0 0.0
        %952 = vmatprep.subr.mxu0 0.0
        %953 = vmatpush1.msra.mxu0 0.0
        %954 = vmatprep.subr.mxu0 0.0
        %955 = vmatpush1.msra.mxu0 0.0
        %956 = vmatprep.subr.mxu0 0.0
        %957 = vmatpush1.msra.mxu0 0.0
        %958 = vmatprep.subr.mxu0 0.0
        %959 = vmatpush1.msra.mxu0 0.0
        %960 = vmatprep.subr.mxu0 0.0
        %961 = vmatpush1.msra.mxu0 0.0
        %962 = vmatprep.subr.mxu0 0.0
        %963 = vmatpush1.msra.mxu0 0.0
        %964 = vmatprep.subr.mxu0 0.0
        %965 = vmatpush1.msra.mxu0 0.0
        %966 = vmatprep.subr.mxu0 0.0
        %967 = vmatpush1.msra.mxu0 0.0
        %968 = vmatprep.subr.mxu0 0.0
        %969 = vmatpush1.msra.mxu0 0.0
        %970 = vmatprep.subr.mxu0 0.0
        %971 = vmatpush1.msra.mxu0 0.0
        %972 = vmatprep.subr.mxu0 0.0
        %973 = vmatpush1.msra.mxu0 0.0
        %974 = vmatprep.subr.mxu0 0.0
        %975 = vmatpush1.msra.mxu0 0.0
        %976 = vmatprep.subr.mxu0 0.0
        %977 = vmatpush1.msra.mxu0 0.0
        %978 = vmatprep.subr.mxu0 0.0
        %979 = vmatpush1.msra.mxu0 0.0
        %980 = vmatprep.subr.mxu0 0.0
        %981 = vmatpush1.msra.mxu0 0.0
        %982 = vmatprep.subr.mxu0 0.0
        %983 = vmatpush1.msra.mxu0 0.0
        %984 = vmatprep.subr.mxu0 0.0
        %985 = vmatpush1.msra.mxu0 0.0
        %986 = vmatprep.subr.mxu0 0.0
        %987 = vmatpush1.msra.mxu0 0.0
        %988 = vmatprep.subr.mxu0 0.0
        %989 = vmatpush1.msra.mxu0 0.0
        %990 = vmatprep.subr.mxu0 0.0
        %991 = vmatpush1.msra.mxu0 0.0
        %992 = vmatprep.subr.mxu0 0.0
        %993 = vmatpush1.msra.mxu0 0.0
        %994 = vmatprep.subr.mxu0 0.0
        %995 = vmatpush1.msra.mxu0 0.0
        %996 = vmatprep.subr.mxu0 0.0
        %997 = vmatpush1.msra.mxu0 0.0
        %998 = vmatprep.subr.mxu0 0.0
        %999 = vmatpush1.msra.mxu0 0.0
        %1000 = vmatprep.subr.mxu0 0.0
        %1001 = vmatpush1.msra.mxu0 0.0
        %1002 = vmatprep.subr.mxu0 0.0
        %1003 = vmatpush1.msra.mxu0 0.0
        %1004 = vmatprep.mubr.f32.mxu0 0.0
        %1005 = vmatmul.mubr.f32.gmra.mrb[0].mxu0 %v938
        %v1006 = vpop.f32.mrb[0].mxu0
        %v1007 = vadd.f32 0.0, %v1006
        %v1008 = vpop.f32.mrb[0].mxu0
        %1009 = vdwg.mxu0
        %v1011 = vrot.slane %v1007, 7
        %v1013 = vadd.f32 %v748, %v1011
        %v1014 = vxor.u32 %v1013, 2147483648
        %v1015 = vmul.f32 %v1014, 1.442695
        %v1016 = vpow.pop %v1015
        %v1017 = vadd.f32 %v1016, 1.0
        %v1018 = vrcp.pop %v1017
        %v1019 = vmul.f32 1.0, %v1018
        %v1020 = vtanh.pop %v1013
        %v1022 = vrot.slane %v928, 7
        %v1024 = vmul.f32 %v1019, %v1022
        %1026 = vrot.lane.b32.xlu0 %v1020, 96
        %v1027 = vpop.permute.xlu0 %1026
        %v1029 = vmul.f32 %v1019, %v1027
        %1031 = vrot.lane.b32.xlu0 %v1029, 16
        %v1032 = vpop.permute.xlu0 %1031
        %v1034 = vadd.f32 %v1024, %v1032
        %v1035 = vtanh.pop %v1034
        %1037 = vrot.lane.b32.xlu0 %v1035, 32
        %v1038 = vpop.permute.xlu0 %1037
        %v1040 = vmul.f32 %v1019, %v1038
        %v1042 = vrot.slane %v1040, 1
        %1043 = vrot.lane.b32.xlu0 %v1042, 80
        %v1044 = vpop.permute.xlu0 %1043
        %v1045 = vsel %vm836, %v1044, 0
        %1047 = vmatprep.subr.mxu0 0.0
        %1048 = vmatpush1.msra.mxu0 %v832
        %1049 = vmatprep.subr.mxu0 0.0
        %1050 = vmatpush1.msra.mxu0 %v833
        %1051 = vmatprep.subr.mxu0 0.0
        %1052 = vmatpush1.msra.mxu0 0.0
        %1053 = vmatprep.subr.mxu0 0.0
        %1054 = vmatpush1.msra.mxu0 0.0
        %1055 = vmatprep.subr.mxu0 0.0
        %1056 = vmatpush1.msra.mxu0 0.0
        %1057 = vmatprep.subr.mxu0 0.0
        %1058 = vmatpush1.msra.mxu0 0.0
        %1059 = vmatprep.subr.mxu0 0.0
        %1060 = vmatpush1.msra.mxu0 0.0
        %1061 = vmatprep.subr.mxu0 0.0
        %1062 = vmatpush1.msra.mxu0 0.0
        %1063 = vmatprep.subr.mxu0 0.0
        %1064 = vmatpush1.msra.mxu0 0.0
        %1065 = vmatprep.subr.mxu0 0.0
        %1066 = vmatpush1.msra.mxu0 0.0
        %1067 = vmatprep.subr.mxu0 0.0
        %1068 = vmatpush1.msra.mxu0 0.0
        %1069 = vmatprep.subr.mxu0 0.0
        %1070 = vmatpush1.msra.mxu0 0.0
        %1071 = vmatprep.subr.mxu0 0.0
        %1072 = vmatpush1.msra.mxu0 0.0
        %1073 = vmatprep.subr.mxu0 0.0
        %1074 = vmatpush1.msra.mxu0 0.0
        %1075 = vmatprep.subr.mxu0 0.0
        %1076 = vmatpush1.msra.mxu0 0.0
        %1077 = vmatprep.subr.mxu0 0.0
        %1078 = vmatpush1.msra.mxu0 0.0
        %1079 = vmatprep.subr.mxu0 0.0
        %1080 = vmatpush1.msra.mxu0 0.0
        %1081 = vmatprep.subr.mxu0 0.0
        %1082 = vmatpush1.msra.mxu0 0.0
        %1083 = vmatprep.subr.mxu0 0.0
        %1084 = vmatpush1.msra.mxu0 0.0
        %1085 = vmatprep.subr.mxu0 0.0
        %1086 = vmatpush1.msra.mxu0 0.0
        %1087 = vmatprep.subr.mxu0 0.0
        %1088 = vmatpush1.msra.mxu0 0.0
        %1089 = vmatprep.subr.mxu0 0.0
        %1090 = vmatpush1.msra.mxu0 0.0
        %1091 = vmatprep.subr.mxu0 0.0
        %1092 = vmatpush1.msra.mxu0 0.0
        %1093 = vmatprep.subr.mxu0 0.0
        %1094 = vmatpush1.msra.mxu0 0.0
        %1095 = vmatprep.subr.mxu0 0.0
        %1096 = vmatpush1.msra.mxu0 0.0
        %1097 = vmatprep.subr.mxu0 0.0
        %1098 = vmatpush1.msra.mxu0 0.0
        %1099 = vmatprep.subr.mxu0 0.0
        %1100 = vmatpush1.msra.mxu0 0.0
        %1101 = vmatprep.subr.mxu0 0.0
        %1102 = vmatpush1.msra.mxu0 0.0
        %1103 = vmatprep.subr.mxu0 0.0
        %1104 = vmatpush1.msra.mxu0 0.0
        %1105 = vmatprep.subr.mxu0 0.0
        %1106 = vmatpush1.msra.mxu0 0.0
        %1107 = vmatprep.subr.mxu0 0.0
        %1108 = vmatpush1.msra.mxu0 0.0
        %1109 = vmatprep.subr.mxu0 0.0
        %1110 = vmatpush1.msra.mxu0 0.0
        %1111 = vmatprep.mubr.f32.mxu0 0.0
        %1112 = vmatmul.mubr.f32.gmra.mrb[0].mxu0 %v1045
        %v1113 = vpop.f32.mrb[0].mxu0
        %v1114 = vadd.f32 0.0, %v1113
        %v1115 = vpop.f32.mrb[0].mxu0
        %1116 = vdwg.mxu0
        %v1118 = vrot.slane %v1114, 6
        %v1120 = vadd.f32 %v748, %v1118
        %v1121 = vxor.u32 %v1120, 2147483648
        %v1122 = vmul.f32 %v1121, 1.442695
        %v1123 = vpow.pop %v1122
        %v1124 = vadd.f32 %v1123, 1.0
        %v1125 = vrcp.pop %v1124
        %v1126 = vmul.f32 1.0, %v1125
        %v1127 = vtanh.pop %v1120
        %v1129 = vrot.slane %v1034, 7
        %v1131 = vmul.f32 %v1126, %v1129
        %1133 = vrot.lane.b32.xlu0 %v1127, 96
        %v1134 = vpop.permute.xlu0 %1133
        %v1136 = vmul.f32 %v1126, %v1134
        %1138 = vrot.lane.b32.xlu0 %v1136, 16
        %v1139 = vpop.permute.xlu0 %1138
        %v1141 = vadd.f32 %v1131, %v1139
        %v1142 = vtanh.pop %v1141
        %1144 = vrot.lane.b32.xlu0 %v1142, 32
        %v1145 = vpop.permute.xlu0 %1144
        %v1147 = vmul.f32 %v1126, %v1145
        %v1149 = vrot.slane %v1147, 2
        %1150 = vrot.lane.b32.xlu0 %v1149, 80
        %v1151 = vpop.permute.xlu0 %1150
        %v1152 = vsel %vm836, %v1151, 0
        %1154 = vmatprep.subr.mxu0 0.0
        %1155 = vmatpush1.msra.mxu0 %v832
        %1156 = vmatprep.subr.mxu0 0.0
        %1157 = vmatpush1.msra.mxu0 %v833
        %1158 = vmatprep.subr.mxu0 0.0
        %1159 = vmatpush1.msra.mxu0 0.0
        %1160 = vmatprep.subr.mxu0 0.0
        %1161 = vmatpush1.msra.mxu0 0.0
        %1162 = vmatprep.subr.mxu0 0.0
        %1163 = vmatpush1.msra.mxu0 0.0
        %1164 = vmatprep.subr.mxu0 0.0
        %1165 = vmatpush1.msra.mxu0 0.0
        %1166 = vmatprep.subr.mxu0 0.0
        %1167 = vmatpush1.msra.mxu0 0.0
        %1168 = vmatprep.subr.mxu0 0.0
        %1169 = vmatpush1.msra.mxu0 0.0
        %1170 = vmatprep.subr.mxu0 0.0
        %1171 = vmatpush1.msra.mxu0 0.0
        %1172 = vmatprep.subr.mxu0 0.0
        %1173 = vmatpush1.msra.mxu0 0.0
        %1174 = vmatprep.subr.mxu0 0.0
        %1175 = vmatpush1.msra.mxu0 0.0
        %1176 = vmatprep.subr.mxu0 0.0
        %1177 = vmatpush1.msra.mxu0 0.0
        %1178 = vmatprep.subr.mxu0 0.0
        %1179 = vmatpush1.msra.mxu0 0.0
        %1180 = vmatprep.subr.mxu0 0.0
        %1181 = vmatpush1.msra.mxu0 0.0
        %1182 = vmatprep.subr.mxu0 0.0
        %1183 = vmatpush1.msra.mxu0 0.0
        %1184 = vmatprep.subr.mxu0 0.0
        %1185 = vmatpush1.msra.mxu0 0.0
        %1186 = vmatprep.subr.mxu0 0.0
        %1187 = vmatpush1.msra.mxu0 0.0
        %1188 = vmatprep.subr.mxu0 0.0
        %1189 = vmatpush1.msra.mxu0 0.0
        %1190 = vmatprep.subr.mxu0 0.0
        %1191 = vmatpush1.msra.mxu0 0.0
        %1192 = vmatprep.subr.mxu0 0.0
        %1193 = vmatpush1.msra.mxu0 0.0
        %1194 = vmatprep.subr.mxu0 0.0
        %1195 = vmatpush1.msra.mxu0 0.0
        %1196 = vmatprep.subr.mxu0 0.0
        %1197 = vmatpush1.msra.mxu0 0.0
        %1198 = vmatprep.subr.mxu0 0.0
        %1199 = vmatpush1.msra.mxu0 0.0
        %1200 = vmatprep.subr.mxu0 0.0
        %1201 = vmatpush1.msra.mxu0 0.0
        %1202 = vmatprep.subr.mxu0 0.0
        %1203 = vmatpush1.msra.mxu0 0.0
        %1204 = vmatprep.subr.mxu0 0.0
        %1205 = vmatpush1.msra.mxu0 0.0
        %1206 = vmatprep.subr.mxu0 0.0
        %1207 = vmatpush1.msra.mxu0 0.0
        %1208 = vmatprep.subr.mxu0 0.0
        %1209 = vmatpush1.msra.mxu0 0.0
        %1210 = vmatprep.subr.mxu0 0.0
        %1211 = vmatpush1.msra.mxu0 0.0
        %1212 = vmatprep.subr.mxu0 0.0
        %1213 = vmatpush1.msra.mxu0 0.0
        %1214 = vmatprep.subr.mxu0 0.0
        %1215 = vmatpush1.msra.mxu0 0.0
        %1216 = vmatprep.subr.mxu0 0.0
        %1217 = vmatpush1.msra.mxu0 0.0
        %1218 = vmatprep.mubr.f32.mxu0 0.0
        %1219 = vmatmul.mubr.f32.gmra.mrb[0].mxu0 %v1152
        %v1220 = vpop.f32.mrb[0].mxu0
        %v1221 = vadd.f32 0.0, %v1220
        %v1222 = vpop.f32.mrb[0].mxu0
        %1223 = vdwg.mxu0
        %v1225 = vrot.slane %v1221, 5
        %v1227 = vadd.f32 %v748, %v1225
        %v1228 = vxor.u32 %v1227, 2147483648
        %v1229 = vmul.f32 %v1228, 1.442695
        %v1230 = vpow.pop %v1229
        %v1231 = vadd.f32 %v1230, 1.0
        %v1232 = vrcp.pop %v1231
        %v1233 = vmul.f32 1.0, %v1232
        %v1234 = vtanh.pop %v1227
        %v1236 = vrot.slane %v1141, 7
        %v1238 = vmul.f32 %v1233, %v1236
        %1240 = vrot.lane.b32.xlu0 %v1234, 96
        %v1241 = vpop.permute.xlu0 %1240
        %v1243 = vmul.f32 %v1233, %v1241
        %1245 = vrot.lane.b32.xlu0 %v1243, 16
        %v1246 = vpop.permute.xlu0 %1245
        %v1248 = vadd.f32 %v1238, %v1246
        %v1249 = vtanh.pop %v1248
        %1251 = vrot.lane.b32.xlu0 %v1249, 32
        %v1252 = vpop.permute.xlu0 %1251
        %v1254 = vmul.f32 %v1233, %v1252
        %v1256 = vrot.slane %v1254, 3
        %1257 = vrot.lane.b32.xlu0 %v1256, 80
        %v1258 = vpop.permute.xlu0 %1257
        %v1259 = vsel %vm836, %v1258, 0
        %1261 = vmatprep.subr.mxu0 0.0
        %1262 = vmatpush1.msra.mxu0 %v832
        %1263 = vmatprep.subr.mxu0 0.0
        %1264 = vmatpush1.msra.mxu0 %v833
        %1265 = vmatprep.subr.mxu0 0.0
        %1266 = vmatpush1.msra.mxu0 0.0
        %1267 = vmatprep.subr.mxu0 0.0
        %1268 = vmatpush1.msra.mxu0 0.0
        %1269 = vmatprep.subr.mxu0 0.0
        %1270 = vmatpush1.msra.mxu0 0.0
        %1271 = vmatprep.subr.mxu0 0.0
        %1272 = vmatpush1.msra.mxu0 0.0
        %1273 = vmatprep.subr.mxu0 0.0
        %1274 = vmatpush1.msra.mxu0 0.0
        %1275 = vmatprep.subr.mxu0 0.0
        %1276 = vmatpush1.msra.mxu0 0.0
        %1277 = vmatprep.subr.mxu0 0.0
        %1278 = vmatpush1.msra.mxu0 0.0
        %1279 = vmatprep.subr.mxu0 0.0
        %1280 = vmatpush1.msra.mxu0 0.0
        %1281 = vmatprep.subr.mxu0 0.0
        %1282 = vmatpush1.msra.mxu0 0.0
        %1283 = vmatprep.subr.mxu0 0.0
        %1284 = vmatpush1.msra.mxu0 0.0
        %1285 = vmatprep.subr.mxu0 0.0
        %1286 = vmatpush1.msra.mxu0 0.0
        %1287 = vmatprep.subr.mxu0 0.0
        %1288 = vmatpush1.msra.mxu0 0.0
        %1289 = vmatprep.subr.mxu0 0.0
        %1290 = vmatpush1.msra.mxu0 0.0
        %1291 = vmatprep.subr.mxu0 0.0
        %1292 = vmatpush1.msra.mxu0 0.0
        %1293 = vmatprep.subr.mxu0 0.0
        %1294 = vmatpush1.msra.mxu0 0.0
        %1295 = vmatprep.subr.mxu0 0.0
        %1296 = vmatpush1.msra.mxu0 0.0
        %1297 = vmatprep.subr.mxu0 0.0
        %1298 = vmatpush1.msra.mxu0 0.0
        %1299 = vmatprep.subr.mxu0 0.0
        %1300 = vmatpush1.msra.mxu0 0.0
        %1301 = vmatprep.subr.mxu0 0.0
        %1302 = vmatpush1.msra.mxu0 0.0
        %1303 = vmatprep.subr.mxu0 0.0
        %1304 = vmatpush1.msra.mxu0 0.0
        %1305 = vmatprep.subr.mxu0 0.0
        %1306 = vmatpush1.msra.mxu0 0.0
        %1307 = vmatprep.subr.mxu0 0.0
        %1308 = vmatpush1.msra.mxu0 0.0
        %1309 = vmatprep.subr.mxu0 0.0
        %1310 = vmatpush1.msra.mxu0 0.0
        %1311 = vmatprep.subr.mxu0 0.0
        %1312 = vmatpush1.msra.mxu0 0.0
        %1313 = vmatprep.subr.mxu0 0.0
        %1314 = vmatpush1.msra.mxu0 0.0
        %1315 = vmatprep.subr.mxu0 0.0
        %1316 = vmatpush1.msra.mxu0 0.0
        %1317 = vmatprep.subr.mxu0 0.0
        %1318 = vmatpush1.msra.mxu0 0.0
        %1319 = vmatprep.subr.mxu0 0.0
        %1320 = vmatpush1.msra.mxu0 0.0
        %1321 = vmatprep.subr.mxu0 0.0
        %1322 = vmatpush1.msra.mxu0 0.0
        %1323 = vmatprep.subr.mxu0 0.0
        %1324 = vmatpush1.msra.mxu0 0.0
        %1325 = vmatprep.mubr.f32.mxu0 0.0
        %1326 = vmatmul.mubr.f32.gmra.mrb[0].mxu0 %v1259
        %v1327 = vpop.f32.mrb[0].mxu0
        %v1328 = vadd.f32 0.0, %v1327
        %v1329 = vpop.f32.mrb[0].mxu0
        %1330 = vdwg.mxu0
        %v1332 = vrot.slane %v1328, 4
        %v1334 = vadd.f32 %v748, %v1332
        %v1335 = vxor.u32 %v1334, 2147483648
        %v1336 = vmul.f32 %v1335, 1.442695
        %v1337 = vpow.pop %v1336
        %v1338 = vadd.f32 %v1337, 1.0
        %v1339 = vrcp.pop %v1338
        %v1340 = vmul.f32 1.0, %v1339
        %v1341 = vtanh.pop %v1334
        %v1343 = vrot.slane %v1248, 7
        %v1345 = vmul.f32 %v1340, %v1343
        %1347 = vrot.lane.b32.xlu0 %v1341, 96
        %v1348 = vpop.permute.xlu0 %1347
        %v1350 = vmul.f32 %v1340, %v1348
        %1352 = vrot.lane.b32.xlu0 %v1350, 16
        %v1353 = vpop.permute.xlu0 %1352
        %v1355 = vadd.f32 %v1345, %v1353
        %v1356 = vtanh.pop %v1355
        %1358 = vrot.lane.b32.xlu0 %v1356, 32
        %v1359 = vpop.permute.xlu0 %1358
        %v1361 = vmul.f32 %v1340, %v1359
        %v1363 = vrot.slane %v1361, 4
        %1364 = vrot.lane.b32.xlu0 %v1363, 80
        %v1365 = vpop.permute.xlu0 %1364
        %v1366 = vsel %vm836, %v1365, 0
        %1368 = vmatprep.subr.mxu0 0.0
        %1369 = vmatpush1.msra.mxu0 %v832
        %1370 = vmatprep.subr.mxu0 0.0
        %1371 = vmatpush1.msra.mxu0 %v833
        %1372 = vmatprep.subr.mxu0 0.0
        %1373 = vmatpush1.msra.mxu0 0.0
        %1374 = vmatprep.subr.mxu0 0.0
        %1375 = vmatpush1.msra.mxu0 0.0
        %1376 = vmatprep.subr.mxu0 0.0
        %1377 = vmatpush1.msra.mxu0 0.0
        %1378 = vmatprep.subr.mxu0 0.0
        %1379 = vmatpush1.msra.mxu0 0.0
        %1380 = vmatprep.subr.mxu0 0.0
        %1381 = vmatpush1.msra.mxu0 0.0
        %1382 = vmatprep.subr.mxu0 0.0
        %1383 = vmatpush1.msra.mxu0 0.0
        %1384 = vmatprep.subr.mxu0 0.0
        %1385 = vmatpush1.msra.mxu0 0.0
        %1386 = vmatprep.subr.mxu0 0.0
        %1387 = vmatpush1.msra.mxu0 0.0
        %1388 = vmatprep.subr.mxu0 0.0
        %1389 = vmatpush1.msra.mxu0 0.0
        %1390 = vmatprep.subr.mxu0 0.0
        %1391 = vmatpush1.msra.mxu0 0.0
        %1392 = vmatprep.subr.mxu0 0.0
        %1393 = vmatpush1.msra.mxu0 0.0
        %1394 = vmatprep.subr.mxu0 0.0
        %1395 = vmatpush1.msra.mxu0 0.0
        %1396 = vmatprep.subr.mxu0 0.0
        %1397 = vmatpush1.msra.mxu0 0.0
        %1398 = vmatprep.subr.mxu0 0.0
        %1399 = vmatpush1.msra.mxu0 0.0
        %1400 = vmatprep.subr.mxu0 0.0
        %1401 = vmatpush1.msra.mxu0 0.0
        %1402 = vmatprep.subr.mxu0 0.0
        %1403 = vmatpush1.msra.mxu0 0.0
        %1404 = vmatprep.subr.mxu0 0.0
        %1405 = vmatpush1.msra.mxu0 0.0
        %1406 = vmatprep.subr.mxu0 0.0
        %1407 = vmatpush1.msra.mxu0 0.0
        %1408 = vmatprep.subr.mxu0 0.0
        %1409 = vmatpush1.msra.mxu0 0.0
        %1410 = vmatprep.subr.mxu0 0.0
        %1411 = vmatpush1.msra.mxu0 0.0
        %1412 = vmatprep.subr.mxu0 0.0
        %1413 = vmatpush1.msra.mxu0 0.0
        %1414 = vmatprep.subr.mxu0 0.0
        %1415 = vmatpush1.msra.mxu0 0.0
        %1416 = vmatprep.subr.mxu0 0.0
        %1417 = vmatpush1.msra.mxu0 0.0
        %1418 = vmatprep.subr.mxu0 0.0
        %1419 = vmatpush1.msra.mxu0 0.0
        %1420 = vmatprep.subr.mxu0 0.0
        %1421 = vmatpush1.msra.mxu0 0.0
        %1422 = vmatprep.subr.mxu0 0.0
        %1423 = vmatpush1.msra.mxu0 0.0
        %1424 = vmatprep.subr.mxu0 0.0
        %1425 = vmatpush1.msra.mxu0 0.0
        %1426 = vmatprep.subr.mxu0 0.0
        %1427 = vmatpush1.msra.mxu0 0.0
        %1428 = vmatprep.subr.mxu0 0.0
        %1429 = vmatpush1.msra.mxu0 0.0
        %1430 = vmatprep.subr.mxu0 0.0
        %1431 = vmatpush1.msra.mxu0 0.0
        %1432 = vmatprep.mubr.f32.mxu0 0.0
        %1433 = vmatmul.mubr.f32.gmra.mrb[0].mxu0 %v1366
        %v1434 = vpop.f32.mrb[0].mxu0
        %v1435 = vadd.f32 0.0, %v1434
        %v1436 = vpop.f32.mrb[0].mxu0
        %1437 = vdwg.mxu0
        %v1439 = vrot.slane %v1435, 3
        %v1441 = vadd.f32 %v748, %v1439
        %v1442 = vxor.u32 %v1441, 2147483648
        %v1443 = vmul.f32 %v1442, 1.442695
        %v1444 = vpow.pop %v1443
        %v1445 = vadd.f32 %v1444, 1.0
        %v1446 = vrcp.pop %v1445
        %v1447 = vmul.f32 1.0, %v1446
        %v1448 = vtanh.pop %v1441
        %v1450 = vrot.slane %v1355, 7
        %v1452 = vmul.f32 %v1447, %v1450
        %1454 = vrot.lane.b32.xlu0 %v1448, 96
        %v1455 = vpop.permute.xlu0 %1454
        %v1457 = vmul.f32 %v1447, %v1455
        %1459 = vrot.lane.b32.xlu0 %v1457, 16
        %v1460 = vpop.permute.xlu0 %1459
        %v1462 = vadd.f32 %v1452, %v1460
        %v1463 = vtanh.pop %v1462
        %1465 = vrot.lane.b32.xlu0 %v1463, 32
        %v1466 = vpop.permute.xlu0 %1465
        %v1468 = vmul.f32 %v1447, %v1466
        %v1470 = vrot.slane %v1468, 5
        %1471 = vrot.lane.b32.xlu0 %v1470, 80
        %v1472 = vpop.permute.xlu0 %1471
        %v1473 = vsel %vm836, %v1472, 0
        %1475 = vmatprep.subr.mxu0 0.0
        %1476 = vmatpush1.msra.mxu0 %v832
        %1477 = vmatprep.subr.mxu0 0.0
        %1478 = vmatpush1.msra.mxu0 %v833
        %1479 = vmatprep.subr.mxu0 0.0
        %1480 = vmatpush1.msra.mxu0 0.0
        %1481 = vmatprep.subr.mxu0 0.0
        %1482 = vmatpush1.msra.mxu0 0.0
        %1483 = vmatprep.subr.mxu0 0.0
        %1484 = vmatpush1.msra.mxu0 0.0
        %1485 = vmatprep.subr.mxu0 0.0
        %1486 = vmatpush1.msra.mxu0 0.0
        %1487 = vmatprep.subr.mxu0 0.0
        %1488 = vmatpush1.msra.mxu0 0.0
        %1489 = vmatprep.subr.mxu0 0.0
        %1490 = vmatpush1.msra.mxu0 0.0
        %1491 = vmatprep.subr.mxu0 0.0
        %1492 = vmatpush1.msra.mxu0 0.0
        %1493 = vmatprep.subr.mxu0 0.0
        %1494 = vmatpush1.msra.mxu0 0.0
        %1495 = vmatprep.subr.mxu0 0.0
        %1496 = vmatpush1.msra.mxu0 0.0
        %1497 = vmatprep.subr.mxu0 0.0
        %1498 = vmatpush1.msra.mxu0 0.0
        %1499 = vmatprep.subr.mxu0 0.0
        %1500 = vmatpush1.msra.mxu0 0.0
        %1501 = vmatprep.subr.mxu0 0.0
        %1502 = vmatpush1.msra.mxu0 0.0
        %1503 = vmatprep.subr.mxu0 0.0
        %1504 = vmatpush1.msra.mxu0 0.0
        %1505 = vmatprep.subr.mxu0 0.0
        %1506 = vmatpush1.msra.mxu0 0.0
        %1507 = vmatprep.subr.mxu0 0.0
        %1508 = vmatpush1.msra.mxu0 0.0
        %1509 = vmatprep.subr.mxu0 0.0
        %1510 = vmatpush1.msra.mxu0 0.0
        %1511 = vmatprep.subr.mxu0 0.0
        %1512 = vmatpush1.msra.mxu0 0.0
        %1513 = vmatprep.subr.mxu0 0.0
        %1514 = vmatpush1.msra.mxu0 0.0
        %1515 = vmatprep.subr.mxu0 0.0
        %1516 = vmatpush1.msra.mxu0 0.0
        %1517 = vmatprep.subr.mxu0 0.0
        %1518 = vmatpush1.msra.mxu0 0.0
        %1519 = vmatprep.subr.mxu0 0.0
        %1520 = vmatpush1.msra.mxu0 0.0
        %1521 = vmatprep.subr.mxu0 0.0
        %1522 = vmatpush1.msra.mxu0 0.0
        %1523 = vmatprep.subr.mxu0 0.0
        %1524 = vmatpush1.msra.mxu0 0.0
        %1525 = vmatprep.subr.mxu0 0.0
        %1526 = vmatpush1.msra.mxu0 0.0
        %1527 = vmatprep.subr.mxu0 0.0
        %1528 = vmatpush1.msra.mxu0 0.0
        %1529 = vmatprep.subr.mxu0 0.0
        %1530 = vmatpush1.msra.mxu0 0.0
        %1531 = vmatprep.subr.mxu0 0.0
        %1532 = vmatpush1.msra.mxu0 0.0
        %1533 = vmatprep.subr.mxu0 0.0
        %1534 = vmatpush1.msra.mxu0 0.0
        %1535 = vmatprep.subr.mxu0 0.0
        %1536 = vmatpush1.msra.mxu0 0.0
        %1537 = vmatprep.subr.mxu0 0.0
        %1538 = vmatpush1.msra.mxu0 0.0
        %1539 = vmatprep.mubr.f32.mxu0 0.0
        %1540 = vmatmul.mubr.f32.gmra.mrb[0].mxu0 %v1473
        %v1541 = vpop.f32.mrb[0].mxu0
        %v1542 = vadd.f32 0.0, %v1541
        %v1543 = vpop.f32.mrb[0].mxu0
        %1544 = vdwg.mxu0
        %v1546 = vrot.slane %v1542, 2
        %v1548 = vadd.f32 %v748, %v1546
        %v1549 = vxor.u32 %v1548, 2147483648
        %v1550 = vmul.f32 %v1549, 1.442695
        %v1551 = vpow.pop %v1550
        %v1552 = vadd.f32 %v1551, 1.0
        %v1553 = vrcp.pop %v1552
        %v1554 = vmul.f32 1.0, %v1553
        %v1555 = vtanh.pop %v1548
        %v1557 = vrot.slane %v1462, 7
        %v1559 = vmul.f32 %v1554, %v1557
        %1561 = vrot.lane.b32.xlu0 %v1555, 96
        %v1562 = vpop.permute.xlu0 %1561
        %v1564 = vmul.f32 %v1554, %v1562
        %1566 = vrot.lane.b32.xlu0 %v1564, 16
        %v1567 = vpop.permute.xlu0 %1566
        %v1569 = vadd.f32 %v1559, %v1567
        %v1570 = vtanh.pop %v1569
        %1572 = vrot.lane.b32.xlu0 %v1570, 32
        %v1573 = vpop.permute.xlu0 %1572
        %v1575 = vmul.f32 %v1554, %v1573
        %v1577 = vrot.slane %v1575, 6
        %1578 = vrot.lane.b32.xlu0 %v1577, 80
        %v1579 = vpop.permute.xlu0 %1578
        %v1580 = vsel %vm836, %v1579, 0
        %1582 = vmatprep.subr.mxu0 0.0
        %1583 = vmatpush1.msra.mxu0 %v832
        %1584 = vmatprep.subr.mxu0 0.0
        %1585 = vmatpush1.msra.mxu0 %v833
        %1586 = vmatprep.subr.mxu0 0.0
        %1587 = vmatpush1.msra.mxu0 0.0
        %1588 = vmatprep.subr.mxu0 0.0
        %1589 = vmatpush1.msra.mxu0 0.0
        %1590 = vmatprep.subr.mxu0 0.0
        %1591 = vmatpush1.msra.mxu0 0.0
        %1592 = vmatprep.subr.mxu0 0.0
        %1593 = vmatpush1.msra.mxu0 0.0
        %1594 = vmatprep.subr.mxu0 0.0
        %1595 = vmatpush1.msra.mxu0 0.0
        %1596 = vmatprep.subr.mxu0 0.0
        %1597 = vmatpush1.msra.mxu0 0.0
        %1598 = vmatprep.subr.mxu0 0.0
        %1599 = vmatpush1.msra.mxu0 0.0
        %1600 = vmatprep.subr.mxu0 0.0
        %1601 = vmatpush1.msra.mxu0 0.0
        %1602 = vmatprep.subr.mxu0 0.0
        %1603 = vmatpush1.msra.mxu0 0.0
        %1604 = vmatprep.subr.mxu0 0.0
        %1605 = vmatpush1.msra.mxu0 0.0
        %1606 = vmatprep.subr.mxu0 0.0
        %1607 = vmatpush1.msra.mxu0 0.0
        %1608 = vmatprep.subr.mxu0 0.0
        %1609 = vmatpush1.msra.mxu0 0.0
        %1610 = vmatprep.subr.mxu0 0.0
        %1611 = vmatpush1.msra.mxu0 0.0
        %1612 = vmatprep.subr.mxu0 0.0
        %1613 = vmatpush1.msra.mxu0 0.0
        %1614 = vmatprep.subr.mxu0 0.0
        %1615 = vmatpush1.msra.mxu0 0.0
        %1616 = vmatprep.subr.mxu0 0.0
        %1617 = vmatpush1.msra.mxu0 0.0
        %1618 = vmatprep.subr.mxu0 0.0
        %1619 = vmatpush1.msra.mxu0 0.0
        %1620 = vmatprep.subr.mxu0 0.0
        %1621 = vmatpush1.msra.mxu0 0.0
        %1622 = vmatprep.subr.mxu0 0.0
        %1623 = vmatpush1.msra.mxu0 0.0
        %1624 = vmatprep.subr.mxu0 0.0
        %1625 = vmatpush1.msra.mxu0 0.0
        %1626 = vmatprep.subr.mxu0 0.0
        %1627 = vmatpush1.msra.mxu0 0.0
        %1628 = vmatprep.subr.mxu0 0.0
        %1629 = vmatpush1.msra.mxu0 0.0
        %1630 = vmatprep.subr.mxu0 0.0
        %1631 = vmatpush1.msra.mxu0 0.0
        %1632 = vmatprep.subr.mxu0 0.0
        %1633 = vmatpush1.msra.mxu0 0.0
        %1634 = vmatprep.subr.mxu0 0.0
        %1635 = vmatpush1.msra.mxu0 0.0
        %1636 = vmatprep.subr.mxu0 0.0
        %1637 = vmatpush1.msra.mxu0 0.0
        %1638 = vmatprep.subr.mxu0 0.0
        %1639 = vmatpush1.msra.mxu0 0.0
        %1640 = vmatprep.subr.mxu0 0.0
        %1641 = vmatpush1.msra.mxu0 0.0
        %1642 = vmatprep.subr.mxu0 0.0
        %1643 = vmatpush1.msra.mxu0 0.0
        %1644 = vmatprep.subr.mxu0 0.0
        %1645 = vmatpush1.msra.mxu0 0.0
        %1646 = vmatprep.mubr.f32.mxu0 0.0
        %1647 = vmatmul.mubr.f32.gmra.mrb[0].mxu0 %v1580
        %v1648 = vpop.f32.mrb[0].mxu0
        %v1649 = vadd.f32 0.0, %v1648
        %v1650 = vpop.f32.mrb[0].mxu0
        %1651 = vdwg.mxu0
        %v1653 = vrot.slane %v1649, 1
        %v1655 = vadd.f32 %v748, %v1653
        %v1656 = vxor.u32 %v1655, 2147483648
        %v1657 = vmul.f32 %v1656, 1.442695
        %v1658 = vpow.pop %v1657
        %v1659 = vadd.f32 %v1658, 1.0
        %v1660 = vrcp.pop %v1659
        %v1661 = vmul.f32 1.0, %v1660
        %v1662 = vtanh.pop %v1655
        %v1664 = vrot.slane %v1569, 7
        %v1666 = vmul.f32 %v1661, %v1664
        %1668 = vrot.lane.b32.xlu0 %v1662, 96
        %v1669 = vpop.permute.xlu0 %1668
        %v1671 = vmul.f32 %v1661, %v1669
        %1673 = vrot.lane.b32.xlu0 %v1671, 16
        %v1674 = vpop.permute.xlu0 %1673
        %v1676 = vadd.f32 %v1666, %v1674
        %v1677 = vtanh.pop %v1676
        %1679 = vrot.lane.b32.xlu0 %v1677, 32
        %v1680 = vpop.permute.xlu0 %1679
        %v1682 = vmul.f32 %v1661, %v1680
        %1683 = vmatprep.subr.mxu0 0.0
        %1684 = vmatpush1.msra.mxu0 %v834
        %1685 = vmatprep.subr.mxu0 0.0
        %1686 = vmatpush1.msra.mxu0 %v835
        %1687 = vmatprep.subr.mxu0 0.0
        %1688 = vmatpush1.msra.mxu0 0.0
        %1689 = vmatprep.subr.mxu0 0.0
        %1690 = vmatpush1.msra.mxu0 0.0
        %1691 = vmatprep.subr.mxu0 0.0
        %1692 = vmatpush1.msra.mxu0 0.0
        %1693 = vmatprep.subr.mxu0 0.0
        %1694 = vmatpush1.msra.mxu0 0.0
        %1695 = vmatprep.subr.mxu0 0.0
        %1696 = vmatpush1.msra.mxu0 0.0
        %1697 = vmatprep.subr.mxu0 0.0
        %1698 = vmatpush1.msra.mxu0 0.0
        %1699 = vmatprep.subr.mxu0 0.0
        %1700 = vmatpush1.msra.mxu0 0.0
        %1701 = vmatprep.subr.mxu0 0.0
        %1702 = vmatpush1.msra.mxu0 0.0
        %1703 = vmatprep.subr.mxu0 0.0
        %1704 = vmatpush1.msra.mxu0 0.0
        %1705 = vmatprep.subr.mxu0 0.0
        %1706 = vmatpush1.msra.mxu0 0.0
        %1707 = vmatprep.subr.mxu0 0.0
        %1708 = vmatpush1.msra.mxu0 0.0
        %1709 = vmatprep.subr.mxu0 0.0
        %1710 = vmatpush1.msra.mxu0 0.0
        %1711 = vmatprep.subr.mxu0 0.0
        %1712 = vmatpush1.msra.mxu0 0.0
        %1713 = vmatprep.subr.mxu0 0.0
        %1714 = vmatpush1.msra.mxu0 0.0
        %1715 = vmatprep.subr.mxu0 0.0
        %1716 = vmatpush1.msra.mxu0 0.0
        %1717 = vmatprep.subr.mxu0 0.0
        %1718 = vmatpush1.msra.mxu0 0.0
        %1719 = vmatprep.subr.mxu0 0.0
        %1720 = vmatpush1.msra.mxu0 0.0
        %1721 = vmatprep.subr.mxu0 0.0
        %1722 = vmatpush1.msra.mxu0 0.0
        %1723 = vmatprep.subr.mxu0 0.0
        %1724 = vmatpush1.msra.mxu0 0.0
        %1725 = vmatprep.subr.mxu0 0.0
        %1726 = vmatpush1.msra.mxu0 0.0
        %1727 = vmatprep.subr.mxu0 0.0
        %1728 = vmatpush1.msra.mxu0 0.0
        %1729 = vmatprep.subr.mxu0 0.0
        %1730 = vmatpush1.msra.mxu0 0.0
        %1731 = vmatprep.subr.mxu0 0.0
        %1732 = vmatpush1.msra.mxu0 0.0
        %1733 = vmatprep.subr.mxu0 0.0
        %1734 = vmatpush1.msra.mxu0 0.0
        %1735 = vmatprep.subr.mxu0 0.0
        %1736 = vmatpush1.msra.mxu0 0.0
        %1737 = vmatprep.subr.mxu0 0.0
        %1738 = vmatpush1.msra.mxu0 0.0
        %1739 = vmatprep.subr.mxu0 0.0
        %1740 = vmatpush1.msra.mxu0 0.0
        %1741 = vmatprep.subr.mxu0 0.0
        %1742 = vmatpush1.msra.mxu0 0.0
        %1743 = vmatprep.subr.mxu0 0.0
        %1744 = vmatpush1.msra.mxu0 0.0
        %1745 = vmatprep.subr.mxu0 0.0
        %1746 = vmatpush1.msra.mxu0 0.0
        %1747 = vmatprep.mubr.f32.mxu0 0.0
        %1748 = vmatmul.mubr.f32.gmra.mrb[0].mxu0 %v838
        %v1749 = vpop.f32.mrb[0].mxu0
        %v1750 = vadd.f32 0.0, %v1749
        %v1751 = vpop.f32.mrb[0].mxu0
        %1752 = vdwg.mxu0
        %v1754 = vrot.slane %v1750, 1
        %v1756 = vadd.f32 %v829, %v1754
        %v1757 = vxor.u32 %v1756, 2147483648
        %v1758 = vmul.f32 %v1757, 1.442695
        %v1759 = vpow.pop %v1758
        %v1760 = vadd.f32 %v1759, 1.0
        %v1761 = vrcp.pop %v1760
        %v1762 = vmul.f32 1.0, %v1761
        %v1763 = vtanh.pop %v1756
        %v1764 = vmul.f32 %v1762, 0.0
        %1766 = vrot.lane.b32.xlu0 %v1763, 96
        %v1767 = vpop.permute.xlu0 %1766
        %v1769 = vmul.f32 %v1762, %v1767
        %1771 = vrot.lane.b32.xlu0 %v1769, 16
        %v1772 = vpop.permute.xlu0 %1771
        %v1774 = vadd.f32 %v1764, %v1772
        %v1775 = vtanh.pop %v1774
        %1777 = vrot.lane.b32.xlu0 %v1775, 32
        %v1778 = vpop.permute.xlu0 %1777
        %v1780 = vmul.f32 %v1762, %v1778
        %v1782 = vrot.slane %v1780, 7
        %1783 = vrot.lane.b32.xlu0 %v1782, 80
        %v1784 = vpop.permute.xlu0 %1783
        %v1785 = vsel %vm836, %v1784, 0
        %1787 = vmatprep.subr.mxu0 0.0
        %1788 = vmatpush1.msra.mxu0 %v834
        %1789 = vmatprep.subr.mxu0 0.0
        %1790 = vmatpush1.msra.mxu0 %v835
        %1791 = vmatprep.subr.mxu0 0.0
        %1792 = vmatpush1.msra.mxu0 0.0
        %1793 = vmatprep.subr.mxu0 0.0
        %1794 = vmatpush1.msra.mxu0 0.0
        %1795 = vmatprep.subr.mxu0 0.0
        %1796 = vmatpush1.msra.mxu0 0.0
        %1797 = vmatprep.subr.mxu0 0.0
        %1798 = vmatpush1.msra.mxu0 0.0
        %1799 = vmatprep.subr.mxu0 0.0
        %1800 = vmatpush1.msra.mxu0 0.0
        %1801 = vmatprep.subr.mxu0 0.0
        %1802 = vmatpush1.msra.mxu0 0.0
        %1803 = vmatprep.subr.mxu0 0.0
        %1804 = vmatpush1.msra.mxu0 0.0
        %1805 = vmatprep.subr.mxu0 0.0
        %1806 = vmatpush1.msra.mxu0 0.0
        %1807 = vmatprep.subr.mxu0 0.0
        %1808 = vmatpush1.msra.mxu0 0.0
        %1809 = vmatprep.subr.mxu0 0.0
        %1810 = vmatpush1.msra.mxu0 0.0
        %1811 = vmatprep.subr.mxu0 0.0
        %1812 = vmatpush1.msra.mxu0 0.0
        %1813 = vmatprep.subr.mxu0 0.0
        %1814 = vmatpush1.msra.mxu0 0.0
        %1815 = vmatprep.subr.mxu0 0.0
        %1816 = vmatpush1.msra.mxu0 0.0
        %1817 = vmatprep.subr.mxu0 0.0
        %1818 = vmatpush1.msra.mxu0 0.0
        %1819 = vmatprep.subr.mxu0 0.0
        %1820 = vmatpush1.msra.mxu0 0.0
        %1821 = vmatprep.subr.mxu0 0.0
        %1822 = vmatpush1.msra.mxu0 0.0
        %1823 = vmatprep.subr.mxu0 0.0
        %1824 = vmatpush1.msra.mxu0 0.0
        %1825 = vmatprep.subr.mxu0 0.0
        %1826 = vmatpush1.msra.mxu0 0.0
        %1827 = vmatprep.subr.mxu0 0.0
        %1828 = vmatpush1.msra.mxu0 0.0
        %1829 = vmatprep.subr.mxu0 0.0
        %1830 = vmatpush1.msra.mxu0 0.0
        %1831 = vmatprep.subr.mxu0 0.0
        %1832 = vmatpush1.msra.mxu0 0.0
        %1833 = vmatprep.subr.mxu0 0.0
        %1834 = vmatpush1.msra.mxu0 0.0
        %1835 = vmatprep.subr.mxu0 0.0
        %1836 = vmatpush1.msra.mxu0 0.0
        %1837 = vmatprep.subr.mxu0 0.0
        %1838 = vmatpush1.msra.mxu0 0.0
        %1839 = vmatprep.subr.mxu0 0.0
        %1840 = vmatpush1.msra.mxu0 0.0
        %1841 = vmatprep.subr.mxu0 0.0
        %1842 = vmatpush1.msra.mxu0 0.0
        %1843 = vmatprep.subr.mxu0 0.0
        %1844 = vmatpush1.msra.mxu0 0.0
        %1845 = vmatprep.subr.mxu0 0.0
        %1846 = vmatpush1.msra.mxu0 0.0
        %1847 = vmatprep.subr.mxu0 0.0
        %1848 = vmatpush1.msra.mxu0 0.0
        %1849 = vmatprep.subr.mxu0 0.0
        %1850 = vmatpush1.msra.mxu0 0.0
        %1851 = vmatprep.mubr.f32.mxu0 0.0
        %1852 = vmatmul.mubr.f32.gmra.mrb[0].mxu0 %v1785
        %v1853 = vpop.f32.mrb[0].mxu0
        %v1854 = vadd.f32 0.0, %v1853
        %v1855 = vpop.f32.mrb[0].mxu0
        %1856 = vdwg.mxu0
        %v1858 = vrot.slane %v1854, 2
        %v1860 = vadd.f32 %v829, %v1858
        %v1861 = vxor.u32 %v1860, 2147483648
        %v1862 = vmul.f32 %v1861, 1.442695
        %v1863 = vpow.pop %v1862
        %v1864 = vadd.f32 %v1863, 1.0
        %v1865 = vrcp.pop %v1864
        %v1866 = vmul.f32 1.0, %v1865
        %v1867 = vtanh.pop %v1860
        %v1869 = vrot.slane %v1774, 1
        %v1871 = vmul.f32 %v1866, %v1869
        %1873 = vrot.lane.b32.xlu0 %v1867, 96
        %v1874 = vpop.permute.xlu0 %1873
        %v1876 = vmul.f32 %v1866, %v1874
        %1878 = vrot.lane.b32.xlu0 %v1876, 16
        %v1879 = vpop.permute.xlu0 %1878
        %v1881 = vadd.f32 %v1871, %v1879
        %v1882 = vtanh.pop %v1881
        %1884 = vrot.lane.b32.xlu0 %v1882, 32
        %v1885 = vpop.permute.xlu0 %1884
        %v1887 = vmul.f32 %v1866, %v1885
        %v1889 = vrot.slane %v1887, 6
        %1890 = vrot.lane.b32.xlu0 %v1889, 80
        %v1891 = vpop.permute.xlu0 %1890
        %v1892 = vsel %vm836, %v1891, 0
        %1894 = vmatprep.subr.mxu0 0.0
        %1895 = vmatpush1.msra.mxu0 %v834
        %1896 = vmatprep.subr.mxu0 0.0
        %1897 = vmatpush1.msra.mxu0 %v835
        %1898 = vmatprep.subr.mxu0 0.0
        %1899 = vmatpush1.msra.mxu0 0.0
        %1900 = vmatprep.subr.mxu0 0.0
        %1901 = vmatpush1.msra.mxu0 0.0
        %1902 = vmatprep.subr.mxu0 0.0
        %1903 = vmatpush1.msra.mxu0 0.0
        %1904 = vmatprep.subr.mxu0 0.0
        %1905 = vmatpush1.msra.mxu0 0.0
        %1906 = vmatprep.subr.mxu0 0.0
        %1907 = vmatpush1.msra.mxu0 0.0
        %1908 = vmatprep.subr.mxu0 0.0
        %1909 = vmatpush1.msra.mxu0 0.0
        %1910 = vmatprep.subr.mxu0 0.0
        %1911 = vmatpush1.msra.mxu0 0.0
        %1912 = vmatprep.subr.mxu0 0.0
        %1913 = vmatpush1.msra.mxu0 0.0
        %1914 = vmatprep.subr.mxu0 0.0
        %1915 = vmatpush1.msra.mxu0 0.0
        %1916 = vmatprep.subr.mxu0 0.0
        %1917 = vmatpush1.msra.mxu0 0.0
        %1918 = vmatprep.subr.mxu0 0.0
        %1919 = vmatpush1.msra.mxu0 0.0
        %1920 = vmatprep.subr.mxu0 0.0
        %1921 = vmatpush1.msra.mxu0 0.0
        %1922 = vmatprep.subr.mxu0 0.0
        %1923 = vmatpush1.msra.mxu0 0.0
        %1924 = vmatprep.subr.mxu0 0.0
        %1925 = vmatpush1.msra.mxu0 0.0
        %1926 = vmatprep.subr.mxu0 0.0
        %1927 = vmatpush1.msra.mxu0 0.0
        %1928 = vmatprep.subr.mxu0 0.0
        %1929 = vmatpush1.msra.mxu0 0.0
        %1930 = vmatprep.subr.mxu0 0.0
        %1931 = vmatpush1.msra.mxu0 0.0
        %1932 = vmatprep.subr.mxu0 0.0
        %1933 = vmatpush1.msra.mxu0 0.0
        %1934 = vmatprep.subr.mxu0 0.0
        %1935 = vmatpush1.msra.mxu0 0.0
        %1936 = vmatprep.subr.mxu0 0.0
        %1937 = vmatpush1.msra.mxu0 0.0
        %1938 = vmatprep.subr.mxu0 0.0
        %1939 = vmatpush1.msra.mxu0 0.0
        %1940 = vmatprep.subr.mxu0 0.0
        %1941 = vmatpush1.msra.mxu0 0.0
        %1942 = vmatprep.subr.mxu0 0.0
        %1943 = vmatpush1.msra.mxu0 0.0
        %1944 = vmatprep.subr.mxu0 0.0
        %1945 = vmatpush1.msra.mxu0 0.0
        %1946 = vmatprep.subr.mxu0 0.0
        %1947 = vmatpush1.msra.mxu0 0.0
        %1948 = vmatprep.subr.mxu0 0.0
        %1949 = vmatpush1.msra.mxu0 0.0
        %1950 = vmatprep.subr.mxu0 0.0
        %1951 = vmatpush1.msra.mxu0 0.0
        %1952 = vmatprep.subr.mxu0 0.0
        %1953 = vmatpush1.msra.mxu0 0.0
        %1954 = vmatprep.subr.mxu0 0.0
        %1955 = vmatpush1.msra.mxu0 0.0
        %1956 = vmatprep.subr.mxu0 0.0
        %1957 = vmatpush1.msra.mxu0 0.0
        %1958 = vmatprep.mubr.f32.mxu0 0.0
        %1959 = vmatmul.mubr.f32.gmra.mrb[0].mxu0 %v1892
        %v1960 = vpop.f32.mrb[0].mxu0
        %v1961 = vadd.f32 0.0, %v1960
        %v1962 = vpop.f32.mrb[0].mxu0
        %1963 = vdwg.mxu0
        %v1965 = vrot.slane %v1961, 3
        %v1967 = vadd.f32 %v829, %v1965
        %v1968 = vxor.u32 %v1967, 2147483648
        %v1969 = vmul.f32 %v1968, 1.442695
        %v1970 = vpow.pop %v1969
        %v1971 = vadd.f32 %v1970, 1.0
        %v1972 = vrcp.pop %v1971
        %v1973 = vmul.f32 1.0, %v1972
        %v1974 = vtanh.pop %v1967
        %v1976 = vrot.slane %v1881, 1
        %v1978 = vmul.f32 %v1973, %v1976
        %1980 = vrot.lane.b32.xlu0 %v1974, 96
        %v1981 = vpop.permute.xlu0 %1980
        %v1983 = vmul.f32 %v1973, %v1981
        %1985 = vrot.lane.b32.xlu0 %v1983, 16
        %v1986 = vpop.permute.xlu0 %1985
        %v1988 = vadd.f32 %v1978, %v1986
        %v1989 = vtanh.pop %v1988
        %1991 = vrot.lane.b32.xlu0 %v1989, 32
        %v1992 = vpop.permute.xlu0 %1991
        %v1994 = vmul.f32 %v1973, %v1992
        %v1996 = vrot.slane %v1994, 5
        %1997 = vrot.lane.b32.xlu0 %v1996, 80
        %v1998 = vpop.permute.xlu0 %1997
        %v1999 = vsel %vm836, %v1998, 0
        %2001 = vmatprep.subr.mxu0 0.0
        %2002 = vmatpush1.msra.mxu0 %v834
        %2003 = vmatprep.subr.mxu0 0.0
        %2004 = vmatpush1.msra.mxu0 %v835
        %2005 = vmatprep.subr.mxu0 0.0
        %2006 = vmatpush1.msra.mxu0 0.0
        %2007 = vmatprep.subr.mxu0 0.0
        %2008 = vmatpush1.msra.mxu0 0.0
        %2009 = vmatprep.subr.mxu0 0.0
        %2010 = vmatpush1.msra.mxu0 0.0
        %2011 = vmatprep.subr.mxu0 0.0
        %2012 = vmatpush1.msra.mxu0 0.0
        %2013 = vmatprep.subr.mxu0 0.0
        %2014 = vmatpush1.msra.mxu0 0.0
        %2015 = vmatprep.subr.mxu0 0.0
        %2016 = vmatpush1.msra.mxu0 0.0
        %2017 = vmatprep.subr.mxu0 0.0
        %2018 = vmatpush1.msra.mxu0 0.0
        %2019 = vmatprep.subr.mxu0 0.0
        %2020 = vmatpush1.msra.mxu0 0.0
        %2021 = vmatprep.subr.mxu0 0.0
        %2022 = vmatpush1.msra.mxu0 0.0
        %2023 = vmatprep.subr.mxu0 0.0
        %2024 = vmatpush1.msra.mxu0 0.0
        %2025 = vmatprep.subr.mxu0 0.0
        %2026 = vmatpush1.msra.mxu0 0.0
        %2027 = vmatprep.subr.mxu0 0.0
        %2028 = vmatpush1.msra.mxu0 0.0
        %2029 = vmatprep.subr.mxu0 0.0
        %2030 = vmatpush1.msra.mxu0 0.0
        %2031 = vmatprep.subr.mxu0 0.0
        %2032 = vmatpush1.msra.mxu0 0.0
        %2033 = vmatprep.subr.mxu0 0.0
        %2034 = vmatpush1.msra.mxu0 0.0
        %2035 = vmatprep.subr.mxu0 0.0
        %2036 = vmatpush1.msra.mxu0 0.0
        %2037 = vmatprep.subr.mxu0 0.0
        %2038 = vmatpush1.msra.mxu0 0.0
        %2039 = vmatprep.subr.mxu0 0.0
        %2040 = vmatpush1.msra.mxu0 0.0
        %2041 = vmatprep.subr.mxu0 0.0
        %2042 = vmatpush1.msra.mxu0 0.0
        %2043 = vmatprep.subr.mxu0 0.0
        %2044 = vmatpush1.msra.mxu0 0.0
        %2045 = vmatprep.subr.mxu0 0.0
        %2046 = vmatpush1.msra.mxu0 0.0
        %2047 = vmatprep.subr.mxu0 0.0
        %2048 = vmatpush1.msra.mxu0 0.0
        %2049 = vmatprep.subr.mxu0 0.0
        %2050 = vmatpush1.msra.mxu0 0.0
        %2051 = vmatprep.subr.mxu0 0.0
        %2052 = vmatpush1.msra.mxu0 0.0
        %2053 = vmatprep.subr.mxu0 0.0
        %2054 = vmatpush1.msra.mxu0 0.0
        %2055 = vmatprep.subr.mxu0 0.0
        %2056 = vmatpush1.msra.mxu0 0.0
        %2057 = vmatprep.subr.mxu0 0.0
        %2058 = vmatpush1.msra.mxu0 0.0
        %2059 = vmatprep.subr.mxu0 0.0
        %2060 = vmatpush1.msra.mxu0 0.0
        %2061 = vmatprep.subr.mxu0 0.0
        %2062 = vmatpush1.msra.mxu0 0.0
        %2063 = vmatprep.subr.mxu0 0.0
        %2064 = vmatpush1.msra.mxu0 0.0
        %2065 = vmatprep.mubr.f32.mxu0 0.0
        %2066 = vmatmul.mubr.f32.gmra.mrb[0].mxu0 %v1999
        %v2067 = vpop.f32.mrb[0].mxu0
        %v2068 = vadd.f32 0.0, %v2067
        %v2069 = vpop.f32.mrb[0].mxu0
        %2070 = vdwg.mxu0
        %v2072 = vrot.slane %v2068, 4
        %v2074 = vadd.f32 %v829, %v2072
        %v2075 = vxor.u32 %v2074, 2147483648
        %v2076 = vmul.f32 %v2075, 1.442695
        %v2077 = vpow.pop %v2076
        %v2078 = vadd.f32 %v2077, 1.0
        %v2079 = vrcp.pop %v2078
        %v2080 = vmul.f32 1.0, %v2079
        %v2081 = vtanh.pop %v2074
        %v2083 = vrot.slane %v1988, 1
        %v2085 = vmul.f32 %v2080, %v2083
        %2087 = vrot.lane.b32.xlu0 %v2081, 96
        %v2088 = vpop.permute.xlu0 %2087
        %v2090 = vmul.f32 %v2080, %v2088
        %2092 = vrot.lane.b32.xlu0 %v2090, 16
        %v2093 = vpop.permute.xlu0 %2092
        %v2095 = vadd.f32 %v2085, %v2093
        %v2096 = vtanh.pop %v2095
        %2098 = vrot.lane.b32.xlu0 %v2096, 32
        %v2099 = vpop.permute.xlu0 %2098
        %v2101 = vmul.f32 %v2080, %v2099
        %v2103 = vrot.slane %v2101, 4
        %2104 = vrot.lane.b32.xlu0 %v2103, 80
        %v2105 = vpop.permute.xlu0 %2104
        %v2106 = vsel %vm836, %v2105, 0
        %2108 = vmatprep.subr.mxu0 0.0
        %2109 = vmatpush1.msra.mxu0 %v834
        %2110 = vmatprep.subr.mxu0 0.0
        %2111 = vmatpush1.msra.mxu0 %v835
        %2112 = vmatprep.subr.mxu0 0.0
        %2113 = vmatpush1.msra.mxu0 0.0
        %2114 = vmatprep.subr.mxu0 0.0
        %2115 = vmatpush1.msra.mxu0 0.0
        %2116 = vmatprep.subr.mxu0 0.0
        %2117 = vmatpush1.msra.mxu0 0.0
        %2118 = vmatprep.subr.mxu0 0.0
        %2119 = vmatpush1.msra.mxu0 0.0
        %2120 = vmatprep.subr.mxu0 0.0
        %2121 = vmatpush1.msra.mxu0 0.0
        %2122 = vmatprep.subr.mxu0 0.0
        %2123 = vmatpush1.msra.mxu0 0.0
        %2124 = vmatprep.subr.mxu0 0.0
        %2125 = vmatpush1.msra.mxu0 0.0
        %2126 = vmatprep.subr.mxu0 0.0
        %2127 = vmatpush1.msra.mxu0 0.0
        %2128 = vmatprep.subr.mxu0 0.0
        %2129 = vmatpush1.msra.mxu0 0.0
        %2130 = vmatprep.subr.mxu0 0.0
        %2131 = vmatpush1.msra.mxu0 0.0
        %2132 = vmatprep.subr.mxu0 0.0
        %2133 = vmatpush1.msra.mxu0 0.0
        %2134 = vmatprep.subr.mxu0 0.0
        %2135 = vmatpush1.msra.mxu0 0.0
        %2136 = vmatprep.subr.mxu0 0.0
        %2137 = vmatpush1.msra.mxu0 0.0
        %2138 = vmatprep.subr.mxu0 0.0
        %2139 = vmatpush1.msra.mxu0 0.0
        %2140 = vmatprep.subr.mxu0 0.0
        %2141 = vmatpush1.msra.mxu0 0.0
        %2142 = vmatprep.subr.mxu0 0.0
        %2143 = vmatpush1.msra.mxu0 0.0
        %2144 = vmatprep.subr.mxu0 0.0
        %2145 = vmatpush1.msra.mxu0 0.0
        %2146 = vmatprep.subr.mxu0 0.0
        %2147 = vmatpush1.msra.mxu0 0.0
        %2148 = vmatprep.subr.mxu0 0.0
        %2149 = vmatpush1.msra.mxu0 0.0
        %2150 = vmatprep.subr.mxu0 0.0
        %2151 = vmatpush1.msra.mxu0 0.0
        %2152 = vmatprep.subr.mxu0 0.0
        %2153 = vmatpush1.msra.mxu0 0.0
        %2154 = vmatprep.subr.mxu0 0.0
        %2155 = vmatpush1.msra.mxu0 0.0
        %2156 = vmatprep.subr.mxu0 0.0
        %2157 = vmatpush1.msra.mxu0 0.0
        %2158 = vmatprep.subr.mxu0 0.0
        %2159 = vmatpush1.msra.mxu0 0.0
        %2160 = vmatprep.subr.mxu0 0.0
        %2161 = vmatpush1.msra.mxu0 0.0
        %2162 = vmatprep.subr.mxu0 0.0
        %2163 = vmatpush1.msra.mxu0 0.0
        %2164 = vmatprep.subr.mxu0 0.0
        %2165 = vmatpush1.msra.mxu0 0.0
        %2166 = vmatprep.subr.mxu0 0.0
        %2167 = vmatpush1.msra.mxu0 0.0
        %2168 = vmatprep.subr.mxu0 0.0
        %2169 = vmatpush1.msra.mxu0 0.0
        %2170 = vmatprep.subr.mxu0 0.0
        %2171 = vmatpush1.msra.mxu0 0.0
        %2172 = vmatprep.mubr.f32.mxu0 0.0
        %2173 = vmatmul.mubr.f32.gmra.mrb[0].mxu0 %v2106
        %v2174 = vpop.f32.mrb[0].mxu0
        %v2175 = vadd.f32 0.0, %v2174
        %v2176 = vpop.f32.mrb[0].mxu0
        %2177 = vdwg.mxu0
        %v2179 = vrot.slane %v2175, 5
        %v2181 = vadd.f32 %v829, %v2179
        %v2182 = vxor.u32 %v2181, 2147483648
        %v2183 = vmul.f32 %v2182, 1.442695
        %v2184 = vpow.pop %v2183
        %v2185 = vadd.f32 %v2184, 1.0
        %v2186 = vrcp.pop %v2185
        %v2187 = vmul.f32 1.0, %v2186
        %v2188 = vtanh.pop %v2181
        %v2190 = vrot.slane %v2095, 1
        %v2192 = vmul.f32 %v2187, %v2190
        %2194 = vrot.lane.b32.xlu0 %v2188, 96
        %v2195 = vpop.permute.xlu0 %2194
        %v2197 = vmul.f32 %v2187, %v2195
        %2199 = vrot.lane.b32.xlu0 %v2197, 16
        %v2200 = vpop.permute.xlu0 %2199
        %v2202 = vadd.f32 %v2192, %v2200
        %v2203 = vtanh.pop %v2202
        %2205 = vrot.lane.b32.xlu0 %v2203, 32
        %v2206 = vpop.permute.xlu0 %2205
        %v2208 = vmul.f32 %v2187, %v2206
        %v2210 = vrot.slane %v2208, 3
        %2211 = vrot.lane.b32.xlu0 %v2210, 80
        %v2212 = vpop.permute.xlu0 %2211
        %v2213 = vsel %vm836, %v2212, 0
        %2215 = vmatprep.subr.mxu0 0.0
        %2216 = vmatpush1.msra.mxu0 %v834
        %2217 = vmatprep.subr.mxu0 0.0
        %2218 = vmatpush1.msra.mxu0 %v835
        %2219 = vmatprep.subr.mxu0 0.0
        %2220 = vmatpush1.msra.mxu0 0.0
        %2221 = vmatprep.subr.mxu0 0.0
        %2222 = vmatpush1.msra.mxu0 0.0
        %2223 = vmatprep.subr.mxu0 0.0
        %2224 = vmatpush1.msra.mxu0 0.0
        %2225 = vmatprep.subr.mxu0 0.0
        %2226 = vmatpush1.msra.mxu0 0.0
        %2227 = vmatprep.subr.mxu0 0.0
        %2228 = vmatpush1.msra.mxu0 0.0
        %2229 = vmatprep.subr.mxu0 0.0
        %2230 = vmatpush1.msra.mxu0 0.0
        %2231 = vmatprep.subr.mxu0 0.0
        %2232 = vmatpush1.msra.mxu0 0.0
        %2233 = vmatprep.subr.mxu0 0.0
        %2234 = vmatpush1.msra.mxu0 0.0
        %2235 = vmatprep.subr.mxu0 0.0
        %2236 = vmatpush1.msra.mxu0 0.0
        %2237 = vmatprep.subr.mxu0 0.0
        %2238 = vmatpush1.msra.mxu0 0.0
        %2239 = vmatprep.subr.mxu0 0.0
        %2240 = vmatpush1.msra.mxu0 0.0
        %2241 = vmatprep.subr.mxu0 0.0
        %2242 = vmatpush1.msra.mxu0 0.0
        %2243 = vmatprep.subr.mxu0 0.0
        %2244 = vmatpush1.msra.mxu0 0.0
        %2245 = vmatprep.subr.mxu0 0.0
        %2246 = vmatpush1.msra.mxu0 0.0
        %2247 = vmatprep.subr.mxu0 0.0
        %2248 = vmatpush1.msra.mxu0 0.0
        %2249 = vmatprep.subr.mxu0 0.0
        %2250 = vmatpush1.msra.mxu0 0.0
        %2251 = vmatprep.subr.mxu0 0.0
        %2252 = vmatpush1.msra.mxu0 0.0
        %2253 = vmatprep.subr.mxu0 0.0
        %2254 = vmatpush1.msra.mxu0 0.0
        %2255 = vmatprep.subr.mxu0 0.0
        %2256 = vmatpush1.msra.mxu0 0.0
        %2257 = vmatprep.subr.mxu0 0.0
        %2258 = vmatpush1.msra.mxu0 0.0
        %2259 = vmatprep.subr.mxu0 0.0
        %2260 = vmatpush1.msra.mxu0 0.0
        %2261 = vmatprep.subr.mxu0 0.0
        %2262 = vmatpush1.msra.mxu0 0.0
        %2263 = vmatprep.subr.mxu0 0.0
        %2264 = vmatpush1.msra.mxu0 0.0
        %2265 = vmatprep.subr.mxu0 0.0
        %2266 = vmatpush1.msra.mxu0 0.0
        %2267 = vmatprep.subr.mxu0 0.0
        %2268 = vmatpush1.msra.mxu0 0.0
        %2269 = vmatprep.subr.mxu0 0.0
        %2270 = vmatpush1.msra.mxu0 0.0
        %2271 = vmatprep.subr.mxu0 0.0
        %2272 = vmatpush1.msra.mxu0 0.0
        %2273 = vmatprep.subr.mxu0 0.0
        %2274 = vmatpush1.msra.mxu0 0.0
        %2275 = vmatprep.subr.mxu0 0.0
        %2276 = vmatpush1.msra.mxu0 0.0
        %2277 = vmatprep.subr.mxu0 0.0
        %2278 = vmatpush1.msra.mxu0 0.0
        %2279 = vmatprep.mubr.f32.mxu0 0.0
        %2280 = vmatmul.mubr.f32.gmra.mrb[0].mxu0 %v2213
        %v2281 = vpop.f32.mrb[0].mxu0
        %v2282 = vadd.f32 0.0, %v2281
        %v2283 = vpop.f32.mrb[0].mxu0
        %2284 = vdwg.mxu0
        %v2286 = vrot.slane %v2282, 6
        %v2288 = vadd.f32 %v829, %v2286
        %v2289 = vxor.u32 %v2288, 2147483648
        %v2290 = vmul.f32 %v2289, 1.442695
        %v2291 = vpow.pop %v2290
        %v2292 = vadd.f32 %v2291, 1.0
        %v2293 = vrcp.pop %v2292
        %v2294 = vmul.f32 1.0, %v2293
        %v2295 = vtanh.pop %v2288
        %v2297 = vrot.slane %v2202, 1
        %v2299 = vmul.f32 %v2294, %v2297
        %2301 = vrot.lane.b32.xlu0 %v2295, 96
        %v2302 = vpop.permute.xlu0 %2301
        %v2304 = vmul.f32 %v2294, %v2302
        %2306 = vrot.lane.b32.xlu0 %v2304, 16
        %v2307 = vpop.permute.xlu0 %2306
        %v2309 = vadd.f32 %v2299, %v2307
        %v2310 = vtanh.pop %v2309
        %2312 = vrot.lane.b32.xlu0 %v2310, 32
        %v2313 = vpop.permute.xlu0 %2312
        %v2315 = vmul.f32 %v2294, %v2313
        %v2317 = vrot.slane %v2315, 2
        %2318 = vrot.lane.b32.xlu0 %v2317, 80
        %v2319 = vpop.permute.xlu0 %2318
        %v2320 = vsel %vm836, %v2319, 0
        %2322 = vmatprep.subr.mxu0 0.0
        %2323 = vmatpush1.msra.mxu0 %v834
        %2324 = vmatprep.subr.mxu0 0.0
        %2325 = vmatpush1.msra.mxu0 %v835
        %2326 = vmatprep.subr.mxu0 0.0
        %2327 = vmatpush1.msra.mxu0 0.0
        %2328 = vmatprep.subr.mxu0 0.0
        %2329 = vmatpush1.msra.mxu0 0.0
        %2330 = vmatprep.subr.mxu0 0.0
        %2331 = vmatpush1.msra.mxu0 0.0
        %2332 = vmatprep.subr.mxu0 0.0
        %2333 = vmatpush1.msra.mxu0 0.0
        %2334 = vmatprep.subr.mxu0 0.0
        %2335 = vmatpush1.msra.mxu0 0.0
        %2336 = vmatprep.subr.mxu0 0.0
        %2337 = vmatpush1.msra.mxu0 0.0
        %2338 = vmatprep.subr.mxu0 0.0
        %2339 = vmatpush1.msra.mxu0 0.0
        %2340 = vmatprep.subr.mxu0 0.0
        %2341 = vmatpush1.msra.mxu0 0.0
        %2342 = vmatprep.subr.mxu0 0.0
        %2343 = vmatpush1.msra.mxu0 0.0
        %2344 = vmatprep.subr.mxu0 0.0
        %2345 = vmatpush1.msra.mxu0 0.0
        %2346 = vmatprep.subr.mxu0 0.0
        %2347 = vmatpush1.msra.mxu0 0.0
        %2348 = vmatprep.subr.mxu0 0.0
        %2349 = vmatpush1.msra.mxu0 0.0
        %2350 = vmatprep.subr.mxu0 0.0
        %2351 = vmatpush1.msra.mxu0 0.0
        %2352 = vmatprep.subr.mxu0 0.0
        %2353 = vmatpush1.msra.mxu0 0.0
        %2354 = vmatprep.subr.mxu0 0.0
        %2355 = vmatpush1.msra.mxu0 0.0
        %2356 = vmatprep.subr.mxu0 0.0
        %2357 = vmatpush1.msra.mxu0 0.0
        %2358 = vmatprep.subr.mxu0 0.0
        %2359 = vmatpush1.msra.mxu0 0.0
        %2360 = vmatprep.subr.mxu0 0.0
        %2361 = vmatpush1.msra.mxu0 0.0
        %2362 = vmatprep.subr.mxu0 0.0
        %2363 = vmatpush1.msra.mxu0 0.0
        %2364 = vmatprep.subr.mxu0 0.0
        %2365 = vmatpush1.msra.mxu0 0.0
        %2366 = vmatprep.subr.mxu0 0.0
        %2367 = vmatpush1.msra.mxu0 0.0
        %2368 = vmatprep.subr.mxu0 0.0
        %2369 = vmatpush1.msra.mxu0 0.0
        %2370 = vmatprep.subr.mxu0 0.0
        %2371 = vmatpush1.msra.mxu0 0.0
        %2372 = vmatprep.subr.mxu0 0.0
        %2373 = vmatpush1.msra.mxu0 0.0
        %2374 = vmatprep.subr.mxu0 0.0
        %2375 = vmatpush1.msra.mxu0 0.0
        %2376 = vmatprep.subr.mxu0 0.0
        %2377 = vmatpush1.msra.mxu0 0.0
        %2378 = vmatprep.subr.mxu0 0.0
        %2379 = vmatpush1.msra.mxu0 0.0
        %2380 = vmatprep.subr.mxu0 0.0
        %2381 = vmatpush1.msra.mxu0 0.0
        %2382 = vmatprep.subr.mxu0 0.0
        %2383 = vmatpush1.msra.mxu0 0.0
        %2384 = vmatprep.subr.mxu0 0.0
        %2385 = vmatpush1.msra.mxu0 0.0
        %2386 = vmatprep.mubr.f32.mxu0 0.0
        %2387 = vmatmul.mubr.f32.gmra.mrb[0].mxu0 %v2320
        %v2388 = vpop.f32.mrb[0].mxu0
        %v2389 = vadd.f32 0.0, %v2388
        %v2390 = vpop.f32.mrb[0].mxu0
        %2391 = vdwg.mxu0
        %v2393 = vrot.slane %v2389, 7
        %v2395 = vadd.f32 %v829, %v2393
        %v2396 = vxor.u32 %v2395, 2147483648
        %v2397 = vmul.f32 %v2396, 1.442695
        %v2398 = vpow.pop %v2397
        %v2399 = vadd.f32 %v2398, 1.0
        %v2400 = vrcp.pop %v2399
        %v2401 = vmul.f32 1.0, %v2400
        %v2402 = vtanh.pop %v2395
        %v2404 = vrot.slane %v2309, 1
        %v2406 = vmul.f32 %v2401, %v2404
        %2408 = vrot.lane.b32.xlu0 %v2402, 96
        %v2409 = vpop.permute.xlu0 %2408
        %v2411 = vmul.f32 %v2401, %v2409
        %2413 = vrot.lane.b32.xlu0 %v2411, 16
        %v2414 = vpop.permute.xlu0 %2413
        %v2416 = vadd.f32 %v2406, %v2414
        %v2417 = vtanh.pop %v2416
        %2419 = vrot.lane.b32.xlu0 %v2417, 32
        %v2420 = vpop.permute.xlu0 %2419
        %v2422 = vmul.f32 %v2401, %v2420
        %v2424 = vrot.slane %v2422, 1
        %2425 = vrot.lane.b32.xlu0 %v2424, 80
        %v2426 = vpop.permute.xlu0 %2425
        %v2427 = vsel %vm836, %v2426, 0
        %2429 = vmatprep.subr.mxu0 0.0
        %2430 = vmatpush1.msra.mxu0 %v834
        %2431 = vmatprep.subr.mxu0 0.0
        %2432 = vmatpush1.msra.mxu0 %v835
        %2433 = vmatprep.subr.mxu0 0.0
        %2434 = vmatpush1.msra.mxu0 0.0
        %2435 = vmatprep.subr.mxu0 0.0
        %2436 = vmatpush1.msra.mxu0 0.0
        %2437 = vmatprep.subr.mxu0 0.0
        %2438 = vmatpush1.msra.mxu0 0.0
        %2439 = vmatprep.subr.mxu0 0.0
        %2440 = vmatpush1.msra.mxu0 0.0
        %2441 = vmatprep.subr.mxu0 0.0
        %2442 = vmatpush1.msra.mxu0 0.0
        %2443 = vmatprep.subr.mxu0 0.0
        %2444 = vmatpush1.msra.mxu0 0.0
        %2445 = vmatprep.subr.mxu0 0.0
        %2446 = vmatpush1.msra.mxu0 0.0
        %2447 = vmatprep.subr.mxu0 0.0
        %2448 = vmatpush1.msra.mxu0 0.0
        %2449 = vmatprep.subr.mxu0 0.0
        %2450 = vmatpush1.msra.mxu0 0.0
        %2451 = vmatprep.subr.mxu0 0.0
        %2452 = vmatpush1.msra.mxu0 0.0
        %2453 = vmatprep.subr.mxu0 0.0
        %2454 = vmatpush1.msra.mxu0 0.0
        %2455 = vmatprep.subr.mxu0 0.0
        %2456 = vmatpush1.msra.mxu0 0.0
        %2457 = vmatprep.subr.mxu0 0.0
        %2458 = vmatpush1.msra.mxu0 0.0
        %2459 = vmatprep.subr.mxu0 0.0
        %2460 = vmatpush1.msra.mxu0 0.0
        %2461 = vmatprep.subr.mxu0 0.0
        %2462 = vmatpush1.msra.mxu0 0.0
        %2463 = vmatprep.subr.mxu0 0.0
        %2464 = vmatpush1.msra.mxu0 0.0
        %2465 = vmatprep.subr.mxu0 0.0
        %2466 = vmatpush1.msra.mxu0 0.0
        %2467 = vmatprep.subr.mxu0 0.0
        %2468 = vmatpush1.msra.mxu0 0.0
        %2469 = vmatprep.subr.mxu0 0.0
        %2470 = vmatpush1.msra.mxu0 0.0
        %2471 = vmatprep.subr.mxu0 0.0
        %2472 = vmatpush1.msra.mxu0 0.0
        %2473 = vmatprep.subr.mxu0 0.0
        %2474 = vmatpush1.msra.mxu0 0.0
        %2475 = vmatprep.subr.mxu0 0.0
        %2476 = vmatpush1.msra.mxu0 0.0
        %2477 = vmatprep.subr.mxu0 0.0
        %2478 = vmatpush1.msra.mxu0 0.0
        %2479 = vmatprep.subr.mxu0 0.0
        %2480 = vmatpush1.msra.mxu0 0.0
        %2481 = vmatprep.subr.mxu0 0.0
        %2482 = vmatpush1.msra.mxu0 0.0
        %2483 = vmatprep.subr.mxu0 0.0
        %2484 = vmatpush1.msra.mxu0 0.0
        %2485 = vmatprep.subr.mxu0 0.0
        %2486 = vmatpush1.msra.mxu0 0.0
        %2487 = vmatprep.subr.mxu0 0.0
        %2488 = vmatpush1.msra.mxu0 0.0
        %2489 = vmatprep.subr.mxu0 0.0
        %2490 = vmatpush1.msra.mxu0 0.0
        %2491 = vmatprep.subr.mxu0 0.0
        %2492 = vmatpush1.msra.mxu0 0.0
        %2493 = vmatprep.mubr.f32.mxu0 0.0
        %2494 = vmatmul.mubr.f32.gmra.mrb[0].mxu0 %v2427
        %v2495 = vpop.f32.mrb[0].mxu0
        %v2496 = vadd.f32 0.0, %v2495
        %v2497 = vpop.f32.mrb[0].mxu0
        %2498 = vdwg.mxu0
        %v2499 = vadd.f32 %v829, %v2496
        %v2500 = vxor.u32 %v2499, 2147483648
        %v2501 = vmul.f32 %v2500, 1.442695
        %v2502 = vpow.pop %v2501
        %v2503 = vadd.f32 %v2502, 1.0
        %v2504 = vrcp.pop %v2503
        %v2505 = vmul.f32 1.0, %v2504
        %v2506 = vtanh.pop %v2499
        %v2508 = vrot.slane %v2416, 1
        %v2510 = vmul.f32 %v2505, %v2508
        %2512 = vrot.lane.b32.xlu0 %v2506, 96
        %v2513 = vpop.permute.xlu0 %2512
        %v2515 = vmul.f32 %v2505, %v2513
        %2517 = vrot.lane.b32.xlu0 %v2515, 16
        %v2518 = vpop.permute.xlu0 %2517
        %v2520 = vadd.f32 %v2510, %v2518
        %v2521 = vtanh.pop %v2520
        %2523 = vrot.lane.b32.xlu0 %v2521, 32
        %v2524 = vpop.permute.xlu0 %2523
        %v2526 = vmul.f32 %v2505, %v2524
        %vm2527 = vcmask 1040384
        %v2528 = vsel %vm2527, %v934, %v1040
        %vm2529 = vcmask 1041408
        %v2530 = vsel %vm2529, %v2528, %v1147
        %vm2531 = vcmask 1042432
        %v2532 = vsel %vm2531, %v2530, %v1254
        %vm2533 = vcmask 1043456
        %v2534 = vsel %vm2533, %v2532, %v1361
        %vm2535 = vcmask 1044480
        %v2536 = vsel %vm2535, %v2534, %v1468
        %vm2537 = vcmask 1045504
        %v2538 = vsel %vm2537, %v2536, %v1575
        %vm2539 = vcmask 1046528
        %v2540 = vsel %vm2539, %v2538, %v1682
        %v2541 = vsel %vm2527, %v2526, %v2422
        %v2542 = vsel %vm2529, %v2541, %v2315
        %v2543 = vsel %vm2531, %v2542, %v2208
        %v2544 = vsel %vm2533, %v2543, %v2101
        %v2545 = vsel %vm2535, %v2544, %v1994
        %v2546 = vsel %vm2537, %v2545, %v1887
        %v2547 = vsel %vm2539, %v2546, %v1780
        %2549 = vrot.lane.b32.xlu0 %v2540, 80
        %v2550 = vpop.permute.xlu0 %2549
        %2553 = vrot.lane.b32.xlu0 %v2547, 96
        %v2554 = vpop.permute.xlu0 %2553
        %v2556 = vsel %vm836, %v2550, %v2554
        %vm2557 = vcmask 7168
        %v2558 = vsel %vm2557, %v665, 0.0
        %v2559 = vrot.slane %v2558, 4
        %v2560 = vadd.f32 %v2558, %v2559
        %v2561 = vrot.slane %v2560, 2
        %v2562 = vadd.f32 %v2560, %v2561
        %v2563 = vrot.slane %v2562, 1
        %v2564 = vadd.f32 %v2562, %v2563
        %v2565 = vmax.f32 %v2564, 1.0
        %2567 = vset.pattern.permute.xlu0 0
        %2568 = vperm.xlu0 %2567, %v665
        %v2569 = vpop.permute.xlu0 %2568
        %v2571 = vmul.f32 %v664, %v2569
        %v2572 = vsel %vm677, %v2571, 0.0
        %v2573 = vrot.slane %v2572, 4
        %v2574 = vadd.f32 %v2572, %v2573
        %v2575 = vrot.slane %v2574, 2
        %v2576 = vadd.f32 %v2574, %v2575
        %v2577 = vrot.slane %v2576, 1
        %v2578 = vadd.f32 %v2576, %v2577
        %2580 = vset.pattern.permute.xlu0 0
        %2581 = vperm.xlu0 %2580, %v2565
        %v2582 = vpop.permute.xlu0 %2581
        %v2584 = vrcp.pop %v2582
        %v2585 = vmul.f32 %v2578, %v2584
        %v2586 = vld [vmem:[%s13] sm:$0xff]
        %v2587 = vld [vmem:[%s13 + $0x8] sm:$0xff]
        %v2588 = vld [vmem:[%s13 + $0x10] sm:$0xff]
        %v2589 = vld [vmem:[%s13 + $0x18] sm:$0xff]
        %v2590 = vld [vmem:[%s14] sm:$0x1]
        %v2592 = vsel %vm677, %v2585, 0
        %2594 = vmatprep.subr.mxu0 0.0
        %2595 = vmatpush1.msra.mxu0 %v2586
        %2596 = vmatprep.subr.mxu0 0.0
        %2597 = vmatpush1.msra.mxu0 %v2587
        %2598 = vmatprep.subr.mxu0 0.0
        %2599 = vmatpush1.msra.mxu0 %v2588
        %2600 = vmatprep.subr.mxu0 0.0
        %2601 = vmatpush1.msra.mxu0 %v2589
        %2602 = vmatprep.subr.mxu0 0.0
        %2603 = vmatpush1.msra.mxu0 0.0
        %2604 = vmatprep.subr.mxu0 0.0
        %2605 = vmatpush1.msra.mxu0 0.0
        %2606 = vmatprep.subr.mxu0 0.0
        %2607 = vmatpush1.msra.mxu0 0.0
        %2608 = vmatprep.subr.mxu0 0.0
        %2609 = vmatpush1.msra.mxu0 0.0
        %2610 = vmatprep.subr.mxu0 0.0
        %2611 = vmatpush1.msra.mxu0 0.0
        %2612 = vmatprep.subr.mxu0 0.0
        %2613 = vmatpush1.msra.mxu0 0.0
        %2614 = vmatprep.subr.mxu0 0.0
        %2615 = vmatpush1.msra.mxu0 0.0
        %2616 = vmatprep.subr.mxu0 0.0
        %2617 = vmatpush1.msra.mxu0 0.0
        %2618 = vmatprep.subr.mxu0 0.0
        %2619 = vmatpush1.msra.mxu0 0.0
        %2620 = vmatprep.subr.mxu0 0.0
        %2621 = vmatpush1.msra.mxu0 0.0
        %2622 = vmatprep.subr.mxu0 0.0
        %2623 = vmatpush1.msra.mxu0 0.0
        %2624 = vmatprep.subr.mxu0 0.0
        %2625 = vmatpush1.msra.mxu0 0.0
        %2626 = vmatprep.subr.mxu0 0.0
        %2627 = vmatpush1.msra.mxu0 0.0
        %2628 = vmatprep.subr.mxu0 0.0
        %2629 = vmatpush1.msra.mxu0 0.0
        %2630 = vmatprep.subr.mxu0 0.0
        %2631 = vmatpush1.msra.mxu0 0.0
        %2632 = vmatprep.subr.mxu0 0.0
        %2633 = vmatpush1.msra.mxu0 0.0
        %2634 = vmatprep.subr.mxu0 0.0
        %2635 = vmatpush1.msra.mxu0 0.0
        %2636 = vmatprep.subr.mxu0 0.0
        %2637 = vmatpush1.msra.mxu0 0.0
        %2638 = vmatprep.subr.mxu0 0.0
        %2639 = vmatpush1.msra.mxu0 0.0
        %2640 = vmatprep.subr.mxu0 0.0
        %2641 = vmatpush1.msra.mxu0 0.0
        %2642 = vmatprep.subr.mxu0 0.0
        %2643 = vmatpush1.msra.mxu0 0.0
        %2644 = vmatprep.subr.mxu0 0.0
        %2645 = vmatpush1.msra.mxu0 0.0
        %2646 = vmatprep.subr.mxu0 0.0
        %2647 = vmatpush1.msra.mxu0 0.0
        %2648 = vmatprep.subr.mxu0 0.0
        %2649 = vmatpush1.msra.mxu0 0.0
        %2650 = vmatprep.subr.mxu0 0.0
        %2651 = vmatpush1.msra.mxu0 0.0
        %2652 = vmatprep.subr.mxu0 0.0
        %2653 = vmatpush1.msra.mxu0 0.0
        %2654 = vmatprep.subr.mxu0 0.0
        %2655 = vmatpush1.msra.mxu0 0.0
        %2656 = vmatprep.subr.mxu0 0.0
        %2657 = vmatpush1.msra.mxu0 0.0
        %2658 = vmatprep.mubr.f32.mxu0 0.0
        %2659 = vmatmul.mubr.f32.gmra.mrb[0].mxu0 %v2592
        %v2660 = vpop.f32.mrb[0].mxu0
        %v2661 = vadd.f32 %v2590, %v2660
        %v2662 = vpop.f32.mrb[0].mxu0
        %2663 = vdwg.mxu0
        %v2664 = vld [vmem:[%s11] sm:$0xff]
        %v2665 = vld [vmem:[%s11 + $0x8] sm:$0xff]
        %v2666 = vld [vmem:[%s11 + $0x10] sm:$0xff]
        %v2667 = vld [vmem:[%s11 + $0x18] sm:$0xff]
        %v2668 = vld [vmem:[%s12] sm:$0x1]
        %v2670 = vlaneseq
        %v2671 = vshrl.u32 %v2670, 7
        %v2672 = vsub.s32 0, %v2671
        %v2673 = vrot.slane %v2668, %v2672
        %v2676 = vsel %vm677, %v2556, 0
        %2678 = vmatprep.subr.mxu0 0.0
        %2679 = vmatpush1.msra.mxu0 %v2664
        %2680 = vmatprep.subr.mxu0 0.0
        %2681 = vmatpush1.msra.mxu0 %v2665
        %2682 = vmatprep.subr.mxu0 0.0
        %2683 = vmatpush1.msra.mxu0 %v2666
        %2684 = vmatprep.subr.mxu0 0.0
        %2685 = vmatpush1.msra.mxu0 %v2667
        %2686 = vmatprep.subr.mxu0 0.0
        %2687 = vmatpush1.msra.mxu0 0.0
        %2688 = vmatprep.subr.mxu0 0.0
        %2689 = vmatpush1.msra.mxu0 0.0
        %2690 = vmatprep.subr.mxu0 0.0
        %2691 = vmatpush1.msra.mxu0 0.0
        %2692 = vmatprep.subr.mxu0 0.0
        %2693 = vmatpush1.msra.mxu0 0.0
        %2694 = vmatprep.subr.mxu0 0.0
        %2695 = vmatpush1.msra.mxu0 0.0
        %2696 = vmatprep.subr.mxu0 0.0
        %2697 = vmatpush1.msra.mxu0 0.0
        %2698 = vmatprep.subr.mxu0 0.0
        %2699 = vmatpush1.msra.mxu0 0.0
        %2700 = vmatprep.subr.mxu0 0.0
        %2701 = vmatpush1.msra.mxu0 0.0
        %2702 = vmatprep.subr.mxu0 0.0
        %2703 = vmatpush1.msra.mxu0 0.0
        %2704 = vmatprep.subr.mxu0 0.0
        %2705 = vmatpush1.msra.mxu0 0.0
        %2706 = vmatprep.subr.mxu0 0.0
        %2707 = vmatpush1.msra.mxu0 0.0
        %2708 = vmatprep.subr.mxu0 0.0
        %2709 = vmatpush1.msra.mxu0 0.0
        %2710 = vmatprep.subr.mxu0 0.0
        %2711 = vmatpush1.msra.mxu0 0.0
        %2712 = vmatprep.subr.mxu0 0.0
        %2713 = vmatpush1.msra.mxu0 0.0
        %2714 = vmatprep.subr.mxu0 0.0
        %2715 = vmatpush1.msra.mxu0 0.0
        %2716 = vmatprep.subr.mxu0 0.0
        %2717 = vmatpush1.msra.mxu0 0.0
        %2718 = vmatprep.subr.mxu0 0.0
        %2719 = vmatpush1.msra.mxu0 0.0
        %2720 = vmatprep.subr.mxu0 0.0
        %2721 = vmatpush1.msra.mxu0 0.0
        %2722 = vmatprep.subr.mxu0 0.0
        %2723 = vmatpush1.msra.mxu0 0.0
        %2724 = vmatprep.subr.mxu0 0.0
        %2725 = vmatpush1.msra.mxu0 0.0
        %2726 = vmatprep.subr.mxu0 0.0
        %2727 = vmatpush1.msra.mxu0 0.0
        %2728 = vmatprep.subr.mxu0 0.0
        %2729 = vmatpush1.msra.mxu0 0.0
        %2730 = vmatprep.subr.mxu0 0.0
        %2731 = vmatpush1.msra.mxu0 0.0
        %2732 = vmatprep.subr.mxu0 0.0
        %2733 = vmatpush1.msra.mxu0 0.0
        %2734 = vmatprep.subr.mxu0 0.0
        %2735 = vmatpush1.msra.mxu0 0.0
        %2736 = vmatprep.subr.mxu0 0.0
        %2737 = vmatpush1.msra.mxu0 0.0
        %2738 = vmatprep.subr.mxu0 0.0
        %2739 = vmatpush1.msra.mxu0 0.0
        %2740 = vmatprep.subr.mxu0 0.0
        %2741 = vmatpush1.msra.mxu0 0.0
        %2742 = vmatprep.mubr.f32.mxu0 0.0
        %2743 = vmatmul.mubr.f32.gmra.mrb[0].mxu0 %v2676
        %v2744 = vpop.f32.mrb[0].mxu0
        %v2745 = vadd.f32 %v2673, %v2744
        %v2746 = vpop.f32.mrb[0].mxu0
        %2747 = vdwg.mxu0
        %v2748 = vlaneseq
        %v2749 = vshrl.u32 %v2748, 7
        %v2750 = vsub.s32 0, %v2749
        %v2751 = vrot.slane %v2661, %v2750
        %v2752 = vadd.f32 %v2745, %v2751
        %v2753 = vtanh.pop %v2752
        %v2754 = vld [vmem:[%s15] sm:$0xff]
        %v2755 = vld [vmem:[%s15 + $0x8] sm:$0xff]
        %v2756 = vld [vmem:[%s15 + $0x10] sm:$0xff]
        %v2757 = vld [vmem:[%s15 + $0x18] sm:$0xff]
        %v2758 = vld [vmem:[%s15 + $0x20] sm:$0xff]
        %v2759 = vld [vmem:[%s15 + $0x28] sm:$0xff]
        %v2760 = vld [vmem:[%s15 + $0x30] sm:$0xff]
        %v2761 = vld [vmem:[%s15 + $0x38] sm:$0xff]
        %v2762 = vld [vmem:[%s15 + $0x40] sm:$0xff]
        %v2763 = vld [vmem:[%s15 + $0x48] sm:$0xff]
        %v2764 = vld [vmem:[%s15 + $0x50] sm:$0xff]
        %v2765 = vld [vmem:[%s15 + $0x58] sm:$0xff]
        %v2766 = vld [vmem:[%s15 + $0x60] sm:$0xff]
        %v2767 = vld [vmem:[%s15 + $0x68] sm:$0xff]
        %v2768 = vld [vmem:[%s15 + $0x70] sm:$0xff]
        %v2769 = vld [vmem:[%s15 + $0x78] sm:$0xff]
        %v2770 = vld [vmem:[%s16] sm:$0x1]
        %v2772 = vlaneseq
        %v2773 = vshrl.u32 %v2772, 7
        %v2774 = vsub.s32 0, %v2773
        %v2775 = vrot.slane %v2770, %v2774
        %2777 = vmatprep.subr.mxu0 0.0
        %2778 = vmatpush1.msra.mxu0 %v2754
        %2779 = vmatprep.subr.mxu0 0.0
        %2780 = vmatpush1.msra.mxu0 %v2755
        %2781 = vmatprep.subr.mxu0 0.0
        %2782 = vmatpush1.msra.mxu0 %v2756
        %2783 = vmatprep.subr.mxu0 0.0
        %2784 = vmatpush1.msra.mxu0 %v2757
        %2785 = vmatprep.subr.mxu0 0.0
        %2786 = vmatpush1.msra.mxu0 %v2758
        %2787 = vmatprep.subr.mxu0 0.0
        %2788 = vmatpush1.msra.mxu0 %v2759
        %2789 = vmatprep.subr.mxu0 0.0
        %2790 = vmatpush1.msra.mxu0 %v2760
        %2791 = vmatprep.subr.mxu0 0.0
        %2792 = vmatpush1.msra.mxu0 %v2761
        %2793 = vmatprep.subr.mxu0 0.0
        %2794 = vmatpush1.msra.mxu0 %v2762
        %2795 = vmatprep.subr.mxu0 0.0
        %2796 = vmatpush1.msra.mxu0 %v2763
        %2797 = vmatprep.subr.mxu0 0.0
        %2798 = vmatpush1.msra.mxu0 %v2764
        %2799 = vmatprep.subr.mxu0 0.0
        %2800 = vmatpush1.msra.mxu0 %v2765
        %2801 = vmatprep.subr.mxu0 0.0
        %2802 = vmatpush1.msra.mxu0 %v2766
        %2803 = vmatprep.subr.mxu0 0.0
        %2804 = vmatpush1.msra.mxu0 %v2767
        %2805 = vmatprep.subr.mxu0 0.0
        %2806 = vmatpush1.msra.mxu0 %v2768
        %2807 = vmatprep.subr.mxu0 0.0
        %2808 = vmatpush1.msra.mxu0 %v2769
        %2809 = vmatprep.subr.mxu0 0.0
        %2810 = vmatpush1.msra.mxu0 0.0
        %2811 = vmatprep.subr.mxu0 0.0
        %2812 = vmatpush1.msra.mxu0 0.0
        %2813 = vmatprep.subr.mxu0 0.0
        %2814 = vmatpush1.msra.mxu0 0.0
        %2815 = vmatprep.subr.mxu0 0.0
        %2816 = vmatpush1.msra.mxu0 0.0
        %2817 = vmatprep.subr.mxu0 0.0
        %2818 = vmatpush1.msra.mxu0 0.0
        %2819 = vmatprep.subr.mxu0 0.0
        %2820 = vmatpush1.msra.mxu0 0.0
        %2821 = vmatprep.subr.mxu0 0.0
        %2822 = vmatpush1.msra.mxu0 0.0
        %2823 = vmatprep.subr.mxu0 0.0
        %2824 = vmatpush1.msra.mxu0 0.0
        %2825 = vmatprep.subr.mxu0 0.0
        %2826 = vmatpush1.msra.mxu0 0.0
        %2827 = vmatprep.subr.mxu0 0.0
        %2828 = vmatpush1.msra.mxu0 0.0
        %2829 = vmatprep.subr.mxu0 0.0
        %2830 = vmatpush1.msra.mxu0 0.0
        %2831 = vmatprep.subr.mxu0 0.0
        %2832 = vmatpush1.msra.mxu0 0.0
        %2833 = vmatprep.subr.mxu0 0.0
        %2834 = vmatpush1.msra.mxu0 0.0
        %2835 = vmatprep.subr.mxu0 0.0
        %2836 = vmatpush1.msra.mxu0 0.0
        %2837 = vmatprep.subr.mxu0 0.0
        %2838 = vmatpush1.msra.mxu0 0.0
        %2839 = vmatprep.subr.mxu0 0.0
        %2840 = vmatpush1.msra.mxu0 0.0
        %2841 = vmatprep.mubr.f32.mxu0 0.0
        %2842 = vmatmul.mubr.f32.gmra.mrb[0].mxu0 %v2753
        %v2843 = vpop.f32.mrb[0].mxu0
        %v2844 = vadd.f32 %v2775, %v2843
        %v2845 = vpop.f32.mrb[0].mxu0
        %2846 = vdwg.mxu0
        %vm2847 = vcmask 15360
        %v2848 = vsel %vm2847, %v2844, -inf
        %2849 = vmax.xlane.f32.xlu0 %v2848
        %v2850 = vpop.xlane.xlu0 %2849
        %v2851 = vsub.f32 %v2844, %v2850
        %v2852 = vmul.f32 %v2851, 1.442695
        %v2853 = vpow.pop %v2852
        %v2854 = vsel %vm2847, %v2853, 0.0
        %2855 = vadd.xlane.f32.xlu0 %v2854
        %v2856 = vpop.xlane.xlu0 %2855
        %v2857 = vlog2.pop %v2856
        %v2858 = vmul.f32 %v2857, 0.6931472
        %v2859 = vsub.f32 %v2851, %v2858
        %v2860 = vsub.f32 0.0, %v2859
        %2862 = vrot.lane.b32.xlu0 %v2844, 1
        %v2863 = vpop.permute.xlu0 %2862
        %vm2865 = vcmp.gt.f32.partialorder %v2844, %v2863
        %v2866 = vsel %vm2865, 1, 0
        %v2867 = vcvt.s32.f32 %v2866
        %v2868 = vld [vmem:[%s8] sm:$0xff]
        %v2869 = vld [vmem:[%s8 + $0x8] sm:$0xff]
        %v2870 = vld [vmem:[%s8 + $0x10] sm:$0xff]
        %v2871 = vld [vmem:[%s8 + $0x18] sm:$0xff]
        %v2872 = vld [vmem:[%s10] sm:$0x1]
        %v2874 = vlaneseq
        %v2875 = vshrl.u32 %v2874, 7
        %v2876 = vsub.s32 0, %v2875
        %v2877 = vrot.slane %v2872, %v2876
        %2879 = vmatprep.subr.mxu0 0.0
        %2880 = vmatpush1.msra.mxu0 %v2868
        %2881 = vmatprep.subr.mxu0 0.0
        %2882 = vmatpush1.msra.mxu0 %v2869
        %2883 = vmatprep.subr.mxu0 0.0
        %2884 = vmatpush1.msra.mxu0 %v2870
        %2885 = vmatprep.subr.mxu0 0.0
        %2886 = vmatpush1.msra.mxu0 %v2871
        %2887 = vmatprep.subr.mxu0 0.0
        %2888 = vmatpush1.msra.mxu0 0.0
        %2889 = vmatprep.subr.mxu0 0.0
        %2890 = vmatpush1.msra.mxu0 0.0
        %2891 = vmatprep.subr.mxu0 0.0
        %2892 = vmatpush1.msra.mxu0 0.0
        %2893 = vmatprep.subr.mxu0 0.0
        %2894 = vmatpush1.msra.mxu0 0.0
        %2895 = vmatprep.subr.mxu0 0.0
        %2896 = vmatpush1.msra.mxu0 0.0
        %2897 = vmatprep.subr.mxu0 0.0
        %2898 = vmatpush1.msra.mxu0 0.0
        %2899 = vmatprep.subr.mxu0 0.0
        %2900 = vmatpush1.msra.mxu0 0.0
        %2901 = vmatprep.subr.mxu0 0.0
        %2902 = vmatpush1.msra.mxu0 0.0
        %2903 = vmatprep.subr.mxu0 0.0
        %2904 = vmatpush1.msra.mxu0 0.0
        %2905 = vmatprep.subr.mxu0 0.0
        %2906 = vmatpush1.msra.mxu0 0.0
        %2907 = vmatprep.subr.mxu0 0.0
        %2908 = vmatpush1.msra.mxu0 0.0
        %2909 = vmatprep.subr.mxu0 0.0
        %2910 = vmatpush1.msra.mxu0 0.0
        %2911 = vmatprep.subr.mxu0 0.0
        %2912 = vmatpush1.msra.mxu0 0.0
        %2913 = vmatprep.subr.mxu0 0.0
        %2914 = vmatpush1.msra.mxu0 0.0
        %2915 = vmatprep.subr.mxu0 0.0
        %2916 = vmatpush1.msra.mxu0 0.0
        %2917 = vmatprep.subr.mxu0 0.0
        %2918 = vmatpush1.msra.mxu0 0.0
        %2919 = vmatprep.subr.mxu0 0.0
        %2920 = vmatpush1.msra.mxu0 0.0
        %2921 = vmatprep.subr.mxu0 0.0
        %2922 = vmatpush1.msra.mxu0 0.0
        %2923 = vmatprep.subr.mxu0 0.0
        %2924 = vmatpush1.msra.mxu0 0.0
        %2925 = vmatprep.subr.mxu0 0.0
        %2926 = vmatpush1.msra.mxu0 0.0
        %2927 = vmatprep.subr.mxu0 0.0
        %2928 = vmatpush1.msra.mxu0 0.0
        %2929 = vmatprep.subr.mxu0 0.0
        %2930 = vmatpush1.msra.mxu0 0.0
        %2931 = vmatprep.subr.mxu0 0.0
        %2932 = vmatpush1.msra.mxu0 0.0
        %2933 = vmatprep.subr.mxu0 0.0
        %2934 = vmatpush1.msra.mxu0 0.0
        %2935 = vmatprep.subr.mxu0 0.0
        %2936 = vmatpush1.msra.mxu0 0.0
        %2937 = vmatprep.subr.mxu0 0.0
        %2938 = vmatpush1.msra.mxu0 0.0
        %2939 = vmatprep.subr.mxu0 0.0
        %2940 = vmatpush1.msra.mxu0 0.0
        %2941 = vmatprep.subr.mxu0 0.0
        %2942 = vmatpush1.msra.mxu0 0.0
        %2943 = vmatprep.mubr.f32.mxu0 0.0
        %2944 = vmatmul.mubr.f32.gmra.mrb[0].mxu0 %v679
        %v2945 = vpop.f32.mrb[0].mxu0
        %v2946 = vadd.f32 %v2877, %v2945
        %v2947 = vpop.f32.mrb[0].mxu0
        %2948 = vdwg.mxu0
        %v2949 = vld [vmem:[%s9] sm:$0xff]
        %v2950 = vld [vmem:[%s9 + $0x8] sm:$0xff]
        %v2951 = vld [vmem:[%s9 + $0x10] sm:$0xff]
        %v2952 = vld [vmem:[%s9 + $0x18] sm:$0xff]
        %v2953 = vsel %vm677, 0.0, 0
        %2955 = vmatprep.subr.mxu0 0.0
        %2956 = vmatpush1.msra.mxu0 %v2949
        %2957 = vmatprep.subr.mxu0 0.0
        %2958 = vmatpush1.msra.mxu0 %v2950
        %2959 = vmatprep.subr.mxu0 0.0
        %2960 = vmatpush1.msra.mxu0 %v2951
        %2961 = vmatprep.subr.mxu0 0.0
        %2962 = vmatpush1.msra.mxu0 %v2952
        %2963 = vmatprep.subr.mxu0 0.0
        %2964 = vmatpush1.msra.mxu0 0.0
        %2965 = vmatprep.subr.mxu0 0.0
        %2966 = vmatpush1.msra.mxu0 0.0
        %2967 = vmatprep.subr.mxu0 0.0
        %2968 = vmatpush1.msra.mxu0 0.0
        %2969 = vmatprep.subr.mxu0 0.0
        %2970 = vmatpush1.msra.mxu0 0.0
        %2971 = vmatprep.subr.mxu0 0.0
        %2972 = vmatpush1.msra.mxu0 0.0
        %2973 = vmatprep.subr.mxu0 0.0
        %2974 = vmatpush1.msra.mxu0 0.0
        %2975 = vmatprep.subr.mxu0 0.0
        %2976 = vmatpush1.msra.mxu0 0.0
        %2977 = vmatprep.subr.mxu0 0.0
        %2978 = vmatpush1.msra.mxu0 0.0
        %2979 = vmatprep.subr.mxu0 0.0
        %2980 = vmatpush1.msra.mxu0 0.0
        %2981 = vmatprep.subr.mxu0 0.0
        %2982 = vmatpush1.msra.mxu0 0.0
        %2983 = vmatprep.subr.mxu0 0.0
        %2984 = vmatpush1.msra.mxu0 0.0
        %2985 = vmatprep.subr.mxu0 0.0
        %2986 = vmatpush1.msra.mxu0 0.0
        %2987 = vmatprep.subr.mxu0 0.0
        %2988 = vmatpush1.msra.mxu0 0.0
        %2989 = vmatprep.subr.mxu0 0.0
        %2990 = vmatpush1.msra.mxu0 0.0
        %2991 = vmatprep.subr.mxu0 0.0
        %2992 = vmatpush1.msra.mxu0 0.0
        %2993 = vmatprep.subr.mxu0 0.0
        %2994 = vmatpush1.msra.mxu0 0.0
        %2995 = vmatprep.subr.mxu0 0.0
        %2996 = vmatpush1.msra.mxu0 0.0
        %2997 = vmatprep.subr.mxu0 0.0
        %2998 = vmatpush1.msra.mxu0 0.0
        %2999 = vmatprep.subr.mxu0 0.0
        %3000 = vmatpush1.msra.mxu0 0.0
        %3001 = vmatprep.subr.mxu0 0.0
        %3002 = vmatpush1.msra.mxu0 0.0
        %3003 = vmatprep.subr.mxu0 0.0
        %3004 = vmatpush1.msra.mxu0 0.0
        %3005 = vmatprep.subr.mxu0 0.0
        %3006 = vmatpush1.msra.mxu0 0.0
        %3007 = vmatprep.subr.mxu0 0.0
        %3008 = vmatpush1.msra.mxu0 0.0
        %3009 = vmatprep.subr.mxu0 0.0
        %3010 = vmatpush1.msra.mxu0 0.0
        %3011 = vmatprep.subr.mxu0 0.0
        %3012 = vmatpush1.msra.mxu0 0.0
        %3013 = vmatprep.subr.mxu0 0.0
        %3014 = vmatpush1.msra.mxu0 0.0
        %3015 = vmatprep.subr.mxu0 0.0
        %3016 = vmatpush1.msra.mxu0 0.0
        %3017 = vmatprep.subr.mxu0 0.0
        %3018 = vmatpush1.msra.mxu0 0.0
        %3019 = vmatprep.mubr.f32.mxu0 0.0
        %3020 = vmatmul.mubr.f32.gmra.mrb[0].mxu0 %v2953
        %v3021 = vpop.f32.mrb[0].mxu0
        %v3022 = vadd.f32 0.0, %v3021
        %v3023 = vpop.f32.mrb[0].mxu0
        %3024 = vdwg.mxu0
        %v3025 = vadd.f32 %v2946, %v3022
        %v3026 = vxor.u32 %v3025, 2147483648
        %v3027 = vmul.f32 %v3026, 1.442695
        %v3028 = vpow.pop %v3027
        %v3029 = vadd.f32 %v3028, 1.0
        %v3030 = vrcp.pop %v3029
        %v3031 = vmul.f32 1.0, %v3030
        %v3032 = vtanh.pop %v3025
        %v3033 = vmul.f32 %v3031, 0.0
        %3035 = vrot.lane.b32.xlu0 %v3032, 64
        %v3036 = vpop.permute.xlu0 %3035
        %v3038 = vmul.f32 %v3031, %v3036
        %3040 = vrot.lane.b32.xlu0 %v3038, 32
        %v3041 = vpop.permute.xlu0 %3040
        %v3043 = vadd.f32 %v3033, %v3041
        %v3044 = vtanh.pop %v3043
        %3046 = vrot.lane.b32.xlu0 %v3044, 64
        %v3047 = vpop.permute.xlu0 %3046
        %v3049 = vmul.f32 %v3031, %v3047
        %vm3050 = vcmp.gt.f32.partialorder %v2867, 0.5
        %v3051 = vsel %vm3050, 1, 0
        %3052 = vset.pattern.permute.xlu0 1
        %3053 = vperm.xlu0 %3052, %v3051
        %v3054 = vpop.permute.xlu0 %3053
        %vm3055 = vcmp.eq.s32.totalorder %v3054, 1
        %v3056 = vsel %vm3055, %v3049, 0.0
        %v3057 = vsel %vm3055, %v3043, 0.0
        %3059 = vrot.lane.b32.xlu0 %v3056, 32
        %v3060 = vpop.permute.xlu0 %3059
        %v3061 = vsel %vm677, %v3060, 0
        %3063 = vmatprep.subr.mxu0 0.0
        %3064 = vmatpush1.msra.mxu0 %v2949
        %3065 = vmatprep.subr.mxu0 0.0
        %3066 = vmatpush1.msra.mxu0 %v2950
        %3067 = vmatprep.subr.mxu0 0.0
        %3068 = vmatpush1.msra.mxu0 %v2951
        %3069 = vmatprep.subr.mxu0 0.0
        %3070 = vmatpush1.msra.mxu0 %v2952
        %3071 = vmatprep.subr.mxu0 0.0
        %3072 = vmatpush1.msra.mxu0 0.0
        %3073 = vmatprep.subr.mxu0 0.0
        %3074 = vmatpush1.msra.mxu0 0.0
        %3075 = vmatprep.subr.mxu0 0.0
        %3076 = vmatpush1.msra.mxu0 0.0
        %3077 = vmatprep.subr.mxu0 0.0
        %3078 = vmatpush1.msra.mxu0 0.0
        %3079 = vmatprep.subr.mxu0 0.0
        %3080 = vmatpush1.msra.mxu0 0.0
        %3081 = vmatprep.subr.mxu0 0.0
        %3082 = vmatpush1.msra.mxu0 0.0
        %3083 = vmatprep.subr.mxu0 0.0
        %3084 = vmatpush1.msra.mxu0 0.0
        %3085 = vmatprep.subr.mxu0 0.0
        %3086 = vmatpush1.msra.mxu0 0.0
        %3087 = vmatprep.subr.mxu0 0.0
        %3088 = vmatpush1.msra.mxu0 0.0
        %3089 = vmatprep.subr.mxu0 0.0
        %3090 = vmatpush1.msra.mxu0 0.0
        %3091 = vmatprep.subr.mxu0 0.0
        %3092 = vmatpush1.msra.mxu0 0.0
        %3093 = vmatprep.subr.mxu0 0.0
        %3094 = vmatpush1.msra.mxu0 0.0
        %3095 = vmatprep.subr.mxu0 0.0
        %3096 = vmatpush1.msra.mxu0 0.0
        %3097 = vmatprep.subr.mxu0 0.0
        %3098 = vmatpush1.msra.mxu0 0.0
        %3099 = vmatprep.subr.mxu0 0.0
        %3100 = vmatpush1.msra.mxu0 0.0
        %3101 = vmatprep.subr.mxu0 0.0
        %3102 = vmatpush1.msra.mxu0 0.0
        %3103 = vmatprep.subr.mxu0 0.0
        %3104 = vmatpush1.msra.mxu0 0.0
        %3105 = vmatprep.subr.mxu0 0.0
        %3106 = vmatpush1.msra.mxu0 0.0
        %3107 = vmatprep.subr.mxu0 0.0
        %3108 = vmatpush1.msra.mxu0 0.0
        %3109 = vmatprep.subr.mxu0 0.0
        %3110 = vmatpush1.msra.mxu0 0.0
        %3111 = vmatprep.subr.mxu0 0.0
        %3112 = vmatpush1.msra.mxu0 0.0
        %3113 = vmatprep.subr.mxu0 0.0
        %3114 = vmatpush1.msra.mxu0 0.0
        %3115 = vmatprep.subr.mxu0 0.0
        %3116 = vmatpush1.msra.mxu0 0.0
        %3117 = vmatprep.subr.mxu0 0.0
        %3118 = vmatpush1.msra.mxu0 0.0
        %3119 = vmatprep.subr.mxu0 0.0
        %3120 = vmatpush1.msra.mxu0 0.0
        %3121 = vmatprep.subr.mxu0 0.0
        %3122 = vmatpush1.msra.mxu0 0.0
        %3123 = vmatprep.subr.mxu0 0.0
        %3124 = vmatpush1.msra.mxu0 0.0
        %3125 = vmatprep.subr.mxu0 0.0
        %3126 = vmatpush1.msra.mxu0 0.0
        %3127 = vmatprep.mubr.f32.mxu0 0.0
        %3128 = vmatmul.mubr.f32.gmra.mrb[0].mxu0 %v3061
        %v3129 = vpop.f32.mrb[0].mxu0
        %v3130 = vadd.f32 0.0, %v3129
        %v3131 = vpop.f32.mrb[0].mxu0
        %3132 = vdwg.mxu0
        %v3134 = vrot.slane %v3130, 7
        %v3136 = vadd.f32 %v2946, %v3134
        %v3137 = vxor.u32 %v3136, 2147483648
        %v3138 = vmul.f32 %v3137, 1.442695
        %v3139 = vpow.pop %v3138
        %v3140 = vadd.f32 %v3139, 1.0
        %v3141 = vrcp.pop %v3140
        %v3142 = vmul.f32 1.0, %v3141
        %v3143 = vtanh.pop %v3136
        %v3145 = vrot.slane %v3057, 7
        %v3147 = vmul.f32 %v3142, %v3145
        %3149 = vrot.lane.b32.xlu0 %v3143, 64
        %v3150 = vpop.permute.xlu0 %3149
        %v3152 = vmul.f32 %v3142, %v3150
        %3154 = vrot.lane.b32.xlu0 %v3152, 32
        %v3155 = vpop.permute.xlu0 %3154
        %v3157 = vadd.f32 %v3147, %v3155
        %v3158 = vtanh.pop %v3157
        %3160 = vrot.lane.b32.xlu0 %v3158, 64
        %v3161 = vpop.permute.xlu0 %3160
        %v3163 = vmul.f32 %v3142, %v3161
        %v3164 = vrot.slane %v3056, 7
        %v3166 = vsel %vm3055, %v3163, %v3164
        %v3167 = vsel %vm3055, %v3157, %v3145
        %v3169 = vrot.slane %v3166, 1
        %3170 = vrot.lane.b32.xlu0 %v3169, 32
        %v3171 = vpop.permute.xlu0 %3170
        %v3172 = vsel %vm677, %v3171, 0
        %3174 = vmatprep.subr.mxu0 0.0
        %3175 = vmatpush1.msra.mxu0 %v2949
        %3176 = vmatprep.subr.mxu0 0.0
        %3177 = vmatpush1.msra.mxu0 %v2950
        %3178 = vmatprep.subr.mxu0 0.0
        %3179 = vmatpush1.msra.mxu0 %v2951
        %3180 = vmatprep.subr.mxu0 0.0
        %3181 = vmatpush1.msra.mxu0 %v2952
        %3182 = vmatprep.subr.mxu0 0.0
        %3183 = vmatpush1.msra.mxu0 0.0
        %3184 = vmatprep.subr.mxu0 0.0
        %3185 = vmatpush1.msra.mxu0 0.0
        %3186 = vmatprep.subr.mxu0 0.0
        %3187 = vmatpush1.msra.mxu0 0.0
        %3188 = vmatprep.subr.mxu0 0.0
        %3189 = vmatpush1.msra.mxu0 0.0
        %3190 = vmatprep.subr.mxu0 0.0
        %3191 = vmatpush1.msra.mxu0 0.0
        %3192 = vmatprep.subr.mxu0 0.0
        %3193 = vmatpush1.msra.mxu0 0.0
        %3194 = vmatprep.subr.mxu0 0.0
        %3195 = vmatpush1.msra.mxu0 0.0
        %3196 = vmatprep.subr.mxu0 0.0
        %3197 = vmatpush1.msra.mxu0 0.0
        %3198 = vmatprep.subr.mxu0 0.0
        %3199 = vmatpush1.msra.mxu0 0.0
        %3200 = vmatprep.subr.mxu0 0.0
        %3201 = vmatpush1.msra.mxu0 0.0
        %3202 = vmatprep.subr.mxu0 0.0
        %3203 = vmatpush1.msra.mxu0 0.0
        %3204 = vmatprep.subr.mxu0 0.0
        %3205 = vmatpush1.msra.mxu0 0.0
        %3206 = vmatprep.subr.mxu0 0.0
        %3207 = vmatpush1.msra.mxu0 0.0
        %3208 = vmatprep.subr.mxu0 0.0
        %3209 = vmatpush1.msra.mxu0 0.0
        %3210 = vmatprep.subr.mxu0 0.0
        %3211 = vmatpush1.msra.mxu0 0.0
        %3212 = vmatprep.subr.mxu0 0.0
        %3213 = vmatpush1.msra.mxu0 0.0
        %3214 = vmatprep.subr.mxu0 0.0
        %3215 = vmatpush1.msra.mxu0 0.0
        %3216 = vmatprep.subr.mxu0 0.0
        %3217 = vmatpush1.msra.mxu0 0.0
        %3218 = vmatprep.subr.mxu0 0.0
        %3219 = vmatpush1.msra.mxu0 0.0
        %3220 = vmatprep.subr.mxu0 0.0
        %3221 = vmatpush1.msra.mxu0 0.0
        %3222 = vmatprep.subr.mxu0 0.0
        %3223 = vmatpush1.msra.mxu0 0.0
        %3224 = vmatprep.subr.mxu0 0.0
        %3225 = vmatpush1.msra.mxu0 0.0
        %3226 = vmatprep.subr.mxu0 0.0
        %3227 = vmatpush1.msra.mxu0 0.0
        %3228 = vmatprep.subr.mxu0 0.0
        %3229 = vmatpush1.msra.mxu0 0.0
        %3230 = vmatprep.subr.mxu0 0.0
        %3231 = vmatpush1.msra.mxu0 0.0
        %3232 = vmatprep.subr.mxu0 0.0
        %3233 = vmatpush1.msra.mxu0 0.0
        %3234 = vmatprep.subr.mxu0 0.0
        %3235 = vmatpush1.msra.mxu0 0.0
        %3236 = vmatprep.subr.mxu0 0.0
        %3237 = vmatpush1.msra.mxu0 0.0
        %3238 = vmatprep.mubr.f32.mxu0 0.0
        %3239 = vmatmul.mubr.f32.gmra.mrb[0].mxu0 %v3172
        %v3240 = vpop.f32.mrb[0].mxu0
        %v3241 = vadd.f32 0.0, %v3240
        %v3242 = vpop.f32.mrb[0].mxu0
        %3243 = vdwg.mxu0
        %v3245 = vrot.slane %v3241, 6
        %v3247 = vadd.f32 %v2946, %v3245
        %v3248 = vxor.u32 %v3247, 2147483648
        %v3249 = vmul.f32 %v3248, 1.442695
        %v3250 = vpow.pop %v3249
        %v3251 = vadd.f32 %v3250, 1.0
        %v3252 = vrcp.pop %v3251
        %v3253 = vmul.f32 1.0, %v3252
        %v3254 = vtanh.pop %v3247
        %v3256 = vrot.slane %v3167, 7
        %v3258 = vmul.f32 %v3253, %v3256
        %3260 = vrot.lane.b32.xlu0 %v3254, 64
        %v3261 = vpop.permute.xlu0 %3260
        %v3263 = vmul.f32 %v3253, %v3261
        %3265 = vrot.lane.b32.xlu0 %v3263, 32
        %v3266 = vpop.permute.xlu0 %3265
        %v3268 = vadd.f32 %v3258, %v3266
        %v3269 = vtanh.pop %v3268
        %3271 = vrot.lane.b32.xlu0 %v3269, 64
        %v3272 = vpop.permute.xlu0 %3271
        %v3274 = vmul.f32 %v3253, %v3272
        %v3275 = vrot.slane %v3166, 7
        %v3277 = vsel %vm3055, %v3274, %v3275
        %v3278 = vsel %vm3055, %v3268, %v3256
        %v3280 = vrot.slane %v3277, 2
        %3281 = vrot.lane.b32.xlu0 %v3280, 32
        %v3282 = vpop.permute.xlu0 %3281
        %v3283 = vsel %vm677, %v3282, 0
        %3285 = vmatprep.subr.mxu0 0.0
        %3286 = vmatpush1.msra.mxu0 %v2949
        %3287 = vmatprep.subr.mxu0 0.0
        %3288 = vmatpush1.msra.mxu0 %v2950
        %3289 = vmatprep.subr.mxu0 0.0
        %3290 = vmatpush1.msra.mxu0 %v2951
        %3291 = vmatprep.subr.mxu0 0.0
        %3292 = vmatpush1.msra.mxu0 %v2952
        %3293 = vmatprep.subr.mxu0 0.0
        %3294 = vmatpush1.msra.mxu0 0.0
        %3295 = vmatprep.subr.mxu0 0.0
        %3296 = vmatpush1.msra.mxu0 0.0
        %3297 = vmatprep.subr.mxu0 0.0
        %3298 = vmatpush1.msra.mxu0 0.0
        %3299 = vmatprep.subr.mxu0 0.0
        %3300 = vmatpush1.msra.mxu0 0.0
        %3301 = vmatprep.subr.mxu0 0.0
        %3302 = vmatpush1.msra.mxu0 0.0
        %3303 = vmatprep.subr.mxu0 0.0
        %3304 = vmatpush1.msra.mxu0 0.0
        %3305 = vmatprep.subr.mxu0 0.0
        %3306 = vmatpush1.msra.mxu0 0.0
        %3307 = vmatprep.subr.mxu0 0.0
        %3308 = vmatpush1.msra.mxu0 0.0
        %3309 = vmatprep.subr.mxu0 0.0
        %3310 = vmatpush1.msra.mxu0 0.0
        %3311 = vmatprep.subr.mxu0 0.0
        %3312 = vmatpush1.msra.mxu0 0.0
        %3313 = vmatprep.subr.mxu0 0.0
        %3314 = vmatpush1.msra.mxu0 0.0
        %3315 = vmatprep.subr.mxu0 0.0
        %3316 = vmatpush1.msra.mxu0 0.0
        %3317 = vmatprep.subr.mxu0 0.0
        %3318 = vmatpush1.msra.mxu0 0.0
        %3319 = vmatprep.subr.mxu0 0.0
        %3320 = vmatpush1.msra.mxu0 0.0
        %3321 = vmatprep.subr.mxu0 0.0
        %3322 = vmatpush1.msra.mxu0 0.0
        %3323 = vmatprep.subr.mxu0 0.0
        %3324 = vmatpush1.msra.mxu0 0.0
        %3325 = vmatprep.subr.mxu0 0.0
        %3326 = vmatpush1.msra.mxu0 0.0
        %3327 = vmatprep.subr.mxu0 0.0
        %3328 = vmatpush1.msra.mxu0 0.0
        %3329 = vmatprep.subr.mxu0 0.0
        %3330 = vmatpush1.msra.mxu0 0.0
        %3331 = vmatprep.subr.mxu0 0.0
        %3332 = vmatpush1.msra.mxu0 0.0
        %3333 = vmatprep.subr.mxu0 0.0
        %3334 = vmatpush1.msra.mxu0 0.0
        %3335 = vmatprep.subr.mxu0 0.0
        %3336 = vmatpush1.msra.mxu0 0.0
        %3337 = vmatprep.subr.mxu0 0.0
        %3338 = vmatpush1.msra.mxu0 0.0
        %3339 = vmatprep.subr.mxu0 0.0
        %3340 = vmatpush1.msra.mxu0 0.0
        %3341 = vmatprep.subr.mxu0 0.0
        %3342 = vmatpush1.msra.mxu0 0.0
        %3343 = vmatprep.subr.mxu0 0.0
        %3344 = vmatpush1.msra.mxu0 0.0
        %3345 = vmatprep.subr.mxu0 0.0
        %3346 = vmatpush1.msra.mxu0 0.0
        %3347 = vmatprep.subr.mxu0 0.0
        %3348 = vmatpush1.msra.mxu0 0.0
        %3349 = vmatprep.mubr.f32.mxu0 0.0
        %3350 = vmatmul.mubr.f32.gmra.mrb[0].mxu0 %v3283
        %v3351 = vpop.f32.mrb[0].mxu0
        %v3352 = vadd.f32 0.0, %v3351
        %v3353 = vpop.f32.mrb[0].mxu0
        %3354 = vdwg.mxu0
        %v3356 = vrot.slane %v3352, 5
        %v3358 = vadd.f32 %v2946, %v3356
        %v3359 = vxor.u32 %v3358, 2147483648
        %v3360 = vmul.f32 %v3359, 1.442695
        %v3361 = vpow.pop %v3360
        %v3362 = vadd.f32 %v3361, 1.0
        %v3363 = vrcp.pop %v3362
        %v3364 = vmul.f32 1.0, %v3363
        %v3365 = vtanh.pop %v3358
        %v3367 = vrot.slane %v3278, 7
        %v3369 = vmul.f32 %v3364, %v3367
        %3371 = vrot.lane.b32.xlu0 %v3365, 64
        %v3372 = vpop.permute.xlu0 %3371
        %v3374 = vmul.f32 %v3364, %v3372
        %3376 = vrot.lane.b32.xlu0 %v3374, 32
        %v3377 = vpop.permute.xlu0 %3376
        %v3379 = vadd.f32 %v3369, %v3377
        %v3380 = vtanh.pop %v3379
        %3382 = vrot.lane.b32.xlu0 %v3380, 64
        %v3383 = vpop.permute.xlu0 %3382
        %v3385 = vmul.f32 %v3364, %v3383
        %v3386 = vrot.slane %v3277, 7
        %v3388 = vsel %vm3055, %v3385, %v3386
        %v3389 = vsel %vm3055, %v3379, %v3367
        %v3391 = vrot.slane %v3388, 3
        %3392 = vrot.lane.b32.xlu0 %v3391, 32
        %v3393 = vpop.permute.xlu0 %3392
        %v3394 = vsel %vm677, %v3393, 0
        %3396 = vmatprep.subr.mxu0 0.0
        %3397 = vmatpush1.msra.mxu0 %v2949
        %3398 = vmatprep.subr.mxu0 0.0
        %3399 = vmatpush1.msra.mxu0 %v2950
        %3400 = vmatprep.subr.mxu0 0.0
        %3401 = vmatpush1.msra.mxu0 %v2951
        %3402 = vmatprep.subr.mxu0 0.0
        %3403 = vmatpush1.msra.mxu0 %v2952
        %3404 = vmatprep.subr.mxu0 0.0
        %3405 = vmatpush1.msra.mxu0 0.0
        %3406 = vmatprep.subr.mxu0 0.0
        %3407 = vmatpush1.msra.mxu0 0.0
        %3408 = vmatprep.subr.mxu0 0.0
        %3409 = vmatpush1.msra.mxu0 0.0
        %3410 = vmatprep.subr.mxu0 0.0
        %3411 = vmatpush1.msra.mxu0 0.0
        %3412 = vmatprep.subr.mxu0 0.0
        %3413 = vmatpush1.msra.mxu0 0.0
        %3414 = vmatprep.subr.mxu0 0.0
        %3415 = vmatpush1.msra.mxu0 0.0
        %3416 = vmatprep.subr.mxu0 0.0
        %3417 = vmatpush1.msra.mxu0 0.0
        %3418 = vmatprep.subr.mxu0 0.0
        %3419 = vmatpush1.msra.mxu0 0.0
        %3420 = vmatprep.subr.mxu0 0.0
        %3421 = vmatpush1.msra.mxu0 0.0
        %3422 = vmatprep.subr.mxu0 0.0
        %3423 = vmatpush1.msra.mxu0 0.0
        %3424 = vmatprep.subr.mxu0 0.0
        %3425 = vmatpush1.msra.mxu0 0.0
        %3426 = vmatprep.subr.mxu0 0.0
        %3427 = vmatpush1.msra.mxu0 0.0
        %3428 = vmatprep.subr.mxu0 0.0
        %3429 = vmatpush1.msra.mxu0 0.0
        %3430 = vmatprep.subr.mxu0 0.0
        %3431 = vmatpush1.msra.mxu0 0.0
        %3432 = vmatprep.subr.mxu0 0.0
        %3433 = vmatpush1.msra.mxu0 0.0
        %3434 = vmatprep.subr.mxu0 0.0
        %3435 = vmatpush1.msra.mxu0 0.0
        %3436 = vmatprep.subr.mxu0 0.0
        %3437 = vmatpush1.msra.mxu0 0.0
        %3438 = vmatprep.subr.mxu0 0.0
        %3439 = vmatpush1.msra.mxu0 0.0
        %3440 = vmatprep.subr.mxu0 0.0
        %3441 = vmatpush1.msra.mxu0 0.0
        %3442 = vmatprep.subr.mxu0 0.0
        %3443 = vmatpush1.msra.mxu0 0.0
        %3444 = vmatprep.subr.mxu0 0.0
        %3445 = vmatpush1.msra.mxu0 0.0
        %3446 = vmatprep.subr.mxu0 0.0
        %3447 = vmatpush1.msra.mxu0 0.0
        %3448 = vmatprep.subr.mxu0 0.0
        %3449 = vmatpush1.msra.mxu0 0.0
        %3450 = vmatprep.subr.mxu0 0.0
        %3451 = vmatpush1.msra.mxu0 0.0
        %3452 = vmatprep.subr.mxu0 0.0
        %3453 = vmatpush1.msra.mxu0 0.0
        %3454 = vmatprep.subr.mxu0 0.0
        %3455 = vmatpush1.msra.mxu0 0.0
        %3456 = vmatprep.subr.mxu0 0.0
        %3457 = vmatpush1.msra.mxu0 0.0
        %3458 = vmatprep.subr.mxu0 0.0
        %3459 = vmatpush1.msra.mxu0 0.0
        %3460 = vmatprep.mubr.f32.mxu0 0.0
        %3461 = vmatmul.mubr.f32.gmra.mrb[0].mxu0 %v3394
        %v3462 = vpop.f32.mrb[0].mxu0
        %v3463 = vadd.f32 0.0, %v3462
        %v3464 = vpop.f32.mrb[0].mxu0
        %3465 = vdwg.mxu0
        %v3467 = vrot.slane %v3463, 4
        %v3469 = vadd.f32 %v2946, %v3467
        %v3470 = vxor.u32 %v3469, 2147483648
        %v3471 = vmul.f32 %v3470, 1.442695
        %v3472 = vpow.pop %v3471
        %v3473 = vadd.f32 %v3472, 1.0
        %v3474 = vrcp.pop %v3473
        %v3475 = vmul.f32 1.0, %v3474
        %v3476 = vtanh.pop %v3469
        %v3478 = vrot.slane %v3389, 7
        %v3480 = vmul.f32 %v3475, %v3478
        %3482 = vrot.lane.b32.xlu0 %v3476, 64
        %v3483 = vpop.permute.xlu0 %3482
        %v3485 = vmul.f32 %v3475, %v3483
        %3487 = vrot.lane.b32.xlu0 %v3485, 32
        %v3488 = vpop.permute.xlu0 %3487
        %v3490 = vadd.f32 %v3480, %v3488
        %v3491 = vtanh.pop %v3490
        %3493 = vrot.lane.b32.xlu0 %v3491, 64
        %v3494 = vpop.permute.xlu0 %3493
        %v3496 = vmul.f32 %v3475, %v3494
        %v3497 = vrot.slane %v3388, 7
        %v3499 = vsel %vm3055, %v3496, %v3497
        %v3500 = vsel %vm3055, %v3490, %v3478
        %v3502 = vrot.slane %v3499, 4
        %3503 = vrot.lane.b32.xlu0 %v3502, 32
        %v3504 = vpop.permute.xlu0 %3503
        %v3505 = vsel %vm677, %v3504, 0
        %3507 = vmatprep.subr.mxu0 0.0
        %3508 = vmatpush1.msra.mxu0 %v2949
        %3509 = vmatprep.subr.mxu0 0.0
        %3510 = vmatpush1.msra.mxu0 %v2950
        %3511 = vmatprep.subr.mxu0 0.0
        %3512 = vmatpush1.msra.mxu0 %v2951
        %3513 = vmatprep.subr.mxu0 0.0
        %3514 = vmatpush1.msra.mxu0 %v2952
        %3515 = vmatprep.subr.mxu0 0.0
        %3516 = vmatpush1.msra.mxu0 0.0
        %3517 = vmatprep.subr.mxu0 0.0
        %3518 = vmatpush1.msra.mxu0 0.0
        %3519 = vmatprep.subr.mxu0 0.0
        %3520 = vmatpush1.msra.mxu0 0.0
        %3521 = vmatprep.subr.mxu0 0.0
        %3522 = vmatpush1.msra.mxu0 0.0
        %3523 = vmatprep.subr.mxu0 0.0
        %3524 = vmatpush1.msra.mxu0 0.0
        %3525 = vmatprep.subr.mxu0 0.0
        %3526 = vmatpush1.msra.mxu0 0.0
        %3527 = vmatprep.subr.mxu0 0.0
        %3528 = vmatpush1.msra.mxu0 0.0
        %3529 = vmatprep.subr.mxu0 0.0
        %3530 = vmatpush1.msra.mxu0 0.0
        %3531 = vmatprep.subr.mxu0 0.0
        %3532 = vmatpush1.msra.mxu0 0.0
        %3533 = vmatprep.subr.mxu0 0.0
        %3534 = vmatpush1.msra.mxu0 0.0
        %3535 = vmatprep.subr.mxu0 0.0
        %3536 = vmatpush1.msra.mxu0 0.0
        %3537 = vmatprep.subr.mxu0 0.0
        %3538 = vmatpush1.msra.mxu0 0.0
        %3539 = vmatprep.subr.mxu0 0.0
        %3540 = vmatpush1.msra.mxu0 0.0
        %3541 = vmatprep.subr.mxu0 0.0
        %3542 = vmatpush1.msra.mxu0 0.0
        %3543 = vmatprep.subr.mxu0 0.0
        %3544 = vmatpush1.msra.mxu0 0.0
        %3545 = vmatprep.subr.mxu0 0.0
        %3546 = vmatpush1.msra.mxu0 0.0
        %3547 = vmatprep.subr.mxu0 0.0
        %3548 = vmatpush1.msra.mxu0 0.0
        %3549 = vmatprep.subr.mxu0 0.0
        %3550 = vmatpush1.msra.mxu0 0.0
        %3551 = vmatprep.subr.mxu0 0.0
        %3552 = vmatpush1.msra.mxu0 0.0
        %3553 = vmatprep.subr.mxu0 0.0
        %3554 = vmatpush1.msra.mxu0 0.0
        %3555 = vmatprep.subr.mxu0 0.0
        %3556 = vmatpush1.msra.mxu0 0.0
        %3557 = vmatprep.subr.mxu0 0.0
        %3558 = vmatpush1.msra.mxu0 0.0
        %3559 = vmatprep.subr.mxu0 0.0
        %3560 = vmatpush1.msra.mxu0 0.0
        %3561 = vmatprep.subr.mxu0 0.0
        %3562 = vmatpush1.msra.mxu0 0.0
        %3563 = vmatprep.subr.mxu0 0.0
        %3564 = vmatpush1.msra.mxu0 0.0
        %3565 = vmatprep.subr.mxu0 0.0
        %3566 = vmatpush1.msra.mxu0 0.0
        %3567 = vmatprep.subr.mxu0 0.0
        %3568 = vmatpush1.msra.mxu0 0.0
        %3569 = vmatprep.subr.mxu0 0.0
        %3570 = vmatpush1.msra.mxu0 0.0
        %3571 = vmatprep.mubr.f32.mxu0 0.0
        %3572 = vmatmul.mubr.f32.gmra.mrb[0].mxu0 %v3505
        %v3573 = vpop.f32.mrb[0].mxu0
        %v3574 = vadd.f32 0.0, %v3573
        %v3575 = vpop.f32.mrb[0].mxu0
        %3576 = vdwg.mxu0
        %v3578 = vrot.slane %v3574, 3
        %v3580 = vadd.f32 %v2946, %v3578
        %v3581 = vxor.u32 %v3580, 2147483648
        %v3582 = vmul.f32 %v3581, 1.442695
        %v3583 = vpow.pop %v3582
        %v3584 = vadd.f32 %v3583, 1.0
        %v3585 = vrcp.pop %v3584
        %v3586 = vmul.f32 1.0, %v3585
        %v3587 = vtanh.pop %v3580
        %v3589 = vrot.slane %v3500, 7
        %v3591 = vmul.f32 %v3586, %v3589
        %3593 = vrot.lane.b32.xlu0 %v3587, 64
        %v3594 = vpop.permute.xlu0 %3593
        %v3596 = vmul.f32 %v3586, %v3594
        %3598 = vrot.lane.b32.xlu0 %v3596, 32
        %v3599 = vpop.permute.xlu0 %3598
        %v3601 = vadd.f32 %v3591, %v3599
        %v3602 = vtanh.pop %v3601
        %3604 = vrot.lane.b32.xlu0 %v3602, 64
        %v3605 = vpop.permute.xlu0 %3604
        %v3607 = vmul.f32 %v3586, %v3605
        %v3608 = vrot.slane %v3499, 7
        %v3610 = vsel %vm3055, %v3607, %v3608
        %v3611 = vsel %vm3055, %v3601, %v3589
        %v3613 = vrot.slane %v3610, 5
        %3614 = vrot.lane.b32.xlu0 %v3613, 32
        %v3615 = vpop.permute.xlu0 %3614
        %v3616 = vsel %vm677, %v3615, 0
        %3618 = vmatprep.subr.mxu0 0.0
        %3619 = vmatpush1.msra.mxu0 %v2949
        %3620 = vmatprep.subr.mxu0 0.0
        %3621 = vmatpush1.msra.mxu0 %v2950
        %3622 = vmatprep.subr.mxu0 0.0
        %3623 = vmatpush1.msra.mxu0 %v2951
        %3624 = vmatprep.subr.mxu0 0.0
        %3625 = vmatpush1.msra.mxu0 %v2952
        %3626 = vmatprep.subr.mxu0 0.0
        %3627 = vmatpush1.msra.mxu0 0.0
        %3628 = vmatprep.subr.mxu0 0.0
        %3629 = vmatpush1.msra.mxu0 0.0
        %3630 = vmatprep.subr.mxu0 0.0
        %3631 = vmatpush1.msra.mxu0 0.0
        %3632 = vmatprep.subr.mxu0 0.0
        %3633 = vmatpush1.msra.mxu0 0.0
        %3634 = vmatprep.subr.mxu0 0.0
        %3635 = vmatpush1.msra.mxu0 0.0
        %3636 = vmatprep.subr.mxu0 0.0
        %3637 = vmatpush1.msra.mxu0 0.0
        %3638 = vmatprep.subr.mxu0 0.0
        %3639 = vmatpush1.msra.mxu0 0.0
        %3640 = vmatprep.subr.mxu0 0.0
        %3641 = vmatpush1.msra.mxu0 0.0
        %3642 = vmatprep.subr.mxu0 0.0
        %3643 = vmatpush1.msra.mxu0 0.0
        %3644 = vmatprep.subr.mxu0 0.0
        %3645 = vmatpush1.msra.mxu0 0.0
        %3646 = vmatprep.subr.mxu0 0.0
        %3647 = vmatpush1.msra.mxu0 0.0
        %3648 = vmatprep.subr.mxu0 0.0
        %3649 = vmatpush1.msra.mxu0 0.0
        %3650 = vmatprep.subr.mxu0 0.0
        %3651 = vmatpush1.msra.mxu0 0.0
        %3652 = vmatprep.subr.mxu0 0.0
        %3653 = vmatpush1.msra.mxu0 0.0
        %3654 = vmatprep.subr.mxu0 0.0
        %3655 = vmatpush1.msra.mxu0 0.0
        %3656 = vmatprep.subr.mxu0 0.0
        %3657 = vmatpush1.msra.mxu0 0.0
        %3658 = vmatprep.subr.mxu0 0.0
        %3659 = vmatpush1.msra.mxu0 0.0
        %3660 = vmatprep.subr.mxu0 0.0
        %3661 = vmatpush1.msra.mxu0 0.0
        %3662 = vmatprep.subr.mxu0 0.0
        %3663 = vmatpush1.msra.mxu0 0.0
        %3664 = vmatprep.subr.mxu0 0.0
        %3665 = vmatpush1.msra.mxu0 0.0
        %3666 = vmatprep.subr.mxu0 0.0
        %3667 = vmatpush1.msra.mxu0 0.0
        %3668 = vmatprep.subr.mxu0 0.0
        %3669 = vmatpush1.msra.mxu0 0.0
        %3670 = vmatprep.subr.mxu0 0.0
        %3671 = vmatpush1.msra.mxu0 0.0
        %3672 = vmatprep.subr.mxu0 0.0
        %3673 = vmatpush1.msra.mxu0 0.0
        %3674 = vmatprep.subr.mxu0 0.0
        %3675 = vmatpush1.msra.mxu0 0.0
        %3676 = vmatprep.subr.mxu0 0.0
        %3677 = vmatpush1.msra.mxu0 0.0
        %3678 = vmatprep.subr.mxu0 0.0
        %3679 = vmatpush1.msra.mxu0 0.0
        %3680 = vmatprep.subr.mxu0 0.0
        %3681 = vmatpush1.msra.mxu0 0.0
        %3682 = vmatprep.mubr.f32.mxu0 0.0
        %3683 = vmatmul.mubr.f32.gmra.mrb[0].mxu0 %v3616
        %v3684 = vpop.f32.mrb[0].mxu0
        %v3685 = vadd.f32 0.0, %v3684
        %v3686 = vpop.f32.mrb[0].mxu0
        %3687 = vdwg.mxu0
        %v3689 = vrot.slane %v3685, 2
        %v3691 = vadd.f32 %v2946, %v3689
        %v3692 = vxor.u32 %v3691, 2147483648
        %v3693 = vmul.f32 %v3692, 1.442695
        %v3694 = vpow.pop %v3693
        %v3695 = vadd.f32 %v3694, 1.0
        %v3696 = vrcp.pop %v3695
        %v3697 = vmul.f32 1.0, %v3696
        %v3698 = vtanh.pop %v3691
        %v3700 = vrot.slane %v3611, 7
        %v3702 = vmul.f32 %v3697, %v3700
        %3704 = vrot.lane.b32.xlu0 %v3698, 64
        %v3705 = vpop.permute.xlu0 %3704
        %v3707 = vmul.f32 %v3697, %v3705
        %3709 = vrot.lane.b32.xlu0 %v3707, 32
        %v3710 = vpop.permute.xlu0 %3709
        %v3712 = vadd.f32 %v3702, %v3710
        %v3713 = vtanh.pop %v3712
        %3715 = vrot.lane.b32.xlu0 %v3713, 64
        %v3716 = vpop.permute.xlu0 %3715
        %v3718 = vmul.f32 %v3697, %v3716
        %v3719 = vrot.slane %v3610, 7
        %v3721 = vsel %vm3055, %v3718, %v3719
        %v3722 = vsel %vm3055, %v3712, %v3700
        %v3724 = vrot.slane %v3721, 6
        %3725 = vrot.lane.b32.xlu0 %v3724, 32
        %v3726 = vpop.permute.xlu0 %3725
        %v3727 = vsel %vm677, %v3726, 0
        %3729 = vmatprep.subr.mxu0 0.0
        %3730 = vmatpush1.msra.mxu0 %v2949
        %3731 = vmatprep.subr.mxu0 0.0
        %3732 = vmatpush1.msra.mxu0 %v2950
        %3733 = vmatprep.subr.mxu0 0.0
        %3734 = vmatpush1.msra.mxu0 %v2951
        %3735 = vmatprep.subr.mxu0 0.0
        %3736 = vmatpush1.msra.mxu0 %v2952
        %3737 = vmatprep.subr.mxu0 0.0
        %3738 = vmatpush1.msra.mxu0 0.0
        %3739 = vmatprep.subr.mxu0 0.0
        %3740 = vmatpush1.msra.mxu0 0.0
        %3741 = vmatprep.subr.mxu0 0.0
        %3742 = vmatpush1.msra.mxu0 0.0
        %3743 = vmatprep.subr.mxu0 0.0
        %3744 = vmatpush1.msra.mxu0 0.0
        %3745 = vmatprep.subr.mxu0 0.0
        %3746 = vmatpush1.msra.mxu0 0.0
        %3747 = vmatprep.subr.mxu0 0.0
        %3748 = vmatpush1.msra.mxu0 0.0
        %3749 = vmatprep.subr.mxu0 0.0
        %3750 = vmatpush1.msra.mxu0 0.0
        %3751 = vmatprep.subr.mxu0 0.0
        %3752 = vmatpush1.msra.mxu0 0.0
        %3753 = vmatprep.subr.mxu0 0.0
        %3754 = vmatpush1.msra.mxu0 0.0
        %3755 = vmatprep.subr.mxu0 0.0
        %3756 = vmatpush1.msra.mxu0 0.0
        %3757 = vmatprep.subr.mxu0 0.0
        %3758 = vmatpush1.msra.mxu0 0.0
        %3759 = vmatprep.subr.mxu0 0.0
        %3760 = vmatpush1.msra.mxu0 0.0
        %3761 = vmatprep.subr.mxu0 0.0
        %3762 = vmatpush1.msra.mxu0 0.0
        %3763 = vmatprep.subr.mxu0 0.0
        %3764 = vmatpush1.msra.mxu0 0.0
        %3765 = vmatprep.subr.mxu0 0.0
        %3766 = vmatpush1.msra.mxu0 0.0
        %3767 = vmatprep.subr.mxu0 0.0
        %3768 = vmatpush1.msra.mxu0 0.0
        %3769 = vmatprep.subr.mxu0 0.0
        %3770 = vmatpush1.msra.mxu0 0.0
        %3771 = vmatprep.subr.mxu0 0.0
        %3772 = vmatpush1.msra.mxu0 0.0
        %3773 = vmatprep.subr.mxu0 0.0
        %3774 = vmatpush1.msra.mxu0 0.0
        %3775 = vmatprep.subr.mxu0 0.0
        %3776 = vmatpush1.msra.mxu0 0.0
        %3777 = vmatprep.subr.mxu0 0.0
        %3778 = vmatpush1.msra.mxu0 0.0
        %3779 = vmatprep.subr.mxu0 0.0
        %3780 = vmatpush1.msra.mxu0 0.0
        %3781 = vmatprep.subr.mxu0 0.0
        %3782 = vmatpush1.msra.mxu0 0.0
        %3783 = vmatprep.subr.mxu0 0.0
        %3784 = vmatpush1.msra.mxu0 0.0
        %3785 = vmatprep.subr.mxu0 0.0
        %3786 = vmatpush1.msra.mxu0 0.0
        %3787 = vmatprep.subr.mxu0 0.0
        %3788 = vmatpush1.msra.mxu0 0.0
        %3789 = vmatprep.subr.mxu0 0.0
        %3790 = vmatpush1.msra.mxu0 0.0
        %3791 = vmatprep.subr.mxu0 0.0
        %3792 = vmatpush1.msra.mxu0 0.0
        %3793 = vmatprep.mubr.f32.mxu0 0.0
        %3794 = vmatmul.mubr.f32.gmra.mrb[0].mxu0 %v3727
        %v3795 = vpop.f32.mrb[0].mxu0
        %v3796 = vadd.f32 0.0, %v3795
        %v3797 = vpop.f32.mrb[0].mxu0
        %3798 = vdwg.mxu0
        %v3800 = vrot.slane %v3796, 1
        %v3802 = vadd.f32 %v2946, %v3800
        %v3803 = vxor.u32 %v3802, 2147483648
        %v3804 = vmul.f32 %v3803, 1.442695
        %v3805 = vpow.pop %v3804
        %v3806 = vadd.f32 %v3805, 1.0
        %v3807 = vrcp.pop %v3806
        %v3808 = vmul.f32 1.0, %v3807
        %v3809 = vtanh.pop %v3802
        %v3811 = vrot.slane %v3722, 7
        %v3813 = vmul.f32 %v3808, %v3811
        %3815 = vrot.lane.b32.xlu0 %v3809, 64
        %v3816 = vpop.permute.xlu0 %3815
        %v3818 = vmul.f32 %v3808, %v3816
        %3820 = vrot.lane.b32.xlu0 %v3818, 32
        %v3821 = vpop.permute.xlu0 %3820
        %v3823 = vadd.f32 %v3813, %v3821
        %v3824 = vtanh.pop %v3823
        %3826 = vrot.lane.b32.xlu0 %v3824, 64
        %v3827 = vpop.permute.xlu0 %3826
        %v3829 = vmul.f32 %v3808, %v3827
        %v3830 = vrot.slane %v3721, 7
        %v3832 = vsel %vm3055, %v3829, %v3830
        %v3833 = vld [vmem:[%s17] sm:$0xff]
        %v3834 = vld [vmem:[%s17 + $0x8] sm:$0xff]
        %v3835 = vld [vmem:[%s17 + $0x10] sm:$0xff]
        %v3836 = vld [vmem:[%s17 + $0x18] sm:$0xff]
        %v3837 = vld [vmem:[%s18] sm:$0x1]
        %v3839 = vrot.slane %v3832, 7
        %3840 = vrot.lane.b32.xlu0 %v3839, 32
        %v3841 = vpop.permute.xlu0 %3840
        %v3842 = vsel %vm677, %v3841, 0
        %3844 = vmatprep.subr.mxu0 0.0
        %3845 = vmatpush1.msra.mxu0 %v3833
        %3846 = vmatprep.subr.mxu0 0.0
        %3847 = vmatpush1.msra.mxu0 %v3834
        %3848 = vmatprep.subr.mxu0 0.0
        %3849 = vmatpush1.msra.mxu0 %v3835
        %3850 = vmatprep.subr.mxu0 0.0
        %3851 = vmatpush1.msra.mxu0 %v3836
        %3852 = vmatprep.subr.mxu0 0.0
        %3853 = vmatpush1.msra.mxu0 0.0
        %3854 = vmatprep.subr.mxu0 0.0
        %3855 = vmatpush1.msra.mxu0 0.0
        %3856 = vmatprep.subr.mxu0 0.0
        %3857 = vmatpush1.msra.mxu0 0.0
        %3858 = vmatprep.subr.mxu0 0.0
        %3859 = vmatpush1.msra.mxu0 0.0
        %3860 = vmatprep.subr.mxu0 0.0
        %3861 = vmatpush1.msra.mxu0 0.0
        %3862 = vmatprep.subr.mxu0 0.0
        %3863 = vmatpush1.msra.mxu0 0.0
        %3864 = vmatprep.subr.mxu0 0.0
        %3865 = vmatpush1.msra.mxu0 0.0
        %3866 = vmatprep.subr.mxu0 0.0
        %3867 = vmatpush1.msra.mxu0 0.0
        %3868 = vmatprep.subr.mxu0 0.0
        %3869 = vmatpush1.msra.mxu0 0.0
        %3870 = vmatprep.subr.mxu0 0.0
        %3871 = vmatpush1.msra.mxu0 0.0
        %3872 = vmatprep.subr.mxu0 0.0
        %3873 = vmatpush1.msra.mxu0 0.0
        %3874 = vmatprep.subr.mxu0 0.0
        %3875 = vmatpush1.msra.mxu0 0.0
        %3876 = vmatprep.subr.mxu0 0.0
        %3877 = vmatpush1.msra.mxu0 0.0
        %3878 = vmatprep.subr.mxu0 0.0
        %3879 = vmatpush1.msra.mxu0 0.0
        %3880 = vmatprep.subr.mxu0 0.0
        %3881 = vmatpush1.msra.mxu0 0.0
        %3882 = vmatprep.subr.mxu0 0.0
        %3883 = vmatpush1.msra.mxu0 0.0
        %3884 = vmatprep.subr.mxu0 0.0
        %3885 = vmatpush1.msra.mxu0 0.0
        %3886 = vmatprep.subr.mxu0 0.0
        %3887 = vmatpush1.msra.mxu0 0.0
        %3888 = vmatprep.subr.mxu0 0.0
        %3889 = vmatpush1.msra.mxu0 0.0
        %3890 = vmatprep.subr.mxu0 0.0
        %3891 = vmatpush1.msra.mxu0 0.0
        %3892 = vmatprep.subr.mxu0 0.0
        %3893 = vmatpush1.msra.mxu0 0.0
        %3894 = vmatprep.subr.mxu0 0.0
        %3895 = vmatpush1.msra.mxu0 0.0
        %3896 = vmatprep.subr.mxu0 0.0
        %3897 = vmatpush1.msra.mxu0 0.0
        %3898 = vmatprep.subr.mxu0 0.0
        %3899 = vmatpush1.msra.mxu0 0.0
        %3900 = vmatprep.subr.mxu0 0.0
        %3901 = vmatpush1.msra.mxu0 0.0
        %3902 = vmatprep.subr.mxu0 0.0
        %3903 = vmatpush1.msra.mxu0 0.0
        %3904 = vmatprep.subr.mxu0 0.0
        %3905 = vmatpush1.msra.mxu0 0.0
        %3906 = vmatprep.subr.mxu0 0.0
        %3907 = vmatpush1.msra.mxu0 0.0
        %3908 = vmatprep.mubr.f32.mxu0 0.0
        %3909 = vmatmul.mubr.f32.gmra.mrb[0].mxu0 %v3842
        %v3910 = vpop.f32.mrb[0].mxu0
        %v3911 = vadd.f32 %v3837, %v3910
        %v3912 = vpop.f32.mrb[0].mxu0
        %3913 = vdwg.mxu0
        %vm3914 = vcmask 16384
        %v3915 = vsel %vm3914, %v3911, -inf
        %3916 = vmax.xlane.f32.xlu0 %v3915
        %v3917 = vpop.xlane.xlu0 %3916
        %v3918 = vsub.f32 %v3911, %v3917
        %v3919 = vmul.f32 %v3918, 1.442695
        %v3920 = vpow.pop %v3919
        %v3921 = vsel %vm3914, %v3920, 0.0
        %3922 = vadd.xlane.f32.xlu0 %v3921
        %v3923 = vpop.xlane.xlu0 %3922
        %v3924 = vlog2.pop %v3923
        %v3925 = vmul.f32 %v3924, 0.6931472
        %v3926 = vsub.f32 %v3918, %v3925
        %v3927 = vlaneseq
        %v3928 = vshrl.u32 %v3927, 7
        %v3929 = vsub.s32 0, %v3928
        %v3930 = vrot.slane %v3926, %v3929
        %3932 = vrot.lane.b32.xlu0 %v2867, 1
        %v3933 = vpop.permute.xlu0 %3932
        %3936 = vrot.lane.b32.xlu0 %v3930, 3
        %v3937 = vpop.permute.xlu0 %3936
        %v3939 = vsel %vm2847, %v2860, %v3933
        %vm3940 = vcmask 23552
        %v3941 = vsel %vm3940, %v3939, %v3937
        %vm3942 = vcmask 48128
        %v3943 = vsel %vm3942, %v3941, 0.0
        %3944 = vst [vmem:[%s659] sm:$0xff] %v3943
        %s3945 = sand.u32 %s454, 1
        %s3946 = scalar_lea.sflag [#allocation4], %s3945
        %s3947 = sand.u32 %s454, 1
        %s3948 = smul.addr %s3947, 8
        %s3949 = scalar_lea.vmem [#allocation8], %s3948
        // Predicated region
        $region109: #{tpu_custom_call.1} parent=95 // pred_check
          %p3950 = pneg %p464
        $region110: #{tpu_custom_call.1} parent=95 // pred_check_branch
          %3952 = sbr.rel (%p3950) target = $region112
        $region111: #{tpu_custom_call.1} parent=95 // pred_region
          %s3954 = ssub.s32 128, 128
          %3955 = vsyncadd %s3946, %s3954
          %s3956 = smul.addr %s37, 128
          %s3957 = scalar_lea.hbm %s19, %s3956
          %s3959 = sshll.u32 %s3949, 4
          %s3960 = int_to_ptr.vmem [resolvable:$true] %s3959
          %3962 = dma.vmem_to_hbm [thread:$0]  %s3960, 128, %s3957, %s3946
        $region112: #{tpu_custom_call.1} parent=95 // pred_fallthru
          _
      $region96: #{tpu_custom_call.1} parent=5 // pred_fallthru
        _
      %p3963 = scmp.le.s32.totalorder 2, %s32
      // Predicated region
      $region113: #{tpu_custom_call.1} parent=5 // pred_check
        %p3964 = pneg %p3963
      $region114: #{tpu_custom_call.1} parent=5 // pred_check_branch
        %3966 = sbr.rel (%p3964) target = $region116
      $region115: #{tpu_custom_call.1} parent=5 // pred_region
        %s3967 = ssub.s32 %s32, 2
        // Predicated region
        $region117: #{tpu_custom_call.1} parent=115 // pred_check
          %p3968 = pneg %p470
        $region118: #{tpu_custom_call.1} parent=115 // pred_check_branch
          %3970 = sbr.rel (%p3968) target = $region120
        $region119: #{tpu_custom_call.1} parent=115 // pred_region
          %s3971 = sand.u32 %s455, 1
          %s3972 = scalar_lea.sflag [#allocation4], %s3971
          %s3973 = sand.u32 %s455, 1
          %s3974 = smul.addr %s3973, 8
          %s3975 = scalar_lea.vmem [#allocation8], %s3974
          %3976 = dma.done %s3972, 128
        $region120: #{tpu_custom_call.1} parent=115 // pred_fallthru
          _
      $region116: #{tpu_custom_call.1} parent=5 // pred_fallthru
        _
    $region6: #{tpu_custom_call.1} parent=1 // loop_footer
      %s36 = sadd.s32 1, %s32
    $region7: #{tpu_custom_call.1} parent=1 // loop_footer_branch
      %31 = sbr.rel target = $region3
    $region8: #{tpu_custom_call.1} parent=1 // loop_exit
      _
    %3977 = vsyncpa [#allocation3], 1
    %s3978 = scalar_lea.sflag [#allocation3], 1
    %3979 = vsyncpa %s3978, 1
    %3980 = vsyncpa [#allocation6], 1
    %3981 = vsyncpa [#allocation4], 1
    %s3982 = scalar_lea.sflag [#allocation4], 1
    %3983 = vsyncpa %s3982, 1

</llo_original>
